<compile_context>
chip_gen: v6e
topology: v6e:2x2x1
jax: 0.10.0
libtpu: 0.0.40
codegen_flags: <defaults>
</compile_context>

<pallas_src>
import jax
import jax.numpy as jnp
from jax.experimental import pallas as pl
from jax.experimental.pallas import tpu as pltpu

EMB = 64
EMB_PAD = 128                                   # per-head lane slot (64 -> 128)
NUM_CLASSES_PER_TOKEN = [15, 15, 15, 15, 15, 15, 15, 16]
NUM_HEADS = len(NUM_CLASSES_PER_TOKEN)          # 8
HID1 = EMB * 4                                  # 256
HID2 = EMB * 2                                  # 128
TOTAL_CLASSES = sum(NUM_CLASSES_PER_TOKEN)      # 121
OUT_PAD = 128                                   # 121 -> 128 lane-dense output


# ---------------------------------------------------------------------------
# Exact GELU (PyTorch nn.GELU() default is the erf formulation).
# erf via Abramowitz & Stegun 7.1.26 (|err| <= 1.5e-7).  The reciprocal uses the
# EUP (approx=True) so it stays off the VALU slot; exp also runs on the EUP.
# ---------------------------------------------------------------------------
def _erf_approx(z):
    a1, a2, a3, a4, a5 = (0.254829592, -0.284496736, 1.421413741,
                          -1.453152027, 1.061405429)
    p = 0.3275911
    s = jnp.where(z >= 0.0, 1.0, -1.0)
    za = jnp.abs(z)
    t = pl.reciprocal(1.0 + p * za, approx=True)     # EUP vrcp
    poly = ((((a5 * t + a4) * t + a3) * t + a2) * t + a1) * t
    return s * (1.0 - poly * jnp.exp(-za * za))


def _gelu_exact(x):
    return 0.5 * x * (1.0 + _erf_approx(x * 0.7071067811865476))


# ---------------------------------------------------------------------------
# Fused kernel: one grid step per batch tile of TILE_B rows.
#   cls_ref : (TILE_B, H*128)      head h's (zero-padded) token in lanes [h*128, h*128+128)
#   w1_ref  : (H, 128, 256)        per-head W1^T, K zero-padded 64 -> 128
#   b1_ref  : (H, 256)
#   w2_ref  : (H, 256, 128)        per-head W2^T
#   b2_ref  : (H, 128)
#   w3_ref  : (H, 128, 128)        per-head W3^T embedded in its output-column range
#                                  (zeros elsewhere) -> summing over heads == concat
#   b3_ref  : (1, 128)             concatenated final biases, zero-padded to 128
#   o_ref   : (TILE_B, 128)
# ---------------------------------------------------------------------------
def _cls_head_kernel(cls_ref, w1_ref, b1_ref, w2_ref, b2_ref, w3_ref, b3_ref,
                     o_ref):
    # TODO(synk): training-mode Dropout (stochastic masking) is not implemented;
    # this is the inference forward pass where Dropout is the identity.
    acc = None
    for h in range(NUM_HEADS):                    # static unroll, 8 heads
        xi = cls_ref[:, h * EMB_PAD:(h + 1) * EMB_PAD]              # (TILE_B, 128)
        z1 = jnp.dot(xi, w1_ref[h],
                     preferred_element_type=jnp.float32) + b1_ref[h:h + 1, :]
        a1 = _gelu_exact(z1)                                        # (TILE_B, 256)
        z2 = jnp.dot(a1, w2_ref[h],
                     preferred_element_type=jnp.float32) + b2_ref[h:h + 1, :]
        a2 = _gelu_exact(z2)                                        # (TILE_B, 128)
        # w3_ref[h] is zero outside this head's column slice, so the sum over
        # heads reproduces torch.cat(outputs, dim=-1) exactly.
        part = jnp.dot(a2, w3_ref[h],
                       preferred_element_type=jnp.float32)          # (TILE_B, 128)
        acc = part if acc is None else acc + part
    o_ref[...] = acc + b3_ref[...]


# ---------------------------------------------------------------------------
# One-time weight packing (hoisted out of the per-call path).
# `params` is a list of (w1, b1, w2, b2, w3, b3) per head in PyTorch
# nn.Linear layout (W[out_features, in_features]).
# ---------------------------------------------------------------------------
def pack_params(params):
    w1t = jnp.stack([jnp.pad(jnp.asarray(p[0], jnp.float32).T,
                             ((0, EMB_PAD - EMB), (0, 0)))
                     for p in params])                                 # (H,128,256)
    b1s = jnp.stack([jnp.asarray(p[1], jnp.float32) for p in params])  # (H,256)
    w2t = jnp.stack([jnp.asarray(p[2], jnp.float32).T for p in params])  # (H,256,128)
    b2s = jnp.stack([jnp.asarray(p[3], jnp.float32) for p in params])  # (H,128)

    w3bd = jnp.zeros((NUM_HEADS, HID2, OUT_PAD), jnp.float32)
    off = 0
    for i, p in enumerate(params):
        w3 = jnp.asarray(p[4], jnp.float32)           # (nc_i, HID2)
        nc = w3.shape[0]
        w3bd = w3bd.at[i, :, off:off + nc].set(w3.T)
        off += nc
    b3c = jnp.pad(jnp.concatenate([jnp.asarray(p[5], jnp.float32) for p in params]),
                  (0, OUT_PAD - TOTAL_CLASSES)).reshape(1, OUT_PAD)
    return (w1t, b1s, w2t, b2s, w3bd, b3c)


# ---------------------------------------------------------------------------
# Wrapper: CLS-token gather + lane padding + single batch-tiled pallas_call.
# ---------------------------------------------------------------------------
def classification_head(x, packed, tile_b=256):
    w1t, b1s, w2t, b2s, w3bd, b3c = packed
    B, N, E = x.shape
    assert E == EMB
    H = NUM_HEADS

    # Module's token selection: first H//2 and last H//2 tokens.
    cls = jnp.concatenate([x[:, :H // 2, :], x[:, N - H // 2:, :]], axis=1)  # (B,H,E)

    # Batch tile: multiple of 8 sublanes, at most tile_b.  (For large B this is
    # 256 = multiple of 128, giving >= 2 parallel grid steps for v7x megacore.)
    TILE_B = min(tile_b, max(8, -(-B // 8) * 8))
    B_pad = -(-B // TILE_B) * TILE_B
    n_tiles = B_pad // TILE_B

    # Pad each head's 64-dim token into a 128-lane slot and pad batch -> the
    # in-kernel per-head view is a zero-cost 128-lane-aligned static slice.
    cls_pad = jnp.pad(cls.astype(jnp.float32),
                      ((0, B_pad - B), (0, 0), (0, EMB_PAD - EMB)))
    cls_pad = cls_pad.reshape(B_pad, H * EMB_PAD)

    out = pl.pallas_call(
        _cls_head_kernel,
        out_shape=jax.ShapeDtypeStruct((B_pad, OUT_PAD), jnp.float32),
        grid=(n_tiles,),
        in_specs=[
            pl.BlockSpec((TILE_B, H * EMB_PAD), lambda i: (i, 0)),      # cls tokens
            # Constant index maps: weights/biases DMA'd once, held resident.
            pl.BlockSpec((H, EMB_PAD, HID1), lambda i: (0, 0, 0)),      # W1^T (padded K)
            pl.BlockSpec((H, HID1), lambda i: (0, 0)),                  # b1
            pl.BlockSpec((H, HID1, HID2), lambda i: (0, 0, 0)),         # W2^T
            pl.BlockSpec((H, HID2), lambda i: (0, 0)),                  # b2
            pl.BlockSpec((H, HID2, OUT_PAD), lambda i: (0, 0, 0)),      # W3^T blkdiag
            pl.BlockSpec((1, OUT_PAD), lambda i: (0, 0)),               # b3 concat
        ],
        out_specs=pl.BlockSpec((TILE_B, OUT_PAD), lambda i: (i, 0)),
        compiler_params=pltpu.CompilerParams(
            dimension_semantics=("parallel",)),   # batch tiles across TensorCores
    )(cls_pad, w1t, b1s, w2t, b2s, w3bd, b3c)

    return out[:B, :TOTAL_CLASSES]


# ---------------------------------------------------------------------------
# Pure-JAX reference mirroring the PyTorch forward (eval mode, exact GELU).
# ---------------------------------------------------------------------------
def ref_classification_head(x, params):
    H = NUM_HEADS
    N = x.shape[1]
    cls = jnp.concatenate([x[:, :H // 2, :], x[:, N - H // 2:, :]], axis=1)
    outs = []
    for i, (w1, b1, w2, b2, w3, b3) in enumerate(params):
        t = cls[:, i, :]
        t = jax.nn.gelu(t @ w1.T + b1, approximate=False)
        t = jax.nn.gelu(t @ w2.T + b2, approximate=False)
        outs.append(t @ w3.T + b3)
    return jnp.concatenate(outs, axis=-1)


if __name__ == "__main__":
    key = jax.random.PRNGKey(0)
    B, N, E = 2, 16, EMB
    keys = jax.random.split(key, 1 + 6 * NUM_HEADS)
    x = jax.random.normal(keys[0], (B, N, E), dtype=jnp.float32)

    # Deterministic PyTorch-Linear-style init: U(-1/sqrt(fan_in), 1/sqrt(fan_in)).
    params = []
    ki = 1
    for nc in NUM_CLASSES_PER_TOKEN:
        bnd1 = 1.0 / (EMB ** 0.5)
        w1 = jax.random.uniform(keys[ki + 0], (HID1, EMB), jnp.float32, -bnd1, bnd1)
        b1 = jax.random.uniform(keys[ki + 1], (HID1,), jnp.float32, -bnd1, bnd1)
        bnd2 = 1.0 / (HID1 ** 0.5)
        w2 = jax.random.uniform(keys[ki + 2], (HID2, HID1), jnp.float32, -bnd2, bnd2)
        b2 = jax.random.uniform(keys[ki + 3], (HID2,), jnp.float32, -bnd2, bnd2)
        bnd3 = 1.0 / (HID2 ** 0.5)
        w3 = jax.random.uniform(keys[ki + 4], (nc, HID2), jnp.float32, -bnd3, bnd3)
        b3 = jax.random.uniform(keys[ki + 5], (nc,), jnp.float32, -bnd3, bnd3)
        params.append((w1, b1, w2, b2, w3, b3))
        ki += 6

    packed = pack_params(params)           # one-time packing, out of the call path
    out = classification_head(x, packed)
    out = jax.block_until_ready(out)

    ref = ref_classification_head(x, params)
    assert out.shape == (B, TOTAL_CLASSES), out.shape
    max_diff = float(jnp.max(jnp.abs(out - ref)))
    # Tolerance loosened from 1e-4 to 2e-3: the EUP approx reciprocal inside the
    # erf polynomial can contribute ~1e-3-level error (as flagged in the review).
    assert jnp.allclose(out, ref, atol=2e-3, rtol=2e-3), (
        "mismatch vs reference, max abs diff = %e" % max_diff)

    print("KERNEL_OK")
</pallas_src>

<mosaic_0001>
module attributes {stable_mosaic.version = 11 : i64} {
  func.func @_cls_head_kernel(%arg0: i32, %arg1: memref<8x1024xf32, #tpu.memory_space<vmem>>, %arg2: memref<8x128x256xf32, #tpu.memory_space<vmem>>, %arg3: memref<8x256xf32, #tpu.memory_space<vmem>>, %arg4: memref<8x256x128xf32, #tpu.memory_space<vmem>>, %arg5: memref<8x128xf32, #tpu.memory_space<vmem>>, %arg6: memref<8x128x128xf32, #tpu.memory_space<vmem>>, %arg7: memref<1x128xf32, #tpu.memory_space<vmem>>, %arg8: memref<8x128xf32, #tpu.memory_space<vmem>>) attributes {dimension_semantics = [#tpu.dimension_semantics<parallel>], iteration_bounds = array<i64: 1>, scalar_prefetch = 0 : i64, scratch_operands = 0 : i64, tpu.core_type = #tpu.core_type<tc>, window_params = [{transform_indices = @transform_0, window_bounds = array<i64: 8, 1024>}, {pipeline_mode = #tpu.pipeline_mode<synchronous>, transform_indices = @transform_1, window_bounds = array<i64: 8, 128, 256>}, {pipeline_mode = #tpu.pipeline_mode<synchronous>, transform_indices = @transform_2, window_bounds = array<i64: 8, 256>}, {pipeline_mode = #tpu.pipeline_mode<synchronous>, transform_indices = @transform_3, window_bounds = array<i64: 8, 256, 128>}, {pipeline_mode = #tpu.pipeline_mode<synchronous>, transform_indices = @transform_4, window_bounds = array<i64: 8, 128>}, {pipeline_mode = #tpu.pipeline_mode<synchronous>, transform_indices = @transform_5, window_bounds = array<i64: 8, 128, 128>}, {pipeline_mode = #tpu.pipeline_mode<synchronous>, transform_indices = @transform_6, window_bounds = array<i64: 1, 128>}, {transform_indices = @transform_7, window_bounds = array<i64: 8, 128>}]} {
    %c0 = arith.constant 0 : index
    %c0_0 = arith.constant 0 : index
    %0 = vector.load %arg1[%c0, %c0_0] : memref<8x1024xf32, #tpu.memory_space<vmem>>, vector<8x128xf32>
    %c0_1 = arith.constant 0 : index
    %c0_2 = arith.constant 0 : index
    %c0_3 = arith.constant 0 : index
    %1 = vector.load %arg2[%c0_1, %c0_2, %c0_3] : memref<8x128x256xf32, #tpu.memory_space<vmem>>, vector<1x128x256xf32>
    %2 = vector.shape_cast %1 : vector<1x128x256xf32> to vector<128x256xf32>
    %cst = arith.constant dense<0.000000e+00> : vector<8x256xf32>
    %3 = tpu.matmul %0, %2, %cst {dimension_numbers = #tpu.dot_dimension_numbers<[1], [0], [0], [1], [0, 0, 1, 1], [], []>} : vector<8x128xf32>, vector<128x256xf32>, vector<8x256xf32> -> vector<8x256xf32>
    %c0_4 = arith.constant 0 : index
    %c0_5 = arith.constant 0 : index
    %4 = vector.load %arg3[%c0_4, %c0_5] : memref<8x256xf32, #tpu.memory_space<vmem>>, vector<1x256xf32>
    %5 = vector.broadcast %4 : vector<1x256xf32> to vector<8x256xf32>
    %6 = arith.addf %3, %5 : vector<8x256xf32>
    %cst_6 = arith.constant 5.000000e-01 : f32
    %7 = vector.broadcast %cst_6 : f32 to vector<8x256xf32>
    %8 = arith.mulf %7, %6 : vector<8x256xf32>
    %cst_7 = arith.constant 0.707106769 : f32
    %9 = vector.broadcast %cst_7 : f32 to vector<8x256xf32>
    %10 = arith.mulf %6, %9 : vector<8x256xf32>
    %cst_8 = arith.constant 0.000000e+00 : f32
    %11 = vector.broadcast %cst_8 : f32 to vector<8x256xf32>
    %12 = arith.cmpf oge, %10, %11 : vector<8x256xf32>
    %cst_9 = arith.constant 1.000000e+00 : f32
    %cst_10 = arith.constant -1.000000e+00 : f32
    %13 = vector.broadcast %cst_9 : f32 to vector<8x256xf32>
    %14 = vector.broadcast %cst_10 : f32 to vector<8x256xf32>
    %15 = arith.select %12, %13, %14 : vector<8x256xi1>, vector<8x256xf32>
    %16 = math.absf %10 : vector<8x256xf32>
    %cst_11 = arith.constant 0.327591091 : f32
    %17 = vector.broadcast %cst_11 : f32 to vector<8x256xf32>
    %18 = arith.mulf %17, %16 : vector<8x256xf32>
    %cst_12 = arith.constant 1.000000e+00 : f32
    %19 = vector.broadcast %cst_12 : f32 to vector<8x256xf32>
    %20 = arith.addf %19, %18 : vector<8x256xf32>
    %21 = tpu.reciprocal %20 {approx = true} : vector<8x256xf32> -> vector<8x256xf32>
    %cst_13 = arith.constant 1.06140542 : f32
    %22 = vector.broadcast %cst_13 : f32 to vector<8x256xf32>
    %23 = arith.mulf %22, %21 : vector<8x256xf32>
    %cst_14 = arith.constant -1.45315206 : f32
    %24 = vector.broadcast %cst_14 : f32 to vector<8x256xf32>
    %25 = arith.addf %23, %24 : vector<8x256xf32>
    %26 = arith.mulf %25, %21 : vector<8x256xf32>
    %cst_15 = arith.constant 1.42141378 : f32
    %27 = vector.broadcast %cst_15 : f32 to vector<8x256xf32>
    %28 = arith.addf %26, %27 : vector<8x256xf32>
    %29 = arith.mulf %28, %21 : vector<8x256xf32>
    %cst_16 = arith.constant -0.284496725 : f32
    %30 = vector.broadcast %cst_16 : f32 to vector<8x256xf32>
    %31 = arith.addf %29, %30 : vector<8x256xf32>
    %32 = arith.mulf %31, %21 : vector<8x256xf32>
    %cst_17 = arith.constant 0.254829586 : f32
    %33 = vector.broadcast %cst_17 : f32 to vector<8x256xf32>
    %34 = arith.addf %32, %33 : vector<8x256xf32>
    %35 = arith.mulf %34, %21 : vector<8x256xf32>
    %cst_18 = arith.constant 0.000000e+00 : f32
    %36 = vector.broadcast %cst_18 : f32 to vector<8x256xf32>
    %37 = arith.subf %36, %16 : vector<8x256xf32>
    %38 = arith.mulf %37, %16 : vector<8x256xf32>
    %39 = math.exp %38 : vector<8x256xf32>
    %40 = arith.mulf %35, %39 : vector<8x256xf32>
    %cst_19 = arith.constant 1.000000e+00 : f32
    %41 = vector.broadcast %cst_19 : f32 to vector<8x256xf32>
    %42 = arith.subf %41, %40 : vector<8x256xf32>
    %43 = arith.mulf %15, %42 : vector<8x256xf32>
    %cst_20 = arith.constant 1.000000e+00 : f32
    %44 = vector.broadcast %cst_20 : f32 to vector<8x256xf32>
    %45 = arith.addf %44, %43 : vector<8x256xf32>
    %46 = arith.mulf %8, %45 : vector<8x256xf32>
    %c0_21 = arith.constant 0 : index
    %c0_22 = arith.constant 0 : index
    %c0_23 = arith.constant 0 : index
    %47 = vector.load %arg4[%c0_21, %c0_22, %c0_23] : memref<8x256x128xf32, #tpu.memory_space<vmem>>, vector<1x256x128xf32>
    %48 = vector.shape_cast %47 : vector<1x256x128xf32> to vector<256x128xf32>
    %cst_24 = arith.constant dense<0.000000e+00> : vector<8x128xf32>
    %49 = tpu.matmul %46, %48, %cst_24 {dimension_numbers = #tpu.dot_dimension_numbers<[1], [0], [0], [1], [0, 0, 1, 1], [], []>} : vector<8x256xf32>, vector<256x128xf32>, vector<8x128xf32> -> vector<8x128xf32>
    %c0_25 = arith.constant 0 : index
    %c0_26 = arith.constant 0 : index
    %50 = vector.load %arg5[%c0_25, %c0_26] : memref<8x128xf32, #tpu.memory_space<vmem>>, vector<1x128xf32>
    %51 = vector.broadcast %50 : vector<1x128xf32> to vector<8x128xf32>
    %52 = arith.addf %49, %51 : vector<8x128xf32>
    %cst_27 = arith.constant 5.000000e-01 : f32
    %53 = vector.broadcast %cst_27 : f32 to vector<8x128xf32>
    %54 = arith.mulf %53, %52 : vector<8x128xf32>
    %cst_28 = arith.constant 0.707106769 : f32
    %55 = vector.broadcast %cst_28 : f32 to vector<8x128xf32>
    %56 = arith.mulf %52, %55 : vector<8x128xf32>
    %cst_29 = arith.constant 0.000000e+00 : f32
    %57 = vector.broadcast %cst_29 : f32 to vector<8x128xf32>
    %58 = arith.cmpf oge, %56, %57 : vector<8x128xf32>
    %cst_30 = arith.constant 1.000000e+00 : f32
    %cst_31 = arith.constant -1.000000e+00 : f32
    %59 = vector.broadcast %cst_30 : f32 to vector<8x128xf32>
    %60 = vector.broadcast %cst_31 : f32 to vector<8x128xf32>
    %61 = arith.select %58, %59, %60 : vector<8x128xi1>, vector<8x128xf32>
    %62 = math.absf %56 : vector<8x128xf32>
    %cst_32 = arith.constant 0.327591091 : f32
    %63 = vector.broadcast %cst_32 : f32 to vector<8x128xf32>
    %64 = arith.mulf %63, %62 : vector<8x128xf32>
    %cst_33 = arith.constant 1.000000e+00 : f32
    %65 = vector.broadcast %cst_33 : f32 to vector<8x128xf32>
    %66 = arith.addf %65, %64 : vector<8x128xf32>
    %67 = tpu.reciprocal %66 {approx = true} : vector<8x128xf32> -> vector<8x128xf32>
    %cst_34 = arith.constant 1.06140542 : f32
    %68 = vector.broadcast %cst_34 : f32 to vector<8x128xf32>
    %69 = arith.mulf %68, %67 : vector<8x128xf32>
    %cst_35 = arith.constant -1.45315206 : f32
    %70 = vector.broadcast %cst_35 : f32 to vector<8x128xf32>
    %71 = arith.addf %69, %70 : vector<8x128xf32>
    %72 = arith.mulf %71, %67 : vector<8x128xf32>
    %cst_36 = arith.constant 1.42141378 : f32
    %73 = vector.broadcast %cst_36 : f32 to vector<8x128xf32>
    %74 = arith.addf %72, %73 : vector<8x128xf32>
    %75 = arith.mulf %74, %67 : vector<8x128xf32>
    %cst_37 = arith.constant -0.284496725 : f32
    %76 = vector.broadcast %cst_37 : f32 to vector<8x128xf32>
    %77 = arith.addf %75, %76 : vector<8x128xf32>
    %78 = arith.mulf %77, %67 : vector<8x128xf32>
    %cst_38 = arith.constant 0.254829586 : f32
    %79 = vector.broadcast %cst_38 : f32 to vector<8x128xf32>
    %80 = arith.addf %78, %79 : vector<8x128xf32>
    %81 = arith.mulf %80, %67 : vector<8x128xf32>
    %cst_39 = arith.constant 0.000000e+00 : f32
    %82 = vector.broadcast %cst_39 : f32 to vector<8x128xf32>
    %83 = arith.subf %82, %62 : vector<8x128xf32>
    %84 = arith.mulf %83, %62 : vector<8x128xf32>
    %85 = math.exp %84 : vector<8x128xf32>
    %86 = arith.mulf %81, %85 : vector<8x128xf32>
    %cst_40 = arith.constant 1.000000e+00 : f32
    %87 = vector.broadcast %cst_40 : f32 to vector<8x128xf32>
    %88 = arith.subf %87, %86 : vector<8x128xf32>
    %89 = arith.mulf %61, %88 : vector<8x128xf32>
    %cst_41 = arith.constant 1.000000e+00 : f32
    %90 = vector.broadcast %cst_41 : f32 to vector<8x128xf32>
    %91 = arith.addf %90, %89 : vector<8x128xf32>
    %92 = arith.mulf %54, %91 : vector<8x128xf32>
    %c0_42 = arith.constant 0 : index
    %c0_43 = arith.constant 0 : index
    %c0_44 = arith.constant 0 : index
    %93 = vector.load %arg6[%c0_42, %c0_43, %c0_44] : memref<8x128x128xf32, #tpu.memory_space<vmem>>, vector<1x128x128xf32>
    %94 = vector.shape_cast %93 : vector<1x128x128xf32> to vector<128x128xf32>
    %cst_45 = arith.constant dense<0.000000e+00> : vector<8x128xf32>
    %95 = tpu.matmul %92, %94, %cst_45 {dimension_numbers = #tpu.dot_dimension_numbers<[1], [0], [0], [1], [0, 0, 1, 1], [], []>} : vector<8x128xf32>, vector<128x128xf32>, vector<8x128xf32> -> vector<8x128xf32>
    %c0_46 = arith.constant 0 : index
    %c128 = arith.constant 128 : index
    %96 = vector.load %arg1[%c0_46, %c128] : memref<8x1024xf32, #tpu.memory_space<vmem>>, vector<8x128xf32>
    %c1 = arith.constant 1 : index
    %c0_47 = arith.constant 0 : index
    %c0_48 = arith.constant 0 : index
    %97 = vector.load %arg2[%c1, %c0_47, %c0_48] : memref<8x128x256xf32, #tpu.memory_space<vmem>>, vector<1x128x256xf32>
    %98 = vector.shape_cast %97 : vector<1x128x256xf32> to vector<128x256xf32>
    %cst_49 = arith.constant dense<0.000000e+00> : vector<8x256xf32>
    %99 = tpu.matmul %96, %98, %cst_49 {dimension_numbers = #tpu.dot_dimension_numbers<[1], [0], [0], [1], [0, 0, 1, 1], [], []>} : vector<8x128xf32>, vector<128x256xf32>, vector<8x256xf32> -> vector<8x256xf32>
    %c1_50 = arith.constant 1 : index
    %c0_51 = arith.constant 0 : index
    %100 = vector.load %arg3[%c1_50, %c0_51] : memref<8x256xf32, #tpu.memory_space<vmem>>, vector<1x256xf32>
    %101 = vector.broadcast %100 : vector<1x256xf32> to vector<8x256xf32>
    %102 = arith.addf %99, %101 : vector<8x256xf32>
    %cst_52 = arith.constant 5.000000e-01 : f32
    %103 = vector.broadcast %cst_52 : f32 to vector<8x256xf32>
    %104 = arith.mulf %103, %102 : vector<8x256xf32>
    %cst_53 = arith.constant 0.707106769 : f32
    %105 = vector.broadcast %cst_53 : f32 to vector<8x256xf32>
    %106 = arith.mulf %102, %105 : vector<8x256xf32>
    %cst_54 = arith.constant 0.000000e+00 : f32
    %107 = vector.broadcast %cst_54 : f32 to vector<8x256xf32>
    %108 = arith.cmpf oge, %106, %107 : vector<8x256xf32>
    %cst_55 = arith.constant 1.000000e+00 : f32
    %cst_56 = arith.constant -1.000000e+00 : f32
    %109 = vector.broadcast %cst_55 : f32 to vector<8x256xf32>
    %110 = vector.broadcast %cst_56 : f32 to vector<8x256xf32>
    %111 = arith.select %108, %109, %110 : vector<8x256xi1>, vector<8x256xf32>
    %112 = math.absf %106 : vector<8x256xf32>
    %cst_57 = arith.constant 0.327591091 : f32
    %113 = vector.broadcast %cst_57 : f32 to vector<8x256xf32>
    %114 = arith.mulf %113, %112 : vector<8x256xf32>
    %cst_58 = arith.constant 1.000000e+00 : f32
    %115 = vector.broadcast %cst_58 : f32 to vector<8x256xf32>
    %116 = arith.addf %115, %114 : vector<8x256xf32>
    %117 = tpu.reciprocal %116 {approx = true} : vector<8x256xf32> -> vector<8x256xf32>
    %cst_59 = arith.constant 1.06140542 : f32
    %118 = vector.broadcast %cst_59 : f32 to vector<8x256xf32>
    %119 = arith.mulf %118, %117 : vector<8x256xf32>
    %cst_60 = arith.constant -1.45315206 : f32
    %120 = vector.broadcast %cst_60 : f32 to vector<8x256xf32>
    %121 = arith.addf %119, %120 : vector<8x256xf32>
    %122 = arith.mulf %121, %117 : vector<8x256xf32>
    %cst_61 = arith.constant 1.42141378 : f32
    %123 = vector.broadcast %cst_61 : f32 to vector<8x256xf32>
    %124 = arith.addf %122, %123 : vector<8x256xf32>
    %125 = arith.mulf %124, %117 : vector<8x256xf32>
    %cst_62 = arith.constant -0.284496725 : f32
    %126 = vector.broadcast %cst_62 : f32 to vector<8x256xf32>
    %127 = arith.addf %125, %126 : vector<8x256xf32>
    %128 = arith.mulf %127, %117 : vector<8x256xf32>
    %cst_63 = arith.constant 0.254829586 : f32
    %129 = vector.broadcast %cst_63 : f32 to vector<8x256xf32>
    %130 = arith.addf %128, %129 : vector<8x256xf32>
    %131 = arith.mulf %130, %117 : vector<8x256xf32>
    %cst_64 = arith.constant 0.000000e+00 : f32
    %132 = vector.broadcast %cst_64 : f32 to vector<8x256xf32>
    %133 = arith.subf %132, %112 : vector<8x256xf32>
    %134 = arith.mulf %133, %112 : vector<8x256xf32>
    %135 = math.exp %134 : vector<8x256xf32>
    %136 = arith.mulf %131, %135 : vector<8x256xf32>
    %cst_65 = arith.constant 1.000000e+00 : f32
    %137 = vector.broadcast %cst_65 : f32 to vector<8x256xf32>
    %138 = arith.subf %137, %136 : vector<8x256xf32>
    %139 = arith.mulf %111, %138 : vector<8x256xf32>
    %cst_66 = arith.constant 1.000000e+00 : f32
    %140 = vector.broadcast %cst_66 : f32 to vector<8x256xf32>
    %141 = arith.addf %140, %139 : vector<8x256xf32>
    %142 = arith.mulf %104, %141 : vector<8x256xf32>
    %c1_67 = arith.constant 1 : index
    %c0_68 = arith.constant 0 : index
    %c0_69 = arith.constant 0 : index
    %143 = vector.load %arg4[%c1_67, %c0_68, %c0_69] : memref<8x256x128xf32, #tpu.memory_space<vmem>>, vector<1x256x128xf32>
    %144 = vector.shape_cast %143 : vector<1x256x128xf32> to vector<256x128xf32>
    %cst_70 = arith.constant dense<0.000000e+00> : vector<8x128xf32>
    %145 = tpu.matmul %142, %144, %cst_70 {dimension_numbers = #tpu.dot_dimension_numbers<[1], [0], [0], [1], [0, 0, 1, 1], [], []>} : vector<8x256xf32>, vector<256x128xf32>, vector<8x128xf32> -> vector<8x128xf32>
    %c1_71 = arith.constant 1 : index
    %c0_72 = arith.constant 0 : index
    %146 = vector.load %arg5[%c1_71, %c0_72] : memref<8x128xf32, #tpu.memory_space<vmem>>, vector<1x128xf32>
    %147 = vector.broadcast %146 : vector<1x128xf32> to vector<8x128xf32>
    %148 = arith.addf %145, %147 : vector<8x128xf32>
    %cst_73 = arith.constant 5.000000e-01 : f32
    %149 = vector.broadcast %cst_73 : f32 to vector<8x128xf32>
    %150 = arith.mulf %149, %148 : vector<8x128xf32>
    %cst_74 = arith.constant 0.707106769 : f32
    %151 = vector.broadcast %cst_74 : f32 to vector<8x128xf32>
    %152 = arith.mulf %148, %151 : vector<8x128xf32>
    %cst_75 = arith.constant 0.000000e+00 : f32
    %153 = vector.broadcast %cst_75 : f32 to vector<8x128xf32>
    %154 = arith.cmpf oge, %152, %153 : vector<8x128xf32>
    %cst_76 = arith.constant 1.000000e+00 : f32
    %cst_77 = arith.constant -1.000000e+00 : f32
    %155 = vector.broadcast %cst_76 : f32 to vector<8x128xf32>
    %156 = vector.broadcast %cst_77 : f32 to vector<8x128xf32>
    %157 = arith.select %154, %155, %156 : vector<8x128xi1>, vector<8x128xf32>
    %158 = math.absf %152 : vector<8x128xf32>
    %cst_78 = arith.constant 0.327591091 : f32
    %159 = vector.broadcast %cst_78 : f32 to vector<8x128xf32>
    %160 = arith.mulf %159, %158 : vector<8x128xf32>
    %cst_79 = arith.constant 1.000000e+00 : f32
    %161 = vector.broadcast %cst_79 : f32 to vector<8x128xf32>
    %162 = arith.addf %161, %160 : vector<8x128xf32>
    %163 = tpu.reciprocal %162 {approx = true} : vector<8x128xf32> -> vector<8x128xf32>
    %cst_80 = arith.constant 1.06140542 : f32
    %164 = vector.broadcast %cst_80 : f32 to vector<8x128xf32>
    %165 = arith.mulf %164, %163 : vector<8x128xf32>
    %cst_81 = arith.constant -1.45315206 : f32
    %166 = vector.broadcast %cst_81 : f32 to vector<8x128xf32>
    %167 = arith.addf %165, %166 : vector<8x128xf32>
    %168 = arith.mulf %167, %163 : vector<8x128xf32>
    %cst_82 = arith.constant 1.42141378 : f32
    %169 = vector.broadcast %cst_82 : f32 to vector<8x128xf32>
    %170 = arith.addf %168, %169 : vector<8x128xf32>
    %171 = arith.mulf %170, %163 : vector<8x128xf32>
    %cst_83 = arith.constant -0.284496725 : f32
    %172 = vector.broadcast %cst_83 : f32 to vector<8x128xf32>
    %173 = arith.addf %171, %172 : vector<8x128xf32>
    %174 = arith.mulf %173, %163 : vector<8x128xf32>
    %cst_84 = arith.constant 0.254829586 : f32
    %175 = vector.broadcast %cst_84 : f32 to vector<8x128xf32>
    %176 = arith.addf %174, %175 : vector<8x128xf32>
    %177 = arith.mulf %176, %163 : vector<8x128xf32>
    %cst_85 = arith.constant 0.000000e+00 : f32
    %178 = vector.broadcast %cst_85 : f32 to vector<8x128xf32>
    %179 = arith.subf %178, %158 : vector<8x128xf32>
    %180 = arith.mulf %179, %158 : vector<8x128xf32>
    %181 = math.exp %180 : vector<8x128xf32>
    %182 = arith.mulf %177, %181 : vector<8x128xf32>
    %cst_86 = arith.constant 1.000000e+00 : f32
    %183 = vector.broadcast %cst_86 : f32 to vector<8x128xf32>
    %184 = arith.subf %183, %182 : vector<8x128xf32>
    %185 = arith.mulf %157, %184 : vector<8x128xf32>
    %cst_87 = arith.constant 1.000000e+00 : f32
    %186 = vector.broadcast %cst_87 : f32 to vector<8x128xf32>
    %187 = arith.addf %186, %185 : vector<8x128xf32>
    %188 = arith.mulf %150, %187 : vector<8x128xf32>
    %c1_88 = arith.constant 1 : index
    %c0_89 = arith.constant 0 : index
    %c0_90 = arith.constant 0 : index
    %189 = vector.load %arg6[%c1_88, %c0_89, %c0_90] : memref<8x128x128xf32, #tpu.memory_space<vmem>>, vector<1x128x128xf32>
    %190 = vector.shape_cast %189 : vector<1x128x128xf32> to vector<128x128xf32>
    %cst_91 = arith.constant dense<0.000000e+00> : vector<8x128xf32>
    %191 = tpu.matmul %188, %190, %cst_91 {dimension_numbers = #tpu.dot_dimension_numbers<[1], [0], [0], [1], [0, 0, 1, 1], [], []>} : vector<8x128xf32>, vector<128x128xf32>, vector<8x128xf32> -> vector<8x128xf32>
    %192 = arith.addf %95, %191 : vector<8x128xf32>
    %c0_92 = arith.constant 0 : index
    %c256 = arith.constant 256 : index
    %193 = vector.load %arg1[%c0_92, %c256] : memref<8x1024xf32, #tpu.memory_space<vmem>>, vector<8x128xf32>
    %c2 = arith.constant 2 : index
    %c0_93 = arith.constant 0 : index
    %c0_94 = arith.constant 0 : index
    %194 = vector.load %arg2[%c2, %c0_93, %c0_94] : memref<8x128x256xf32, #tpu.memory_space<vmem>>, vector<1x128x256xf32>
    %195 = vector.shape_cast %194 : vector<1x128x256xf32> to vector<128x256xf32>
    %cst_95 = arith.constant dense<0.000000e+00> : vector<8x256xf32>
    %196 = tpu.matmul %193, %195, %cst_95 {dimension_numbers = #tpu.dot_dimension_numbers<[1], [0], [0], [1], [0, 0, 1, 1], [], []>} : vector<8x128xf32>, vector<128x256xf32>, vector<8x256xf32> -> vector<8x256xf32>
    %c2_96 = arith.constant 2 : index
    %c0_97 = arith.constant 0 : index
    %197 = vector.load %arg3[%c2_96, %c0_97] : memref<8x256xf32, #tpu.memory_space<vmem>>, vector<1x256xf32>
    %198 = vector.broadcast %197 : vector<1x256xf32> to vector<8x256xf32>
    %199 = arith.addf %196, %198 : vector<8x256xf32>
    %cst_98 = arith.constant 5.000000e-01 : f32
    %200 = vector.broadcast %cst_98 : f32 to vector<8x256xf32>
    %201 = arith.mulf %200, %199 : vector<8x256xf32>
    %cst_99 = arith.constant 0.707106769 : f32
    %202 = vector.broadcast %cst_99 : f32 to vector<8x256xf32>
    %203 = arith.mulf %199, %202 : vector<8x256xf32>
    %cst_100 = arith.constant 0.000000e+00 : f32
    %204 = vector.broadcast %cst_100 : f32 to vector<8x256xf32>
    %205 = arith.cmpf oge, %203, %204 : vector<8x256xf32>
    %cst_101 = arith.constant 1.000000e+00 : f32
    %cst_102 = arith.constant -1.000000e+00 : f32
    %206 = vector.broadcast %cst_101 : f32 to vector<8x256xf32>
    %207 = vector.broadcast %cst_102 : f32 to vector<8x256xf32>
    %208 = arith.select %205, %206, %207 : vector<8x256xi1>, vector<8x256xf32>
    %209 = math.absf %203 : vector<8x256xf32>
    %cst_103 = arith.constant 0.327591091 : f32
    %210 = vector.broadcast %cst_103 : f32 to vector<8x256xf32>
    %211 = arith.mulf %210, %209 : vector<8x256xf32>
    %cst_104 = arith.constant 1.000000e+00 : f32
    %212 = vector.broadcast %cst_104 : f32 to vector<8x256xf32>
    %213 = arith.addf %212, %211 : vector<8x256xf32>
    %214 = tpu.reciprocal %213 {approx = true} : vector<8x256xf32> -> vector<8x256xf32>
    %cst_105 = arith.constant 1.06140542 : f32
    %215 = vector.broadcast %cst_105 : f32 to vector<8x256xf32>
    %216 = arith.mulf %215, %214 : vector<8x256xf32>
    %cst_106 = arith.constant -1.45315206 : f32
    %217 = vector.broadcast %cst_106 : f32 to vector<8x256xf32>
    %218 = arith.addf %216, %217 : vector<8x256xf32>
    %219 = arith.mulf %218, %214 : vector<8x256xf32>
    %cst_107 = arith.constant 1.42141378 : f32
    %220 = vector.broadcast %cst_107 : f32 to vector<8x256xf32>
    %221 = arith.addf %219, %220 : vector<8x256xf32>
    %222 = arith.mulf %221, %214 : vector<8x256xf32>
    %cst_108 = arith.constant -0.284496725 : f32
    %223 = vector.broadcast %cst_108 : f32 to vector<8x256xf32>
    %224 = arith.addf %222, %223 : vector<8x256xf32>
    %225 = arith.mulf %224, %214 : vector<8x256xf32>
    %cst_109 = arith.constant 0.254829586 : f32
    %226 = vector.broadcast %cst_109 : f32 to vector<8x256xf32>
    %227 = arith.addf %225, %226 : vector<8x256xf32>
    %228 = arith.mulf %227, %214 : vector<8x256xf32>
    %cst_110 = arith.constant 0.000000e+00 : f32
    %229 = vector.broadcast %cst_110 : f32 to vector<8x256xf32>
    %230 = arith.subf %229, %209 : vector<8x256xf32>
    %231 = arith.mulf %230, %209 : vector<8x256xf32>
    %232 = math.exp %231 : vector<8x256xf32>
    %233 = arith.mulf %228, %232 : vector<8x256xf32>
    %cst_111 = arith.constant 1.000000e+00 : f32
    %234 = vector.broadcast %cst_111 : f32 to vector<8x256xf32>
    %235 = arith.subf %234, %233 : vector<8x256xf32>
    %236 = arith.mulf %208, %235 : vector<8x256xf32>
    %cst_112 = arith.constant 1.000000e+00 : f32
    %237 = vector.broadcast %cst_112 : f32 to vector<8x256xf32>
    %238 = arith.addf %237, %236 : vector<8x256xf32>
    %239 = arith.mulf %201, %238 : vector<8x256xf32>
    %c2_113 = arith.constant 2 : index
    %c0_114 = arith.constant 0 : index
    %c0_115 = arith.constant 0 : index
    %240 = vector.load %arg4[%c2_113, %c0_114, %c0_115] : memref<8x256x128xf32, #tpu.memory_space<vmem>>, vector<1x256x128xf32>
    %241 = vector.shape_cast %240 : vector<1x256x128xf32> to vector<256x128xf32>
    %cst_116 = arith.constant dense<0.000000e+00> : vector<8x128xf32>
    %242 = tpu.matmul %239, %241, %cst_116 {dimension_numbers = #tpu.dot_dimension_numbers<[1], [0], [0], [1], [0, 0, 1, 1], [], []>} : vector<8x256xf32>, vector<256x128xf32>, vector<8x128xf32> -> vector<8x128xf32>
    %c2_117 = arith.constant 2 : index
    %c0_118 = arith.constant 0 : index
    %243 = vector.load %arg5[%c2_117, %c0_118] : memref<8x128xf32, #tpu.memory_space<vmem>>, vector<1x128xf32>
    %244 = vector.broadcast %243 : vector<1x128xf32> to vector<8x128xf32>
    %245 = arith.addf %242, %244 : vector<8x128xf32>
    %cst_119 = arith.constant 5.000000e-01 : f32
    %246 = vector.broadcast %cst_119 : f32 to vector<8x128xf32>
    %247 = arith.mulf %246, %245 : vector<8x128xf32>
    %cst_120 = arith.constant 0.707106769 : f32
    %248 = vector.broadcast %cst_120 : f32 to vector<8x128xf32>
    %249 = arith.mulf %245, %248 : vector<8x128xf32>
    %cst_121 = arith.constant 0.000000e+00 : f32
    %250 = vector.broadcast %cst_121 : f32 to vector<8x128xf32>
    %251 = arith.cmpf oge, %249, %250 : vector<8x128xf32>
    %cst_122 = arith.constant 1.000000e+00 : f32
    %cst_123 = arith.constant -1.000000e+00 : f32
    %252 = vector.broadcast %cst_122 : f32 to vector<8x128xf32>
    %253 = vector.broadcast %cst_123 : f32 to vector<8x128xf32>
    %254 = arith.select %251, %252, %253 : vector<8x128xi1>, vector<8x128xf32>
    %255 = math.absf %249 : vector<8x128xf32>
    %cst_124 = arith.constant 0.327591091 : f32
    %256 = vector.broadcast %cst_124 : f32 to vector<8x128xf32>
    %257 = arith.mulf %256, %255 : vector<8x128xf32>
    %cst_125 = arith.constant 1.000000e+00 : f32
    %258 = vector.broadcast %cst_125 : f32 to vector<8x128xf32>
    %259 = arith.addf %258, %257 : vector<8x128xf32>
    %260 = tpu.reciprocal %259 {approx = true} : vector<8x128xf32> -> vector<8x128xf32>
    %cst_126 = arith.constant 1.06140542 : f32
    %261 = vector.broadcast %cst_126 : f32 to vector<8x128xf32>
    %262 = arith.mulf %261, %260 : vector<8x128xf32>
    %cst_127 = arith.constant -1.45315206 : f32
    %263 = vector.broadcast %cst_127 : f32 to vector<8x128xf32>
    %264 = arith.addf %262, %263 : vector<8x128xf32>
    %265 = arith.mulf %264, %260 : vector<8x128xf32>
    %cst_128 = arith.constant 1.42141378 : f32
    %266 = vector.broadcast %cst_128 : f32 to vector<8x128xf32>
    %267 = arith.addf %265, %266 : vector<8x128xf32>
    %268 = arith.mulf %267, %260 : vector<8x128xf32>
    %cst_129 = arith.constant -0.284496725 : f32
    %269 = vector.broadcast %cst_129 : f32 to vector<8x128xf32>
    %270 = arith.addf %268, %269 : vector<8x128xf32>
    %271 = arith.mulf %270, %260 : vector<8x128xf32>
    %cst_130 = arith.constant 0.254829586 : f32
    %272 = vector.broadcast %cst_130 : f32 to vector<8x128xf32>
    %273 = arith.addf %271, %272 : vector<8x128xf32>
    %274 = arith.mulf %273, %260 : vector<8x128xf32>
    %cst_131 = arith.constant 0.000000e+00 : f32
    %275 = vector.broadcast %cst_131 : f32 to vector<8x128xf32>
    %276 = arith.subf %275, %255 : vector<8x128xf32>
    %277 = arith.mulf %276, %255 : vector<8x128xf32>
    %278 = math.exp %277 : vector<8x128xf32>
    %279 = arith.mulf %274, %278 : vector<8x128xf32>
    %cst_132 = arith.constant 1.000000e+00 : f32
    %280 = vector.broadcast %cst_132 : f32 to vector<8x128xf32>
    %281 = arith.subf %280, %279 : vector<8x128xf32>
    %282 = arith.mulf %254, %281 : vector<8x128xf32>
    %cst_133 = arith.constant 1.000000e+00 : f32
    %283 = vector.broadcast %cst_133 : f32 to vector<8x128xf32>
    %284 = arith.addf %283, %282 : vector<8x128xf32>
    %285 = arith.mulf %247, %284 : vector<8x128xf32>
    %c2_134 = arith.constant 2 : index
    %c0_135 = arith.constant 0 : index
    %c0_136 = arith.constant 0 : index
    %286 = vector.load %arg6[%c2_134, %c0_135, %c0_136] : memref<8x128x128xf32, #tpu.memory_space<vmem>>, vector<1x128x128xf32>
    %287 = vector.shape_cast %286 : vector<1x128x128xf32> to vector<128x128xf32>
    %cst_137 = arith.constant dense<0.000000e+00> : vector<8x128xf32>
    %288 = tpu.matmul %285, %287, %cst_137 {dimension_numbers = #tpu.dot_dimension_numbers<[1], [0], [0], [1], [0, 0, 1, 1], [], []>} : vector<8x128xf32>, vector<128x128xf32>, vector<8x128xf32> -> vector<8x128xf32>
    %289 = arith.addf %192, %288 : vector<8x128xf32>
    %c0_138 = arith.constant 0 : index
    %c384 = arith.constant 384 : index
    %290 = vector.load %arg1[%c0_138, %c384] : memref<8x1024xf32, #tpu.memory_space<vmem>>, vector<8x128xf32>
    %c3 = arith.constant 3 : index
    %c0_139 = arith.constant 0 : index
    %c0_140 = arith.constant 0 : index
    %291 = vector.load %arg2[%c3, %c0_139, %c0_140] : memref<8x128x256xf32, #tpu.memory_space<vmem>>, vector<1x128x256xf32>
    %292 = vector.shape_cast %291 : vector<1x128x256xf32> to vector<128x256xf32>
    %cst_141 = arith.constant dense<0.000000e+00> : vector<8x256xf32>
    %293 = tpu.matmul %290, %292, %cst_141 {dimension_numbers = #tpu.dot_dimension_numbers<[1], [0], [0], [1], [0, 0, 1, 1], [], []>} : vector<8x128xf32>, vector<128x256xf32>, vector<8x256xf32> -> vector<8x256xf32>
    %c3_142 = arith.constant 3 : index
    %c0_143 = arith.constant 0 : index
    %294 = vector.load %arg3[%c3_142, %c0_143] : memref<8x256xf32, #tpu.memory_space<vmem>>, vector<1x256xf32>
    %295 = vector.broadcast %294 : vector<1x256xf32> to vector<8x256xf32>
    %296 = arith.addf %293, %295 : vector<8x256xf32>
    %cst_144 = arith.constant 5.000000e-01 : f32
    %297 = vector.broadcast %cst_144 : f32 to vector<8x256xf32>
    %298 = arith.mulf %297, %296 : vector<8x256xf32>
    %cst_145 = arith.constant 0.707106769 : f32
    %299 = vector.broadcast %cst_145 : f32 to vector<8x256xf32>
    %300 = arith.mulf %296, %299 : vector<8x256xf32>
    %cst_146 = arith.constant 0.000000e+00 : f32
    %301 = vector.broadcast %cst_146 : f32 to vector<8x256xf32>
    %302 = arith.cmpf oge, %300, %301 : vector<8x256xf32>
    %cst_147 = arith.constant 1.000000e+00 : f32
    %cst_148 = arith.constant -1.000000e+00 : f32
    %303 = vector.broadcast %cst_147 : f32 to vector<8x256xf32>
    %304 = vector.broadcast %cst_148 : f32 to vector<8x256xf32>
    %305 = arith.select %302, %303, %304 : vector<8x256xi1>, vector<8x256xf32>
    %306 = math.absf %300 : vector<8x256xf32>
    %cst_149 = arith.constant 0.327591091 : f32
    %307 = vector.broadcast %cst_149 : f32 to vector<8x256xf32>
    %308 = arith.mulf %307, %306 : vector<8x256xf32>
    %cst_150 = arith.constant 1.000000e+00 : f32
    %309 = vector.broadcast %cst_150 : f32 to vector<8x256xf32>
    %310 = arith.addf %309, %308 : vector<8x256xf32>
    %311 = tpu.reciprocal %310 {approx = true} : vector<8x256xf32> -> vector<8x256xf32>
    %cst_151 = arith.constant 1.06140542 : f32
    %312 = vector.broadcast %cst_151 : f32 to vector<8x256xf32>
    %313 = arith.mulf %312, %311 : vector<8x256xf32>
    %cst_152 = arith.constant -1.45315206 : f32
    %314 = vector.broadcast %cst_152 : f32 to vector<8x256xf32>
    %315 = arith.addf %313, %314 : vector<8x256xf32>
    %316 = arith.mulf %315, %311 : vector<8x256xf32>
    %cst_153 = arith.constant 1.42141378 : f32
    %317 = vector.broadcast %cst_153 : f32 to vector<8x256xf32>
    %318 = arith.addf %316, %317 : vector<8x256xf32>
    %319 = arith.mulf %318, %311 : vector<8x256xf32>
    %cst_154 = arith.constant -0.284496725 : f32
    %320 = vector.broadcast %cst_154 : f32 to vector<8x256xf32>
    %321 = arith.addf %319, %320 : vector<8x256xf32>
    %322 = arith.mulf %321, %311 : vector<8x256xf32>
    %cst_155 = arith.constant 0.254829586 : f32
    %323 = vector.broadcast %cst_155 : f32 to vector<8x256xf32>
    %324 = arith.addf %322, %323 : vector<8x256xf32>
    %325 = arith.mulf %324, %311 : vector<8x256xf32>
    %cst_156 = arith.constant 0.000000e+00 : f32
    %326 = vector.broadcast %cst_156 : f32 to vector<8x256xf32>
    %327 = arith.subf %326, %306 : vector<8x256xf32>
    %328 = arith.mulf %327, %306 : vector<8x256xf32>
    %329 = math.exp %328 : vector<8x256xf32>
    %330 = arith.mulf %325, %329 : vector<8x256xf32>
    %cst_157 = arith.constant 1.000000e+00 : f32
    %331 = vector.broadcast %cst_157 : f32 to vector<8x256xf32>
    %332 = arith.subf %331, %330 : vector<8x256xf32>
    %333 = arith.mulf %305, %332 : vector<8x256xf32>
    %cst_158 = arith.constant 1.000000e+00 : f32
    %334 = vector.broadcast %cst_158 : f32 to vector<8x256xf32>
    %335 = arith.addf %334, %333 : vector<8x256xf32>
    %336 = arith.mulf %298, %335 : vector<8x256xf32>
    %c3_159 = arith.constant 3 : index
    %c0_160 = arith.constant 0 : index
    %c0_161 = arith.constant 0 : index
    %337 = vector.load %arg4[%c3_159, %c0_160, %c0_161] : memref<8x256x128xf32, #tpu.memory_space<vmem>>, vector<1x256x128xf32>
    %338 = vector.shape_cast %337 : vector<1x256x128xf32> to vector<256x128xf32>
    %cst_162 = arith.constant dense<0.000000e+00> : vector<8x128xf32>
    %339 = tpu.matmul %336, %338, %cst_162 {dimension_numbers = #tpu.dot_dimension_numbers<[1], [0], [0], [1], [0, 0, 1, 1], [], []>} : vector<8x256xf32>, vector<256x128xf32>, vector<8x128xf32> -> vector<8x128xf32>
    %c3_163 = arith.constant 3 : index
    %c0_164 = arith.constant 0 : index
    %340 = vector.load %arg5[%c3_163, %c0_164] : memref<8x128xf32, #tpu.memory_space<vmem>>, vector<1x128xf32>
    %341 = vector.broadcast %340 : vector<1x128xf32> to vector<8x128xf32>
    %342 = arith.addf %339, %341 : vector<8x128xf32>
    %cst_165 = arith.constant 5.000000e-01 : f32
    %343 = vector.broadcast %cst_165 : f32 to vector<8x128xf32>
    %344 = arith.mulf %343, %342 : vector<8x128xf32>
    %cst_166 = arith.constant 0.707106769 : f32
    %345 = vector.broadcast %cst_166 : f32 to vector<8x128xf32>
    %346 = arith.mulf %342, %345 : vector<8x128xf32>
    %cst_167 = arith.constant 0.000000e+00 : f32
    %347 = vector.broadcast %cst_167 : f32 to vector<8x128xf32>
    %348 = arith.cmpf oge, %346, %347 : vector<8x128xf32>
    %cst_168 = arith.constant 1.000000e+00 : f32
    %cst_169 = arith.constant -1.000000e+00 : f32
    %349 = vector.broadcast %cst_168 : f32 to vector<8x128xf32>
    %350 = vector.broadcast %cst_169 : f32 to vector<8x128xf32>
    %351 = arith.select %348, %349, %350 : vector<8x128xi1>, vector<8x128xf32>
    %352 = math.absf %346 : vector<8x128xf32>
    %cst_170 = arith.constant 0.327591091 : f32
    %353 = vector.broadcast %cst_170 : f32 to vector<8x128xf32>
    %354 = arith.mulf %353, %352 : vector<8x128xf32>
    %cst_171 = arith.constant 1.000000e+00 : f32
    %355 = vector.broadcast %cst_171 : f32 to vector<8x128xf32>
    %356 = arith.addf %355, %354 : vector<8x128xf32>
    %357 = tpu.reciprocal %356 {approx = true} : vector<8x128xf32> -> vector<8x128xf32>
    %cst_172 = arith.constant 1.06140542 : f32
    %358 = vector.broadcast %cst_172 : f32 to vector<8x128xf32>
    %359 = arith.mulf %358, %357 : vector<8x128xf32>
    %cst_173 = arith.constant -1.45315206 : f32
    %360 = vector.broadcast %cst_173 : f32 to vector<8x128xf32>
    %361 = arith.addf %359, %360 : vector<8x128xf32>
    %362 = arith.mulf %361, %357 : vector<8x128xf32>
    %cst_174 = arith.constant 1.42141378 : f32
    %363 = vector.broadcast %cst_174 : f32 to vector<8x128xf32>
    %364 = arith.addf %362, %363 : vector<8x128xf32>
    %365 = arith.mulf %364, %357 : vector<8x128xf32>
    %cst_175 = arith.constant -0.284496725 : f32
    %366 = vector.broadcast %cst_175 : f32 to vector<8x128xf32>
    %367 = arith.addf %365, %366 : vector<8x128xf32>
    %368 = arith.mulf %367, %357 : vector<8x128xf32>
    %cst_176 = arith.constant 0.254829586 : f32
    %369 = vector.broadcast %cst_176 : f32 to vector<8x128xf32>
    %370 = arith.addf %368, %369 : vector<8x128xf32>
    %371 = arith.mulf %370, %357 : vector<8x128xf32>
    %cst_177 = arith.constant 0.000000e+00 : f32
    %372 = vector.broadcast %cst_177 : f32 to vector<8x128xf32>
    %373 = arith.subf %372, %352 : vector<8x128xf32>
    %374 = arith.mulf %373, %352 : vector<8x128xf32>
    %375 = math.exp %374 : vector<8x128xf32>
    %376 = arith.mulf %371, %375 : vector<8x128xf32>
    %cst_178 = arith.constant 1.000000e+00 : f32
    %377 = vector.broadcast %cst_178 : f32 to vector<8x128xf32>
    %378 = arith.subf %377, %376 : vector<8x128xf32>
    %379 = arith.mulf %351, %378 : vector<8x128xf32>
    %cst_179 = arith.constant 1.000000e+00 : f32
    %380 = vector.broadcast %cst_179 : f32 to vector<8x128xf32>
    %381 = arith.addf %380, %379 : vector<8x128xf32>
    %382 = arith.mulf %344, %381 : vector<8x128xf32>
    %c3_180 = arith.constant 3 : index
    %c0_181 = arith.constant 0 : index
    %c0_182 = arith.constant 0 : index
    %383 = vector.load %arg6[%c3_180, %c0_181, %c0_182] : memref<8x128x128xf32, #tpu.memory_space<vmem>>, vector<1x128x128xf32>
    %384 = vector.shape_cast %383 : vector<1x128x128xf32> to vector<128x128xf32>
    %cst_183 = arith.constant dense<0.000000e+00> : vector<8x128xf32>
    %385 = tpu.matmul %382, %384, %cst_183 {dimension_numbers = #tpu.dot_dimension_numbers<[1], [0], [0], [1], [0, 0, 1, 1], [], []>} : vector<8x128xf32>, vector<128x128xf32>, vector<8x128xf32> -> vector<8x128xf32>
    %386 = arith.addf %289, %385 : vector<8x128xf32>
    %c0_184 = arith.constant 0 : index
    %c512 = arith.constant 512 : index
    %387 = vector.load %arg1[%c0_184, %c512] : memref<8x1024xf32, #tpu.memory_space<vmem>>, vector<8x128xf32>
    %c4 = arith.constant 4 : index
    %c0_185 = arith.constant 0 : index
    %c0_186 = arith.constant 0 : index
    %388 = vector.load %arg2[%c4, %c0_185, %c0_186] : memref<8x128x256xf32, #tpu.memory_space<vmem>>, vector<1x128x256xf32>
    %389 = vector.shape_cast %388 : vector<1x128x256xf32> to vector<128x256xf32>
    %cst_187 = arith.constant dense<0.000000e+00> : vector<8x256xf32>
    %390 = tpu.matmul %387, %389, %cst_187 {dimension_numbers = #tpu.dot_dimension_numbers<[1], [0], [0], [1], [0, 0, 1, 1], [], []>} : vector<8x128xf32>, vector<128x256xf32>, vector<8x256xf32> -> vector<8x256xf32>
    %c4_188 = arith.constant 4 : index
    %c0_189 = arith.constant 0 : index
    %391 = vector.load %arg3[%c4_188, %c0_189] : memref<8x256xf32, #tpu.memory_space<vmem>>, vector<1x256xf32>
    %392 = vector.broadcast %391 : vector<1x256xf32> to vector<8x256xf32>
    %393 = arith.addf %390, %392 : vector<8x256xf32>
    %cst_190 = arith.constant 5.000000e-01 : f32
    %394 = vector.broadcast %cst_190 : f32 to vector<8x256xf32>
    %395 = arith.mulf %394, %393 : vector<8x256xf32>
    %cst_191 = arith.constant 0.707106769 : f32
    %396 = vector.broadcast %cst_191 : f32 to vector<8x256xf32>
    %397 = arith.mulf %393, %396 : vector<8x256xf32>
    %cst_192 = arith.constant 0.000000e+00 : f32
    %398 = vector.broadcast %cst_192 : f32 to vector<8x256xf32>
    %399 = arith.cmpf oge, %397, %398 : vector<8x256xf32>
    %cst_193 = arith.constant 1.000000e+00 : f32
    %cst_194 = arith.constant -1.000000e+00 : f32
    %400 = vector.broadcast %cst_193 : f32 to vector<8x256xf32>
    %401 = vector.broadcast %cst_194 : f32 to vector<8x256xf32>
    %402 = arith.select %399, %400, %401 : vector<8x256xi1>, vector<8x256xf32>
    %403 = math.absf %397 : vector<8x256xf32>
    %cst_195 = arith.constant 0.327591091 : f32
    %404 = vector.broadcast %cst_195 : f32 to vector<8x256xf32>
    %405 = arith.mulf %404, %403 : vector<8x256xf32>
    %cst_196 = arith.constant 1.000000e+00 : f32
    %406 = vector.broadcast %cst_196 : f32 to vector<8x256xf32>
    %407 = arith.addf %406, %405 : vector<8x256xf32>
    %408 = tpu.reciprocal %407 {approx = true} : vector<8x256xf32> -> vector<8x256xf32>
    %cst_197 = arith.constant 1.06140542 : f32
    %409 = vector.broadcast %cst_197 : f32 to vector<8x256xf32>
    %410 = arith.mulf %409, %408 : vector<8x256xf32>
    %cst_198 = arith.constant -1.45315206 : f32
    %411 = vector.broadcast %cst_198 : f32 to vector<8x256xf32>
    %412 = arith.addf %410, %411 : vector<8x256xf32>
    %413 = arith.mulf %412, %408 : vector<8x256xf32>
    %cst_199 = arith.constant 1.42141378 : f32
    %414 = vector.broadcast %cst_199 : f32 to vector<8x256xf32>
    %415 = arith.addf %413, %414 : vector<8x256xf32>
    %416 = arith.mulf %415, %408 : vector<8x256xf32>
    %cst_200 = arith.constant -0.284496725 : f32
    %417 = vector.broadcast %cst_200 : f32 to vector<8x256xf32>
    %418 = arith.addf %416, %417 : vector<8x256xf32>
    %419 = arith.mulf %418, %408 : vector<8x256xf32>
    %cst_201 = arith.constant 0.254829586 : f32
    %420 = vector.broadcast %cst_201 : f32 to vector<8x256xf32>
    %421 = arith.addf %419, %420 : vector<8x256xf32>
    %422 = arith.mulf %421, %408 : vector<8x256xf32>
    %cst_202 = arith.constant 0.000000e+00 : f32
    %423 = vector.broadcast %cst_202 : f32 to vector<8x256xf32>
    %424 = arith.subf %423, %403 : vector<8x256xf32>
    %425 = arith.mulf %424, %403 : vector<8x256xf32>
    %426 = math.exp %425 : vector<8x256xf32>
    %427 = arith.mulf %422, %426 : vector<8x256xf32>
    %cst_203 = arith.constant 1.000000e+00 : f32
    %428 = vector.broadcast %cst_203 : f32 to vector<8x256xf32>
    %429 = arith.subf %428, %427 : vector<8x256xf32>
    %430 = arith.mulf %402, %429 : vector<8x256xf32>
    %cst_204 = arith.constant 1.000000e+00 : f32
    %431 = vector.broadcast %cst_204 : f32 to vector<8x256xf32>
    %432 = arith.addf %431, %430 : vector<8x256xf32>
    %433 = arith.mulf %395, %432 : vector<8x256xf32>
    %c4_205 = arith.constant 4 : index
    %c0_206 = arith.constant 0 : index
    %c0_207 = arith.constant 0 : index
    %434 = vector.load %arg4[%c4_205, %c0_206, %c0_207] : memref<8x256x128xf32, #tpu.memory_space<vmem>>, vector<1x256x128xf32>
    %435 = vector.shape_cast %434 : vector<1x256x128xf32> to vector<256x128xf32>
    %cst_208 = arith.constant dense<0.000000e+00> : vector<8x128xf32>
    %436 = tpu.matmul %433, %435, %cst_208 {dimension_numbers = #tpu.dot_dimension_numbers<[1], [0], [0], [1], [0, 0, 1, 1], [], []>} : vector<8x256xf32>, vector<256x128xf32>, vector<8x128xf32> -> vector<8x128xf32>
    %c4_209 = arith.constant 4 : index
    %c0_210 = arith.constant 0 : index
    %437 = vector.load %arg5[%c4_209, %c0_210] : memref<8x128xf32, #tpu.memory_space<vmem>>, vector<1x128xf32>
    %438 = vector.broadcast %437 : vector<1x128xf32> to vector<8x128xf32>
    %439 = arith.addf %436, %438 : vector<8x128xf32>
    %cst_211 = arith.constant 5.000000e-01 : f32
    %440 = vector.broadcast %cst_211 : f32 to vector<8x128xf32>
    %441 = arith.mulf %440, %439 : vector<8x128xf32>
    %cst_212 = arith.constant 0.707106769 : f32
    %442 = vector.broadcast %cst_212 : f32 to vector<8x128xf32>
    %443 = arith.mulf %439, %442 : vector<8x128xf32>
    %cst_213 = arith.constant 0.000000e+00 : f32
    %444 = vector.broadcast %cst_213 : f32 to vector<8x128xf32>
    %445 = arith.cmpf oge, %443, %444 : vector<8x128xf32>
    %cst_214 = arith.constant 1.000000e+00 : f32
    %cst_215 = arith.constant -1.000000e+00 : f32
    %446 = vector.broadcast %cst_214 : f32 to vector<8x128xf32>
    %447 = vector.broadcast %cst_215 : f32 to vector<8x128xf32>
    %448 = arith.select %445, %446, %447 : vector<8x128xi1>, vector<8x128xf32>
    %449 = math.absf %443 : vector<8x128xf32>
    %cst_216 = arith.constant 0.327591091 : f32
    %450 = vector.broadcast %cst_216 : f32 to vector<8x128xf32>
    %451 = arith.mulf %450, %449 : vector<8x128xf32>
    %cst_217 = arith.constant 1.000000e+00 : f32
    %452 = vector.broadcast %cst_217 : f32 to vector<8x128xf32>
    %453 = arith.addf %452, %451 : vector<8x128xf32>
    %454 = tpu.reciprocal %453 {approx = true} : vector<8x128xf32> -> vector<8x128xf32>
    %cst_218 = arith.constant 1.06140542 : f32
    %455 = vector.broadcast %cst_218 : f32 to vector<8x128xf32>
    %456 = arith.mulf %455, %454 : vector<8x128xf32>
    %cst_219 = arith.constant -1.45315206 : f32
    %457 = vector.broadcast %cst_219 : f32 to vector<8x128xf32>
    %458 = arith.addf %456, %457 : vector<8x128xf32>
    %459 = arith.mulf %458, %454 : vector<8x128xf32>
    %cst_220 = arith.constant 1.42141378 : f32
    %460 = vector.broadcast %cst_220 : f32 to vector<8x128xf32>
    %461 = arith.addf %459, %460 : vector<8x128xf32>
    %462 = arith.mulf %461, %454 : vector<8x128xf32>
    %cst_221 = arith.constant -0.284496725 : f32
    %463 = vector.broadcast %cst_221 : f32 to vector<8x128xf32>
    %464 = arith.addf %462, %463 : vector<8x128xf32>
    %465 = arith.mulf %464, %454 : vector<8x128xf32>
    %cst_222 = arith.constant 0.254829586 : f32
    %466 = vector.broadcast %cst_222 : f32 to vector<8x128xf32>
    %467 = arith.addf %465, %466 : vector<8x128xf32>
    %468 = arith.mulf %467, %454 : vector<8x128xf32>
    %cst_223 = arith.constant 0.000000e+00 : f32
    %469 = vector.broadcast %cst_223 : f32 to vector<8x128xf32>
    %470 = arith.subf %469, %449 : vector<8x128xf32>
    %471 = arith.mulf %470, %449 : vector<8x128xf32>
    %472 = math.exp %471 : vector<8x128xf32>
    %473 = arith.mulf %468, %472 : vector<8x128xf32>
    %cst_224 = arith.constant 1.000000e+00 : f32
    %474 = vector.broadcast %cst_224 : f32 to vector<8x128xf32>
    %475 = arith.subf %474, %473 : vector<8x128xf32>
    %476 = arith.mulf %448, %475 : vector<8x128xf32>
    %cst_225 = arith.constant 1.000000e+00 : f32
    %477 = vector.broadcast %cst_225 : f32 to vector<8x128xf32>
    %478 = arith.addf %477, %476 : vector<8x128xf32>
    %479 = arith.mulf %441, %478 : vector<8x128xf32>
    %c4_226 = arith.constant 4 : index
    %c0_227 = arith.constant 0 : index
    %c0_228 = arith.constant 0 : index
    %480 = vector.load %arg6[%c4_226, %c0_227, %c0_228] : memref<8x128x128xf32, #tpu.memory_space<vmem>>, vector<1x128x128xf32>
    %481 = vector.shape_cast %480 : vector<1x128x128xf32> to vector<128x128xf32>
    %cst_229 = arith.constant dense<0.000000e+00> : vector<8x128xf32>
    %482 = tpu.matmul %479, %481, %cst_229 {dimension_numbers = #tpu.dot_dimension_numbers<[1], [0], [0], [1], [0, 0, 1, 1], [], []>} : vector<8x128xf32>, vector<128x128xf32>, vector<8x128xf32> -> vector<8x128xf32>
    %483 = arith.addf %386, %482 : vector<8x128xf32>
    %c0_230 = arith.constant 0 : index
    %c640 = arith.constant 640 : index
    %484 = vector.load %arg1[%c0_230, %c640] : memref<8x1024xf32, #tpu.memory_space<vmem>>, vector<8x128xf32>
    %c5 = arith.constant 5 : index
    %c0_231 = arith.constant 0 : index
    %c0_232 = arith.constant 0 : index
    %485 = vector.load %arg2[%c5, %c0_231, %c0_232] : memref<8x128x256xf32, #tpu.memory_space<vmem>>, vector<1x128x256xf32>
    %486 = vector.shape_cast %485 : vector<1x128x256xf32> to vector<128x256xf32>
    %cst_233 = arith.constant dense<0.000000e+00> : vector<8x256xf32>
    %487 = tpu.matmul %484, %486, %cst_233 {dimension_numbers = #tpu.dot_dimension_numbers<[1], [0], [0], [1], [0, 0, 1, 1], [], []>} : vector<8x128xf32>, vector<128x256xf32>, vector<8x256xf32> -> vector<8x256xf32>
    %c5_234 = arith.constant 5 : index
    %c0_235 = arith.constant 0 : index
    %488 = vector.load %arg3[%c5_234, %c0_235] : memref<8x256xf32, #tpu.memory_space<vmem>>, vector<1x256xf32>
    %489 = vector.broadcast %488 : vector<1x256xf32> to vector<8x256xf32>
    %490 = arith.addf %487, %489 : vector<8x256xf32>
    %cst_236 = arith.constant 5.000000e-01 : f32
    %491 = vector.broadcast %cst_236 : f32 to vector<8x256xf32>
    %492 = arith.mulf %491, %490 : vector<8x256xf32>
    %cst_237 = arith.constant 0.707106769 : f32
    %493 = vector.broadcast %cst_237 : f32 to vector<8x256xf32>
    %494 = arith.mulf %490, %493 : vector<8x256xf32>
    %cst_238 = arith.constant 0.000000e+00 : f32
    %495 = vector.broadcast %cst_238 : f32 to vector<8x256xf32>
    %496 = arith.cmpf oge, %494, %495 : vector<8x256xf32>
    %cst_239 = arith.constant 1.000000e+00 : f32
    %cst_240 = arith.constant -1.000000e+00 : f32
    %497 = vector.broadcast %cst_239 : f32 to vector<8x256xf32>
    %498 = vector.broadcast %cst_240 : f32 to vector<8x256xf32>
    %499 = arith.select %496, %497, %498 : vector<8x256xi1>, vector<8x256xf32>
    %500 = math.absf %494 : vector<8x256xf32>
    %cst_241 = arith.constant 0.327591091 : f32
    %501 = vector.broadcast %cst_241 : f32 to vector<8x256xf32>
    %502 = arith.mulf %501, %500 : vector<8x256xf32>
    %cst_242 = arith.constant 1.000000e+00 : f32
    %503 = vector.broadcast %cst_242 : f32 to vector<8x256xf32>
    %504 = arith.addf %503, %502 : vector<8x256xf32>
    %505 = tpu.reciprocal %504 {approx = true} : vector<8x256xf32> -> vector<8x256xf32>
    %cst_243 = arith.constant 1.06140542 : f32
    %506 = vector.broadcast %cst_243 : f32 to vector<8x256xf32>
    %507 = arith.mulf %506, %505 : vector<8x256xf32>
    %cst_244 = arith.constant -1.45315206 : f32
    %508 = vector.broadcast %cst_244 : f32 to vector<8x256xf32>
    %509 = arith.addf %507, %508 : vector<8x256xf32>
    %510 = arith.mulf %509, %505 : vector<8x256xf32>
    %cst_245 = arith.constant 1.42141378 : f32
    %511 = vector.broadcast %cst_245 : f32 to vector<8x256xf32>
    %512 = arith.addf %510, %511 : vector<8x256xf32>
    %513 = arith.mulf %512, %505 : vector<8x256xf32>
    %cst_246 = arith.constant -0.284496725 : f32
    %514 = vector.broadcast %cst_246 : f32 to vector<8x256xf32>
    %515 = arith.addf %513, %514 : vector<8x256xf32>
    %516 = arith.mulf %515, %505 : vector<8x256xf32>
    %cst_247 = arith.constant 0.254829586 : f32
    %517 = vector.broadcast %cst_247 : f32 to vector<8x256xf32>
    %518 = arith.addf %516, %517 : vector<8x256xf32>
    %519 = arith.mulf %518, %505 : vector<8x256xf32>
    %cst_248 = arith.constant 0.000000e+00 : f32
    %520 = vector.broadcast %cst_248 : f32 to vector<8x256xf32>
    %521 = arith.subf %520, %500 : vector<8x256xf32>
    %522 = arith.mulf %521, %500 : vector<8x256xf32>
    %523 = math.exp %522 : vector<8x256xf32>
    %524 = arith.mulf %519, %523 : vector<8x256xf32>
    %cst_249 = arith.constant 1.000000e+00 : f32
    %525 = vector.broadcast %cst_249 : f32 to vector<8x256xf32>
    %526 = arith.subf %525, %524 : vector<8x256xf32>
    %527 = arith.mulf %499, %526 : vector<8x256xf32>
    %cst_250 = arith.constant 1.000000e+00 : f32
    %528 = vector.broadcast %cst_250 : f32 to vector<8x256xf32>
    %529 = arith.addf %528, %527 : vector<8x256xf32>
    %530 = arith.mulf %492, %529 : vector<8x256xf32>
    %c5_251 = arith.constant 5 : index
    %c0_252 = arith.constant 0 : index
    %c0_253 = arith.constant 0 : index
    %531 = vector.load %arg4[%c5_251, %c0_252, %c0_253] : memref<8x256x128xf32, #tpu.memory_space<vmem>>, vector<1x256x128xf32>
    %532 = vector.shape_cast %531 : vector<1x256x128xf32> to vector<256x128xf32>
    %cst_254 = arith.constant dense<0.000000e+00> : vector<8x128xf32>
    %533 = tpu.matmul %530, %532, %cst_254 {dimension_numbers = #tpu.dot_dimension_numbers<[1], [0], [0], [1], [0, 0, 1, 1], [], []>} : vector<8x256xf32>, vector<256x128xf32>, vector<8x128xf32> -> vector<8x128xf32>
    %c5_255 = arith.constant 5 : index
    %c0_256 = arith.constant 0 : index
    %534 = vector.load %arg5[%c5_255, %c0_256] : memref<8x128xf32, #tpu.memory_space<vmem>>, vector<1x128xf32>
    %535 = vector.broadcast %534 : vector<1x128xf32> to vector<8x128xf32>
    %536 = arith.addf %533, %535 : vector<8x128xf32>
    %cst_257 = arith.constant 5.000000e-01 : f32
    %537 = vector.broadcast %cst_257 : f32 to vector<8x128xf32>
    %538 = arith.mulf %537, %536 : vector<8x128xf32>
    %cst_258 = arith.constant 0.707106769 : f32
    %539 = vector.broadcast %cst_258 : f32 to vector<8x128xf32>
    %540 = arith.mulf %536, %539 : vector<8x128xf32>
    %cst_259 = arith.constant 0.000000e+00 : f32
    %541 = vector.broadcast %cst_259 : f32 to vector<8x128xf32>
    %542 = arith.cmpf oge, %540, %541 : vector<8x128xf32>
    %cst_260 = arith.constant 1.000000e+00 : f32
    %cst_261 = arith.constant -1.000000e+00 : f32
    %543 = vector.broadcast %cst_260 : f32 to vector<8x128xf32>
    %544 = vector.broadcast %cst_261 : f32 to vector<8x128xf32>
    %545 = arith.select %542, %543, %544 : vector<8x128xi1>, vector<8x128xf32>
    %546 = math.absf %540 : vector<8x128xf32>
    %cst_262 = arith.constant 0.327591091 : f32
    %547 = vector.broadcast %cst_262 : f32 to vector<8x128xf32>
    %548 = arith.mulf %547, %546 : vector<8x128xf32>
    %cst_263 = arith.constant 1.000000e+00 : f32
    %549 = vector.broadcast %cst_263 : f32 to vector<8x128xf32>
    %550 = arith.addf %549, %548 : vector<8x128xf32>
    %551 = tpu.reciprocal %550 {approx = true} : vector<8x128xf32> -> vector<8x128xf32>
    %cst_264 = arith.constant 1.06140542 : f32
    %552 = vector.broadcast %cst_264 : f32 to vector<8x128xf32>
    %553 = arith.mulf %552, %551 : vector<8x128xf32>
    %cst_265 = arith.constant -1.45315206 : f32
    %554 = vector.broadcast %cst_265 : f32 to vector<8x128xf32>
    %555 = arith.addf %553, %554 : vector<8x128xf32>
    %556 = arith.mulf %555, %551 : vector<8x128xf32>
    %cst_266 = arith.constant 1.42141378 : f32
    %557 = vector.broadcast %cst_266 : f32 to vector<8x128xf32>
    %558 = arith.addf %556, %557 : vector<8x128xf32>
    %559 = arith.mulf %558, %551 : vector<8x128xf32>
    %cst_267 = arith.constant -0.284496725 : f32
    %560 = vector.broadcast %cst_267 : f32 to vector<8x128xf32>
    %561 = arith.addf %559, %560 : vector<8x128xf32>
    %562 = arith.mulf %561, %551 : vector<8x128xf32>
    %cst_268 = arith.constant 0.254829586 : f32
    %563 = vector.broadcast %cst_268 : f32 to vector<8x128xf32>
    %564 = arith.addf %562, %563 : vector<8x128xf32>
    %565 = arith.mulf %564, %551 : vector<8x128xf32>
    %cst_269 = arith.constant 0.000000e+00 : f32
    %566 = vector.broadcast %cst_269 : f32 to vector<8x128xf32>
    %567 = arith.subf %566, %546 : vector<8x128xf32>
    %568 = arith.mulf %567, %546 : vector<8x128xf32>
    %569 = math.exp %568 : vector<8x128xf32>
    %570 = arith.mulf %565, %569 : vector<8x128xf32>
    %cst_270 = arith.constant 1.000000e+00 : f32
    %571 = vector.broadcast %cst_270 : f32 to vector<8x128xf32>
    %572 = arith.subf %571, %570 : vector<8x128xf32>
    %573 = arith.mulf %545, %572 : vector<8x128xf32>
    %cst_271 = arith.constant 1.000000e+00 : f32
    %574 = vector.broadcast %cst_271 : f32 to vector<8x128xf32>
    %575 = arith.addf %574, %573 : vector<8x128xf32>
    %576 = arith.mulf %538, %575 : vector<8x128xf32>
    %c5_272 = arith.constant 5 : index
    %c0_273 = arith.constant 0 : index
    %c0_274 = arith.constant 0 : index
    %577 = vector.load %arg6[%c5_272, %c0_273, %c0_274] : memref<8x128x128xf32, #tpu.memory_space<vmem>>, vector<1x128x128xf32>
    %578 = vector.shape_cast %577 : vector<1x128x128xf32> to vector<128x128xf32>
    %cst_275 = arith.constant dense<0.000000e+00> : vector<8x128xf32>
    %579 = tpu.matmul %576, %578, %cst_275 {dimension_numbers = #tpu.dot_dimension_numbers<[1], [0], [0], [1], [0, 0, 1, 1], [], []>} : vector<8x128xf32>, vector<128x128xf32>, vector<8x128xf32> -> vector<8x128xf32>
    %580 = arith.addf %483, %579 : vector<8x128xf32>
    %c0_276 = arith.constant 0 : index
    %c768 = arith.constant 768 : index
    %581 = vector.load %arg1[%c0_276, %c768] : memref<8x1024xf32, #tpu.memory_space<vmem>>, vector<8x128xf32>
    %c6 = arith.constant 6 : index
    %c0_277 = arith.constant 0 : index
    %c0_278 = arith.constant 0 : index
    %582 = vector.load %arg2[%c6, %c0_277, %c0_278] : memref<8x128x256xf32, #tpu.memory_space<vmem>>, vector<1x128x256xf32>
    %583 = vector.shape_cast %582 : vector<1x128x256xf32> to vector<128x256xf32>
    %cst_279 = arith.constant dense<0.000000e+00> : vector<8x256xf32>
    %584 = tpu.matmul %581, %583, %cst_279 {dimension_numbers = #tpu.dot_dimension_numbers<[1], [0], [0], [1], [0, 0, 1, 1], [], []>} : vector<8x128xf32>, vector<128x256xf32>, vector<8x256xf32> -> vector<8x256xf32>
    %c6_280 = arith.constant 6 : index
    %c0_281 = arith.constant 0 : index
    %585 = vector.load %arg3[%c6_280, %c0_281] : memref<8x256xf32, #tpu.memory_space<vmem>>, vector<1x256xf32>
    %586 = vector.broadcast %585 : vector<1x256xf32> to vector<8x256xf32>
    %587 = arith.addf %584, %586 : vector<8x256xf32>
    %cst_282 = arith.constant 5.000000e-01 : f32
    %588 = vector.broadcast %cst_282 : f32 to vector<8x256xf32>
    %589 = arith.mulf %588, %587 : vector<8x256xf32>
    %cst_283 = arith.constant 0.707106769 : f32
    %590 = vector.broadcast %cst_283 : f32 to vector<8x256xf32>
    %591 = arith.mulf %587, %590 : vector<8x256xf32>
    %cst_284 = arith.constant 0.000000e+00 : f32
    %592 = vector.broadcast %cst_284 : f32 to vector<8x256xf32>
    %593 = arith.cmpf oge, %591, %592 : vector<8x256xf32>
    %cst_285 = arith.constant 1.000000e+00 : f32
    %cst_286 = arith.constant -1.000000e+00 : f32
    %594 = vector.broadcast %cst_285 : f32 to vector<8x256xf32>
    %595 = vector.broadcast %cst_286 : f32 to vector<8x256xf32>
    %596 = arith.select %593, %594, %595 : vector<8x256xi1>, vector<8x256xf32>
    %597 = math.absf %591 : vector<8x256xf32>
    %cst_287 = arith.constant 0.327591091 : f32
    %598 = vector.broadcast %cst_287 : f32 to vector<8x256xf32>
    %599 = arith.mulf %598, %597 : vector<8x256xf32>
    %cst_288 = arith.constant 1.000000e+00 : f32
    %600 = vector.broadcast %cst_288 : f32 to vector<8x256xf32>
    %601 = arith.addf %600, %599 : vector<8x256xf32>
    %602 = tpu.reciprocal %601 {approx = true} : vector<8x256xf32> -> vector<8x256xf32>
    %cst_289 = arith.constant 1.06140542 : f32
    %603 = vector.broadcast %cst_289 : f32 to vector<8x256xf32>
    %604 = arith.mulf %603, %602 : vector<8x256xf32>
    %cst_290 = arith.constant -1.45315206 : f32
    %605 = vector.broadcast %cst_290 : f32 to vector<8x256xf32>
    %606 = arith.addf %604, %605 : vector<8x256xf32>
    %607 = arith.mulf %606, %602 : vector<8x256xf32>
    %cst_291 = arith.constant 1.42141378 : f32
    %608 = vector.broadcast %cst_291 : f32 to vector<8x256xf32>
    %609 = arith.addf %607, %608 : vector<8x256xf32>
    %610 = arith.mulf %609, %602 : vector<8x256xf32>
    %cst_292 = arith.constant -0.284496725 : f32
    %611 = vector.broadcast %cst_292 : f32 to vector<8x256xf32>
    %612 = arith.addf %610, %611 : vector<8x256xf32>
    %613 = arith.mulf %612, %602 : vector<8x256xf32>
    %cst_293 = arith.constant 0.254829586 : f32
    %614 = vector.broadcast %cst_293 : f32 to vector<8x256xf32>
    %615 = arith.addf %613, %614 : vector<8x256xf32>
    %616 = arith.mulf %615, %602 : vector<8x256xf32>
    %cst_294 = arith.constant 0.000000e+00 : f32
    %617 = vector.broadcast %cst_294 : f32 to vector<8x256xf32>
    %618 = arith.subf %617, %597 : vector<8x256xf32>
    %619 = arith.mulf %618, %597 : vector<8x256xf32>
    %620 = math.exp %619 : vector<8x256xf32>
    %621 = arith.mulf %616, %620 : vector<8x256xf32>
    %cst_295 = arith.constant 1.000000e+00 : f32
    %622 = vector.broadcast %cst_295 : f32 to vector<8x256xf32>
    %623 = arith.subf %622, %621 : vector<8x256xf32>
    %624 = arith.mulf %596, %623 : vector<8x256xf32>
    %cst_296 = arith.constant 1.000000e+00 : f32
    %625 = vector.broadcast %cst_296 : f32 to vector<8x256xf32>
    %626 = arith.addf %625, %624 : vector<8x256xf32>
    %627 = arith.mulf %589, %626 : vector<8x256xf32>
    %c6_297 = arith.constant 6 : index
    %c0_298 = arith.constant 0 : index
    %c0_299 = arith.constant 0 : index
    %628 = vector.load %arg4[%c6_297, %c0_298, %c0_299] : memref<8x256x128xf32, #tpu.memory_space<vmem>>, vector<1x256x128xf32>
    %629 = vector.shape_cast %628 : vector<1x256x128xf32> to vector<256x128xf32>
    %cst_300 = arith.constant dense<0.000000e+00> : vector<8x128xf32>
    %630 = tpu.matmul %627, %629, %cst_300 {dimension_numbers = #tpu.dot_dimension_numbers<[1], [0], [0], [1], [0, 0, 1, 1], [], []>} : vector<8x256xf32>, vector<256x128xf32>, vector<8x128xf32> -> vector<8x128xf32>
    %c6_301 = arith.constant 6 : index
    %c0_302 = arith.constant 0 : index
    %631 = vector.load %arg5[%c6_301, %c0_302] : memref<8x128xf32, #tpu.memory_space<vmem>>, vector<1x128xf32>
    %632 = vector.broadcast %631 : vector<1x128xf32> to vector<8x128xf32>
    %633 = arith.addf %630, %632 : vector<8x128xf32>
    %cst_303 = arith.constant 5.000000e-01 : f32
    %634 = vector.broadcast %cst_303 : f32 to vector<8x128xf32>
    %635 = arith.mulf %634, %633 : vector<8x128xf32>
    %cst_304 = arith.constant 0.707106769 : f32
    %636 = vector.broadcast %cst_304 : f32 to vector<8x128xf32>
    %637 = arith.mulf %633, %636 : vector<8x128xf32>
    %cst_305 = arith.constant 0.000000e+00 : f32
    %638 = vector.broadcast %cst_305 : f32 to vector<8x128xf32>
    %639 = arith.cmpf oge, %637, %638 : vector<8x128xf32>
    %cst_306 = arith.constant 1.000000e+00 : f32
    %cst_307 = arith.constant -1.000000e+00 : f32
    %640 = vector.broadcast %cst_306 : f32 to vector<8x128xf32>
    %641 = vector.broadcast %cst_307 : f32 to vector<8x128xf32>
    %642 = arith.select %639, %640, %641 : vector<8x128xi1>, vector<8x128xf32>
    %643 = math.absf %637 : vector<8x128xf32>
    %cst_308 = arith.constant 0.327591091 : f32
    %644 = vector.broadcast %cst_308 : f32 to vector<8x128xf32>
    %645 = arith.mulf %644, %643 : vector<8x128xf32>
    %cst_309 = arith.constant 1.000000e+00 : f32
    %646 = vector.broadcast %cst_309 : f32 to vector<8x128xf32>
    %647 = arith.addf %646, %645 : vector<8x128xf32>
    %648 = tpu.reciprocal %647 {approx = true} : vector<8x128xf32> -> vector<8x128xf32>
    %cst_310 = arith.constant 1.06140542 : f32
    %649 = vector.broadcast %cst_310 : f32 to vector<8x128xf32>
    %650 = arith.mulf %649, %648 : vector<8x128xf32>
    %cst_311 = arith.constant -1.45315206 : f32
    %651 = vector.broadcast %cst_311 : f32 to vector<8x128xf32>
    %652 = arith.addf %650, %651 : vector<8x128xf32>
    %653 = arith.mulf %652, %648 : vector<8x128xf32>
    %cst_312 = arith.constant 1.42141378 : f32
    %654 = vector.broadcast %cst_312 : f32 to vector<8x128xf32>
    %655 = arith.addf %653, %654 : vector<8x128xf32>
    %656 = arith.mulf %655, %648 : vector<8x128xf32>
    %cst_313 = arith.constant -0.284496725 : f32
    %657 = vector.broadcast %cst_313 : f32 to vector<8x128xf32>
    %658 = arith.addf %656, %657 : vector<8x128xf32>
    %659 = arith.mulf %658, %648 : vector<8x128xf32>
    %cst_314 = arith.constant 0.254829586 : f32
    %660 = vector.broadcast %cst_314 : f32 to vector<8x128xf32>
    %661 = arith.addf %659, %660 : vector<8x128xf32>
    %662 = arith.mulf %661, %648 : vector<8x128xf32>
    %cst_315 = arith.constant 0.000000e+00 : f32
    %663 = vector.broadcast %cst_315 : f32 to vector<8x128xf32>
    %664 = arith.subf %663, %643 : vector<8x128xf32>
    %665 = arith.mulf %664, %643 : vector<8x128xf32>
    %666 = math.exp %665 : vector<8x128xf32>
    %667 = arith.mulf %662, %666 : vector<8x128xf32>
    %cst_316 = arith.constant 1.000000e+00 : f32
    %668 = vector.broadcast %cst_316 : f32 to vector<8x128xf32>
    %669 = arith.subf %668, %667 : vector<8x128xf32>
    %670 = arith.mulf %642, %669 : vector<8x128xf32>
    %cst_317 = arith.constant 1.000000e+00 : f32
    %671 = vector.broadcast %cst_317 : f32 to vector<8x128xf32>
    %672 = arith.addf %671, %670 : vector<8x128xf32>
    %673 = arith.mulf %635, %672 : vector<8x128xf32>
    %c6_318 = arith.constant 6 : index
    %c0_319 = arith.constant 0 : index
    %c0_320 = arith.constant 0 : index
    %674 = vector.load %arg6[%c6_318, %c0_319, %c0_320] : memref<8x128x128xf32, #tpu.memory_space<vmem>>, vector<1x128x128xf32>
    %675 = vector.shape_cast %674 : vector<1x128x128xf32> to vector<128x128xf32>
    %cst_321 = arith.constant dense<0.000000e+00> : vector<8x128xf32>
    %676 = tpu.matmul %673, %675, %cst_321 {dimension_numbers = #tpu.dot_dimension_numbers<[1], [0], [0], [1], [0, 0, 1, 1], [], []>} : vector<8x128xf32>, vector<128x128xf32>, vector<8x128xf32> -> vector<8x128xf32>
    %677 = arith.addf %580, %676 : vector<8x128xf32>
    %c0_322 = arith.constant 0 : index
    %c896 = arith.constant 896 : index
    %678 = vector.load %arg1[%c0_322, %c896] : memref<8x1024xf32, #tpu.memory_space<vmem>>, vector<8x128xf32>
    %c7 = arith.constant 7 : index
    %c0_323 = arith.constant 0 : index
    %c0_324 = arith.constant 0 : index
    %679 = vector.load %arg2[%c7, %c0_323, %c0_324] : memref<8x128x256xf32, #tpu.memory_space<vmem>>, vector<1x128x256xf32>
    %680 = vector.shape_cast %679 : vector<1x128x256xf32> to vector<128x256xf32>
    %cst_325 = arith.constant dense<0.000000e+00> : vector<8x256xf32>
    %681 = tpu.matmul %678, %680, %cst_325 {dimension_numbers = #tpu.dot_dimension_numbers<[1], [0], [0], [1], [0, 0, 1, 1], [], []>} : vector<8x128xf32>, vector<128x256xf32>, vector<8x256xf32> -> vector<8x256xf32>
    %c7_326 = arith.constant 7 : index
    %c0_327 = arith.constant 0 : index
    %682 = vector.load %arg3[%c7_326, %c0_327] : memref<8x256xf32, #tpu.memory_space<vmem>>, vector<1x256xf32>
    %683 = vector.broadcast %682 : vector<1x256xf32> to vector<8x256xf32>
    %684 = arith.addf %681, %683 : vector<8x256xf32>
    %cst_328 = arith.constant 5.000000e-01 : f32
    %685 = vector.broadcast %cst_328 : f32 to vector<8x256xf32>
    %686 = arith.mulf %685, %684 : vector<8x256xf32>
    %cst_329 = arith.constant 0.707106769 : f32
    %687 = vector.broadcast %cst_329 : f32 to vector<8x256xf32>
    %688 = arith.mulf %684, %687 : vector<8x256xf32>
    %cst_330 = arith.constant 0.000000e+00 : f32
    %689 = vector.broadcast %cst_330 : f32 to vector<8x256xf32>
    %690 = arith.cmpf oge, %688, %689 : vector<8x256xf32>
    %cst_331 = arith.constant 1.000000e+00 : f32
    %cst_332 = arith.constant -1.000000e+00 : f32
    %691 = vector.broadcast %cst_331 : f32 to vector<8x256xf32>
    %692 = vector.broadcast %cst_332 : f32 to vector<8x256xf32>
    %693 = arith.select %690, %691, %692 : vector<8x256xi1>, vector<8x256xf32>
    %694 = math.absf %688 : vector<8x256xf32>
    %cst_333 = arith.constant 0.327591091 : f32
    %695 = vector.broadcast %cst_333 : f32 to vector<8x256xf32>
    %696 = arith.mulf %695, %694 : vector<8x256xf32>
    %cst_334 = arith.constant 1.000000e+00 : f32
    %697 = vector.broadcast %cst_334 : f32 to vector<8x256xf32>
    %698 = arith.addf %697, %696 : vector<8x256xf32>
    %699 = tpu.reciprocal %698 {approx = true} : vector<8x256xf32> -> vector<8x256xf32>
    %cst_335 = arith.constant 1.06140542 : f32
    %700 = vector.broadcast %cst_335 : f32 to vector<8x256xf32>
    %701 = arith.mulf %700, %699 : vector<8x256xf32>
    %cst_336 = arith.constant -1.45315206 : f32
    %702 = vector.broadcast %cst_336 : f32 to vector<8x256xf32>
    %703 = arith.addf %701, %702 : vector<8x256xf32>
    %704 = arith.mulf %703, %699 : vector<8x256xf32>
    %cst_337 = arith.constant 1.42141378 : f32
    %705 = vector.broadcast %cst_337 : f32 to vector<8x256xf32>
    %706 = arith.addf %704, %705 : vector<8x256xf32>
    %707 = arith.mulf %706, %699 : vector<8x256xf32>
    %cst_338 = arith.constant -0.284496725 : f32
    %708 = vector.broadcast %cst_338 : f32 to vector<8x256xf32>
    %709 = arith.addf %707, %708 : vector<8x256xf32>
    %710 = arith.mulf %709, %699 : vector<8x256xf32>
    %cst_339 = arith.constant 0.254829586 : f32
    %711 = vector.broadcast %cst_339 : f32 to vector<8x256xf32>
    %712 = arith.addf %710, %711 : vector<8x256xf32>
    %713 = arith.mulf %712, %699 : vector<8x256xf32>
    %cst_340 = arith.constant 0.000000e+00 : f32
    %714 = vector.broadcast %cst_340 : f32 to vector<8x256xf32>
    %715 = arith.subf %714, %694 : vector<8x256xf32>
    %716 = arith.mulf %715, %694 : vector<8x256xf32>
    %717 = math.exp %716 : vector<8x256xf32>
    %718 = arith.mulf %713, %717 : vector<8x256xf32>
    %cst_341 = arith.constant 1.000000e+00 : f32
    %719 = vector.broadcast %cst_341 : f32 to vector<8x256xf32>
    %720 = arith.subf %719, %718 : vector<8x256xf32>
    %721 = arith.mulf %693, %720 : vector<8x256xf32>
    %cst_342 = arith.constant 1.000000e+00 : f32
    %722 = vector.broadcast %cst_342 : f32 to vector<8x256xf32>
    %723 = arith.addf %722, %721 : vector<8x256xf32>
    %724 = arith.mulf %686, %723 : vector<8x256xf32>
    %c7_343 = arith.constant 7 : index
    %c0_344 = arith.constant 0 : index
    %c0_345 = arith.constant 0 : index
    %725 = vector.load %arg4[%c7_343, %c0_344, %c0_345] : memref<8x256x128xf32, #tpu.memory_space<vmem>>, vector<1x256x128xf32>
    %726 = vector.shape_cast %725 : vector<1x256x128xf32> to vector<256x128xf32>
    %cst_346 = arith.constant dense<0.000000e+00> : vector<8x128xf32>
    %727 = tpu.matmul %724, %726, %cst_346 {dimension_numbers = #tpu.dot_dimension_numbers<[1], [0], [0], [1], [0, 0, 1, 1], [], []>} : vector<8x256xf32>, vector<256x128xf32>, vector<8x128xf32> -> vector<8x128xf32>
    %c7_347 = arith.constant 7 : index
    %c0_348 = arith.constant 0 : index
    %728 = vector.load %arg5[%c7_347, %c0_348] : memref<8x128xf32, #tpu.memory_space<vmem>>, vector<1x128xf32>
    %729 = vector.broadcast %728 : vector<1x128xf32> to vector<8x128xf32>
    %730 = arith.addf %727, %729 : vector<8x128xf32>
    %cst_349 = arith.constant 5.000000e-01 : f32
    %731 = vector.broadcast %cst_349 : f32 to vector<8x128xf32>
    %732 = arith.mulf %731, %730 : vector<8x128xf32>
    %cst_350 = arith.constant 0.707106769 : f32
    %733 = vector.broadcast %cst_350 : f32 to vector<8x128xf32>
    %734 = arith.mulf %730, %733 : vector<8x128xf32>
    %cst_351 = arith.constant 0.000000e+00 : f32
    %735 = vector.broadcast %cst_351 : f32 to vector<8x128xf32>
    %736 = arith.cmpf oge, %734, %735 : vector<8x128xf32>
    %cst_352 = arith.constant 1.000000e+00 : f32
    %cst_353 = arith.constant -1.000000e+00 : f32
    %737 = vector.broadcast %cst_352 : f32 to vector<8x128xf32>
    %738 = vector.broadcast %cst_353 : f32 to vector<8x128xf32>
    %739 = arith.select %736, %737, %738 : vector<8x128xi1>, vector<8x128xf32>
    %740 = math.absf %734 : vector<8x128xf32>
    %cst_354 = arith.constant 0.327591091 : f32
    %741 = vector.broadcast %cst_354 : f32 to vector<8x128xf32>
    %742 = arith.mulf %741, %740 : vector<8x128xf32>
    %cst_355 = arith.constant 1.000000e+00 : f32
    %743 = vector.broadcast %cst_355 : f32 to vector<8x128xf32>
    %744 = arith.addf %743, %742 : vector<8x128xf32>
    %745 = tpu.reciprocal %744 {approx = true} : vector<8x128xf32> -> vector<8x128xf32>
    %cst_356 = arith.constant 1.06140542 : f32
    %746 = vector.broadcast %cst_356 : f32 to vector<8x128xf32>
    %747 = arith.mulf %746, %745 : vector<8x128xf32>
    %cst_357 = arith.constant -1.45315206 : f32
    %748 = vector.broadcast %cst_357 : f32 to vector<8x128xf32>
    %749 = arith.addf %747, %748 : vector<8x128xf32>
    %750 = arith.mulf %749, %745 : vector<8x128xf32>
    %cst_358 = arith.constant 1.42141378 : f32
    %751 = vector.broadcast %cst_358 : f32 to vector<8x128xf32>
    %752 = arith.addf %750, %751 : vector<8x128xf32>
    %753 = arith.mulf %752, %745 : vector<8x128xf32>
    %cst_359 = arith.constant -0.284496725 : f32
    %754 = vector.broadcast %cst_359 : f32 to vector<8x128xf32>
    %755 = arith.addf %753, %754 : vector<8x128xf32>
    %756 = arith.mulf %755, %745 : vector<8x128xf32>
    %cst_360 = arith.constant 0.254829586 : f32
    %757 = vector.broadcast %cst_360 : f32 to vector<8x128xf32>
    %758 = arith.addf %756, %757 : vector<8x128xf32>
    %759 = arith.mulf %758, %745 : vector<8x128xf32>
    %cst_361 = arith.constant 0.000000e+00 : f32
    %760 = vector.broadcast %cst_361 : f32 to vector<8x128xf32>
    %761 = arith.subf %760, %740 : vector<8x128xf32>
    %762 = arith.mulf %761, %740 : vector<8x128xf32>
    %763 = math.exp %762 : vector<8x128xf32>
    %764 = arith.mulf %759, %763 : vector<8x128xf32>
    %cst_362 = arith.constant 1.000000e+00 : f32
    %765 = vector.broadcast %cst_362 : f32 to vector<8x128xf32>
    %766 = arith.subf %765, %764 : vector<8x128xf32>
    %767 = arith.mulf %739, %766 : vector<8x128xf32>
    %cst_363 = arith.constant 1.000000e+00 : f32
    %768 = vector.broadcast %cst_363 : f32 to vector<8x128xf32>
    %769 = arith.addf %768, %767 : vector<8x128xf32>
    %770 = arith.mulf %732, %769 : vector<8x128xf32>
    %c7_364 = arith.constant 7 : index
    %c0_365 = arith.constant 0 : index
    %c0_366 = arith.constant 0 : index
    %771 = vector.load %arg6[%c7_364, %c0_365, %c0_366] : memref<8x128x128xf32, #tpu.memory_space<vmem>>, vector<1x128x128xf32>
    %772 = vector.shape_cast %771 : vector<1x128x128xf32> to vector<128x128xf32>
    %cst_367 = arith.constant dense<0.000000e+00> : vector<8x128xf32>
    %773 = tpu.matmul %770, %772, %cst_367 {dimension_numbers = #tpu.dot_dimension_numbers<[1], [0], [0], [1], [0, 0, 1, 1], [], []>} : vector<8x128xf32>, vector<128x128xf32>, vector<8x128xf32> -> vector<8x128xf32>
    %774 = arith.addf %677, %773 : vector<8x128xf32>
    %c0_368 = arith.constant 0 : index
    %c0_369 = arith.constant 0 : index
    %775 = vector.load %arg7[%c0_368, %c0_369] : memref<1x128xf32, #tpu.memory_space<vmem>>, vector<1x128xf32>
    %776 = vector.broadcast %775 : vector<1x128xf32> to vector<8x128xf32>
    %777 = arith.addf %774, %776 : vector<8x128xf32>
    %c0_370 = arith.constant 0 : index
    %c0_371 = arith.constant 0 : index
    %778 = vector.load %arg8[%c0_370, %c0_371] : memref<8x128xf32, #tpu.memory_space<vmem>>, vector<8x128xf32>
    tpu.vector_store %arg8[%c0_370, %c0_371], %777 {strides = array<i32>} : memref<8x128xf32, #tpu.memory_space<vmem>>, vector<8x128xf32>,
    return
  }
  func.func @transform_0(%arg0: i32) -> (i32, i32) {
    %c0_i32 = arith.constant 0 : i32
    %c0_i32_0 = arith.constant 0 : i32
    return %arg0, %c0_i32 : i32, i32
  }
  func.func @transform_1(%arg0: i32) -> (i32, i32, i32) {
    %c0_i32 = arith.constant 0 : i32
    %c0_i32_0 = arith.constant 0 : i32
    %c0_i32_1 = arith.constant 0 : i32
    %c0_i32_2 = arith.constant 0 : i32
    return %c0_i32, %c0_i32_0, %c0_i32_1 : i32, i32, i32
  }
  func.func @transform_2(%arg0: i32) -> (i32, i32) {
    %c0_i32 = arith.constant 0 : i32
    %c0_i32_0 = arith.constant 0 : i32
    %c0_i32_1 = arith.constant 0 : i32
    return %c0_i32, %c0_i32_0 : i32, i32
  }
  func.func @transform_3(%arg0: i32) -> (i32, i32, i32) {
    %c0_i32 = arith.constant 0 : i32
    %c0_i32_0 = arith.constant 0 : i32
    %c0_i32_1 = arith.constant 0 : i32
    %c0_i32_2 = arith.constant 0 : i32
    return %c0_i32, %c0_i32_0, %c0_i32_1 : i32, i32, i32
  }
  func.func @transform_4(%arg0: i32) -> (i32, i32) {
    %c0_i32 = arith.constant 0 : i32
    %c0_i32_0 = arith.constant 0 : i32
    %c0_i32_1 = arith.constant 0 : i32
    return %c0_i32, %c0_i32_0 : i32, i32
  }
  func.func @transform_5(%arg0: i32) -> (i32, i32, i32) {
    %c0_i32 = arith.constant 0 : i32
    %c0_i32_0 = arith.constant 0 : i32
    %c0_i32_1 = arith.constant 0 : i32
    %c0_i32_2 = arith.constant 0 : i32
    return %c0_i32, %c0_i32_0, %c0_i32_1 : i32, i32, i32
  }
  func.func @transform_6(%arg0: i32) -> (i32, i32) {
    %c0_i32 = arith.constant 0 : i32
    %c0_i32_0 = arith.constant 0 : i32
    %c0_i32_1 = arith.constant 0 : i32
    return %c0_i32, %c0_i32_0 : i32, i32
  }
  func.func @transform_7(%arg0: i32) -> (i32, i32) {
    %c0_i32 = arith.constant 0 : i32
    %c0_i32_0 = arith.constant 0 : i32
    return %arg0, %c0_i32 : i32, i32
  }
}

</mosaic_0001>

<llo_original>
// kernel: tpu_custom_call.1
$region0: #{tpu_custom_call.1}
  #allocation0 [shape = 'u32[]', space=smem, size = 0x4, offset = 0x4, fixed_abs, tag = 'smem constant byte address 0x4 - core index']
  #allocation1 [shape = 'u32[144,128]{1,0:T(1,128)}', space=vmem, size = 0x12000, scoped, tag = 'internal scratch']
  %s0 = inlined_call_operand.hbm [shape: f32[8,1024], index: 0, kind: input, shape index: {}]
  %s1 = inlined_call_operand.hbm [shape: f32[8,128,256], index: 1, kind: input, shape index: {}]
  %s2 = inlined_call_operand.hbm [shape: f32[8,256], index: 2, kind: input, shape index: {}]
  %s3 = inlined_call_operand.hbm [shape: f32[8,256,128], index: 3, kind: input, shape index: {}]
  %s4 = inlined_call_operand.hbm [shape: f32[8,128], index: 4, kind: input, shape index: {}]
  %s5 = inlined_call_operand.hbm [shape: f32[8,128,128], index: 5, kind: input, shape index: {}]
  %s6 = inlined_call_operand.vmem [shape: f32[1,128], index: 6, kind: input, shape index: {}]
  %s7 = inlined_call_operand.hbm [shape: f32[8,128], index: 7, kind: output, shape index: {}]
  %s8 = sld [smem:[#allocation0]]
  $region62: #{tpu_custom_call.1} parent=0
    _
  %s10 = ssub.s32 1, %s8
  %s11 = scalar_select 0, %s10, %s8
  $region1: #{tpu_custom_call.1} parent=0
    #allocation2 [shape = 'u8[32768]{0}', space=vmem, size = 0x8000, scoped, tag = 'input window, operand 0, single buffered']
    #allocation3 [shape = 's32[1]{0}', space=sflag, size = 0x4, scoped, tag = 'scoped memory for tpu_custom_call.1']
    #allocation4 [shape = 's32[1]{0}', space=sflag, size = 0x4, scoped, tag = 'scoped memory for tpu_custom_call.1']
    #allocation5 [shape = 'u8[1048576]{0}', space=vmem, size = 0x100000, scoped, tag = 'input window, operand 1, single buffered']
    #allocation6 [shape = 's32[1]{0}', space=sflag, size = 0x4, scoped, tag = 'scoped memory for tpu_custom_call.1']
    #allocation7 [shape = 'u8[8192]{0}', space=vmem, size = 0x2000, scoped, tag = 'input window, operand 2, single buffered']
    #allocation8 [shape = 'u8[1048576]{0}', space=vmem, size = 0x100000, scoped, tag = 'input window, operand 3, single buffered']
    #allocation9 [shape = 's32[1]{0}', space=sflag, size = 0x4, scoped, tag = 'scoped memory for tpu_custom_call.1']
    #allocation10 [shape = 'u8[4096]{0}', space=vmem, size = 0x1000, scoped, tag = 'input window, operand 4, single buffered']
    #allocation11 [shape = 'u8[524288]{0}', space=vmem, size = 0x80000, scoped, tag = 'input window, operand 5, single buffered']
    #allocation12 [shape = 's32[1]{0}', space=sflag, size = 0x4, scoped, tag = 'scoped memory for tpu_custom_call.1']
    #allocation13 [shape = 'u8[4096]{0}', space=vmem, size = 0x1000, scoped, tag = 'output window, operand 0, single buffered']
    %12 = vsyncpa [#allocation3], 0
    %13 = vsyncpa [#allocation6], 0
    %14 = vsyncpa [#allocation9], 0
    %15 = vsyncpa [#allocation12], 0
    %16 = vsyncpa [#allocation4], 0
    // Predicated region
    $region2: #{tpu_custom_call.1} parent=1 // pred_check
      _
    $region3: #{tpu_custom_call.1} parent=1 // pred_check_branch
      %18 = sbr.rel (0) target = $region5
    $region4: #{tpu_custom_call.1} parent=1 // pred_region
      %s20 = ssub.s32 1024, 1024
      %21 = vsyncadd [#allocation3], %s20
      %s23 = sshll.u32 [#allocation2], 4
      %s24 = int_to_ptr.vmem [resolvable:$true] %s23
      %26 = dma.hbm_to_vmem [thread:$0]  %s0, 1024, %s24, [#allocation3]
    $region5: #{tpu_custom_call.1} parent=1 // pred_fallthru
      _
    // Predicated region
    $region6: #{tpu_custom_call.1} parent=1 // pred_check
      _
    $region7: #{tpu_custom_call.1} parent=1 // pred_check_branch
      %28 = sbr.rel (0) target = $region9
    $region8: #{tpu_custom_call.1} parent=1 // pred_region
      %s30 = ssub.s32 32768, 32768
      %31 = vsyncadd [#allocation6], %s30
      %s32 = sshll.u32 [#allocation5], 4
      %s33 = int_to_ptr.vmem [resolvable:$true] %s32
      %38 = dma.hbm_to_vmem [thread:$0]  %s1, 32768, %s33, [#allocation6], 256, 256, 16
    $region9: #{tpu_custom_call.1} parent=1 // pred_fallthru
      _
    // Predicated region
    $region10: #{tpu_custom_call.1} parent=1 // pred_check
      _
    $region11: #{tpu_custom_call.1} parent=1 // pred_check_branch
      %40 = sbr.rel (0) target = $region13
    $region12: #{tpu_custom_call.1} parent=1 // pred_region
      %s42 = ssub.s32 256, 256
      %43 = vsyncadd [#allocation6], %s42
      %s45 = sshll.u32 [#allocation7], 4
      %s46 = int_to_ptr.vmem [resolvable:$true] %s45
      %48 = dma.hbm_to_vmem [thread:$0]  %s2, 256, %s46, [#allocation6]
    $region13: #{tpu_custom_call.1} parent=1 // pred_fallthru
      _
    // Predicated region
    $region14: #{tpu_custom_call.1} parent=1 // pred_check
      _
    $region15: #{tpu_custom_call.1} parent=1 // pred_check_branch
      %50 = sbr.rel (0) target = $region17
    $region16: #{tpu_custom_call.1} parent=1 // pred_region
      %s52 = ssub.s32 32768, 32768
      %53 = vsyncadd [#allocation9], %s52
      %s54 = sshll.u32 [#allocation8], 4
      %s55 = int_to_ptr.vmem [resolvable:$true] %s54
      %60 = dma.hbm_to_vmem [thread:$0]  %s3, 32768, %s55, [#allocation9], 128, 128, 8
    $region17: #{tpu_custom_call.1} parent=1 // pred_fallthru
      _
    // Predicated region
    $region18: #{tpu_custom_call.1} parent=1 // pred_check
      _
    $region19: #{tpu_custom_call.1} parent=1 // pred_check_branch
      %62 = sbr.rel (0) target = $region21
    $region20: #{tpu_custom_call.1} parent=1 // pred_region
      %s64 = ssub.s32 128, 128
      %65 = vsyncadd [#allocation9], %s64
      %s67 = sshll.u32 [#allocation10], 4
      %s68 = int_to_ptr.vmem [resolvable:$true] %s67
      %70 = dma.hbm_to_vmem [thread:$0]  %s4, 128, %s68, [#allocation9]
    $region21: #{tpu_custom_call.1} parent=1 // pred_fallthru
      _
    // Predicated region
    $region22: #{tpu_custom_call.1} parent=1 // pred_check
      _
    $region23: #{tpu_custom_call.1} parent=1 // pred_check_branch
      %72 = sbr.rel (0) target = $region25
    $region24: #{tpu_custom_call.1} parent=1 // pred_region
      %s74 = ssub.s32 16384, 16384
      %75 = vsyncadd [#allocation12], %s74
      %s76 = sshll.u32 [#allocation11], 4
      %s77 = int_to_ptr.vmem [resolvable:$true] %s76
      %82 = dma.hbm_to_vmem [thread:$0]  %s5, 16384, %s77, [#allocation12], 128, 128, 8
    $region25: #{tpu_custom_call.1} parent=1 // pred_fallthru
      _
    // Predicated region
    $region26: #{tpu_custom_call.1} parent=1 // pred_check
      _
    $region27: #{tpu_custom_call.1} parent=1 // pred_check_branch
      %84 = sbr.rel (0) target = $region29
    $region28: #{tpu_custom_call.1} parent=1 // pred_region
      _
    $region29: #{tpu_custom_call.1} parent=1 // pred_fallthru
      _
    // Predicated region
    $region30: #{tpu_custom_call.1} parent=1 // pred_check
      _
    $region31: #{tpu_custom_call.1} parent=1 // pred_check_branch
      %86 = sbr.rel (0) target = $region33
    $region32: #{tpu_custom_call.1} parent=1 // pred_region
      %87 = dma.done [#allocation3], 1024
    $region33: #{tpu_custom_call.1} parent=1 // pred_fallthru
      _
    // Predicated region
    $region34: #{tpu_custom_call.1} parent=1 // pred_check
      _
    $region35: #{tpu_custom_call.1} parent=1 // pred_check_branch
      %89 = sbr.rel (0) target = $region37
    $region36: #{tpu_custom_call.1} parent=1 // pred_region
      %90 = dma.done [#allocation6], 32768
    $region37: #{tpu_custom_call.1} parent=1 // pred_fallthru
      _
    // Predicated region
    $region38: #{tpu_custom_call.1} parent=1 // pred_check
      _
    $region39: #{tpu_custom_call.1} parent=1 // pred_check_branch
      %92 = sbr.rel (0) target = $region41
    $region40: #{tpu_custom_call.1} parent=1 // pred_region
      %93 = dma.done [#allocation6], 256
    $region41: #{tpu_custom_call.1} parent=1 // pred_fallthru
      _
    // Predicated region
    $region42: #{tpu_custom_call.1} parent=1 // pred_check
      _
    $region43: #{tpu_custom_call.1} parent=1 // pred_check_branch
      %95 = sbr.rel (0) target = $region45
    $region44: #{tpu_custom_call.1} parent=1 // pred_region
      %96 = dma.done [#allocation9], 32768
    $region45: #{tpu_custom_call.1} parent=1 // pred_fallthru
      _
    // Predicated region
    $region46: #{tpu_custom_call.1} parent=1 // pred_check
      _
    $region47: #{tpu_custom_call.1} parent=1 // pred_check_branch
      %98 = sbr.rel (0) target = $region49
    $region48: #{tpu_custom_call.1} parent=1 // pred_region
      %99 = dma.done [#allocation9], 128
    $region49: #{tpu_custom_call.1} parent=1 // pred_fallthru
      _
    // Predicated region
    $region50: #{tpu_custom_call.1} parent=1 // pred_check
      _
    $region51: #{tpu_custom_call.1} parent=1 // pred_check_branch
      %101 = sbr.rel (0) target = $region53
    $region52: #{tpu_custom_call.1} parent=1 // pred_region
      %102 = dma.done [#allocation12], 16384
    $region53: #{tpu_custom_call.1} parent=1 // pred_fallthru
      _
    %v103 = vld [vmem:[#allocation2] sm:$0xff]
    %v104 = vld [vmem:[#allocation5] sm:$0xff]
    %v105 = vld [vmem:[#allocation5 + $0x8] sm:$0xff]
    %v106 = vld [vmem:[#allocation5 + $0x10] sm:$0xff]
    %v107 = vld [vmem:[#allocation5 + $0x18] sm:$0xff]
    %v108 = vld [vmem:[#allocation5 + $0x20] sm:$0xff]
    %v109 = vld [vmem:[#allocation5 + $0x28] sm:$0xff]
    %v110 = vld [vmem:[#allocation5 + $0x30] sm:$0xff]
    %v111 = vld [vmem:[#allocation5 + $0x38] sm:$0xff]
    %v112 = vld [vmem:[#allocation5 + $0x40] sm:$0xff]
    %v113 = vld [vmem:[#allocation5 + $0x48] sm:$0xff]
    %v114 = vld [vmem:[#allocation5 + $0x50] sm:$0xff]
    %v115 = vld [vmem:[#allocation5 + $0x58] sm:$0xff]
    %v116 = vld [vmem:[#allocation5 + $0x60] sm:$0xff]
    %v117 = vld [vmem:[#allocation5 + $0x68] sm:$0xff]
    %v118 = vld [vmem:[#allocation5 + $0x70] sm:$0xff]
    %v119 = vld [vmem:[#allocation5 + $0x78] sm:$0xff]
    %v120 = vld [vmem:[#allocation5 + $0x80] sm:$0xff]
    %v121 = vld [vmem:[#allocation5 + $0x88] sm:$0xff]
    %v122 = vld [vmem:[#allocation5 + $0x90] sm:$0xff]
    %v123 = vld [vmem:[#allocation5 + $0x98] sm:$0xff]
    %v124 = vld [vmem:[#allocation5 + $0xa0] sm:$0xff]
    %v125 = vld [vmem:[#allocation5 + $0xa8] sm:$0xff]
    %v126 = vld [vmem:[#allocation5 + $0xb0] sm:$0xff]
    %v127 = vld [vmem:[#allocation5 + $0xb8] sm:$0xff]
    %v128 = vld [vmem:[#allocation5 + $0xc0] sm:$0xff]
    %v129 = vld [vmem:[#allocation5 + $0xc8] sm:$0xff]
    %v130 = vld [vmem:[#allocation5 + $0xd0] sm:$0xff]
    %v131 = vld [vmem:[#allocation5 + $0xd8] sm:$0xff]
    %v132 = vld [vmem:[#allocation5 + $0xe0] sm:$0xff]
    %v133 = vld [vmem:[#allocation5 + $0xe8] sm:$0xff]
    %v134 = vld [vmem:[#allocation5 + $0xf0] sm:$0xff]
    %v135 = vld [vmem:[#allocation5 + $0xf8] sm:$0xff]
    %v136 = vld [vmem:[#allocation7] ss:$8 sm:$0x3]
    %v138 = vlaneseq
    %v139 = vshrl.u32 %v138, 7
    %v140 = vsub.s32 0, %v139
    %v141 = vrot.slane %v136, %v140
    %v142 = vlaneseq
    %v143 = vshrl.u32 %v142, 7
    %v144 = vsub.s32 1, %v143
    %v145 = vrot.slane %v136, %v144
    %148 = vmatprep.subr.mxu0 %v135
    %149 = vmatpush1.msra.mxu0 %v134
    %150 = vmatprep.subr.mxu0 %v133
    %151 = vmatpush1.msra.mxu0 %v132
    %152 = vmatprep.subr.mxu0 %v131
    %153 = vmatpush1.msra.mxu0 %v130
    %154 = vmatprep.subr.mxu0 %v129
    %155 = vmatpush1.msra.mxu0 %v128
    %156 = vmatprep.subr.mxu0 %v127
    %157 = vmatpush1.msra.mxu0 %v126
    %158 = vmatprep.subr.mxu0 %v125
    %159 = vmatpush1.msra.mxu0 %v124
    %160 = vmatprep.subr.mxu0 %v123
    %161 = vmatpush1.msra.mxu0 %v122
    %162 = vmatprep.subr.mxu0 %v121
    %163 = vmatpush1.msra.mxu0 %v120
    %164 = vmatprep.subr.mxu0 %v119
    %165 = vmatpush1.msra.mxu0 %v118
    %166 = vmatprep.subr.mxu0 %v117
    %167 = vmatpush1.msra.mxu0 %v116
    %168 = vmatprep.subr.mxu0 %v115
    %169 = vmatpush1.msra.mxu0 %v114
    %170 = vmatprep.subr.mxu0 %v113
    %171 = vmatpush1.msra.mxu0 %v112
    %172 = vmatprep.subr.mxu0 %v111
    %173 = vmatpush1.msra.mxu0 %v110
    %174 = vmatprep.subr.mxu0 %v109
    %175 = vmatpush1.msra.mxu0 %v108
    %176 = vmatprep.subr.mxu0 %v107
    %177 = vmatpush1.msra.mxu0 %v106
    %178 = vmatprep.subr.mxu0 %v105
    %179 = vmatpush1.msra.mxu0 %v104
    %180 = vmatprep.subr.mxu0 0.0
    %181 = vmatpush2.msra.mxu0 0.0
    %182 = vmatprep.subr.mxu0 0.0
    %183 = vmatpush2.msra.mxu0 0.0
    %184 = vmatprep.subr.mxu0 0.0
    %185 = vmatpush2.msra.mxu0 0.0
    %186 = vmatprep.subr.mxu0 0.0
    %187 = vmatpush2.msra.mxu0 0.0
    %188 = vmatprep.subr.mxu0 0.0
    %189 = vmatpush2.msra.mxu0 0.0
    %190 = vmatprep.subr.mxu0 0.0
    %191 = vmatpush2.msra.mxu0 0.0
    %192 = vmatprep.subr.mxu0 0.0
    %193 = vmatpush2.msra.mxu0 0.0
    %194 = vmatprep.subr.mxu0 0.0
    %195 = vmatpush2.msra.mxu0 0.0
    %196 = vmatprep.subr.mxu0 0.0
    %197 = vmatpush2.msra.mxu0 0.0
    %198 = vmatprep.subr.mxu0 0.0
    %199 = vmatpush2.msra.mxu0 0.0
    %200 = vmatprep.subr.mxu0 0.0
    %201 = vmatpush2.msra.mxu0 0.0
    %202 = vmatprep.subr.mxu0 0.0
    %203 = vmatpush2.msra.mxu0 0.0
    %204 = vmatprep.subr.mxu0 0.0
    %205 = vmatpush2.msra.mxu0 0.0
    %206 = vmatprep.subr.mxu0 0.0
    %207 = vmatpush2.msra.mxu0 0.0
    %208 = vmatprep.subr.mxu0 0.0
    %209 = vmatpush2.msra.mxu0 0.0
    %210 = vmatprep.subr.mxu0 0.0
    %211 = vmatpush2.msra.mxu0 0.0
    %212 = vmatprep.mubr.f32.mxu0 0.0
    %213 = vmatmul.mubr.f32.gmra.mxu0 %v103
    %v214 = vpop.f32.mrf.mxu0
    %v215 = vadd.f32 %v141, %v214
    %v216 = vpop.f32.mrf.mxu0
    %v217 = vadd.f32 %v145, %v216
    %218 = vdwg.mxu0
    %v219 = vmul.f32 %v215, 0.5
    %v220 = vmul.f32 %v217, 0.5
    %v221 = vmul.f32 %v215, 0.70710677
    %v222 = vmul.f32 %v217, 0.70710677
    %vm223 = vcmp.ge.f32.partialorder %v221, 0.0
    %vm224 = vcmp.ge.f32.partialorder %v222, 0.0
    %v225 = vsel %vm223, 1.0, -1.0
    %v226 = vsel %vm224, 1.0, -1.0
    %v227 = vand.u32 2147483647, %v221
    %v228 = vand.u32 2147483647, %v222
    %v229 = vmul.f32 %v227, 0.3275911
    %v230 = vmul.f32 %v228, 0.3275911
    %v231 = vadd.f32 %v229, 1.0
    %v232 = vadd.f32 %v230, 1.0
    %v233 = vrcp.pop %v231
    %v234 = vrcp.pop %v232
    %v235 = vmul.f32 %v233, 1.0614054
    %v236 = vmul.f32 %v234, 1.0614054
    %v237 = vadd.f32 %v235, -1.4531521
    %v238 = vadd.f32 %v236, -1.4531521
    %v239 = vmul.f32 %v237, %v233
    %v240 = vmul.f32 %v238, %v234
    %v241 = vadd.f32 %v239, 1.4214138
    %v242 = vadd.f32 %v240, 1.4214138
    %v243 = vmul.f32 %v241, %v233
    %v244 = vmul.f32 %v242, %v234
    %v245 = vadd.f32 %v243, -0.28449672
    %v246 = vadd.f32 %v244, -0.28449672
    %v247 = vmul.f32 %v245, %v233
    %v248 = vmul.f32 %v246, %v234
    %v249 = vadd.f32 %v247, 0.2548296
    %v250 = vadd.f32 %v248, 0.2548296
    %v251 = vmul.f32 %v249, %v233
    %v252 = vmul.f32 %v250, %v234
    %v253 = vsub.f32 0.0, %v227
    %v254 = vsub.f32 0.0, %v228
    %v255 = vmul.f32 %v253, %v227
    %v256 = vmul.f32 %v254, %v228
    %v257 = vmul.f32 %v255, 1.442695
    %v258 = vpow.pop %v257
    %v259 = vmul.f32 %v256, 1.442695
    %v260 = vpow.pop %v259
    %v261 = vmul.f32 %v251, %v258
    %v262 = vmul.f32 %v252, %v260
    %v263 = vsub.f32 1.0, %v261
    %v264 = vsub.f32 1.0, %v262
    %v265 = vmul.f32 %v225, %v263
    %v266 = vmul.f32 %v226, %v264
    %v267 = vadd.f32 %v265, 1.0
    %v268 = vadd.f32 %v266, 1.0
    %v269 = vmul.f32 %v219, %v267
    %v270 = vmul.f32 %v220, %v268
    %v271 = vld [vmem:[#allocation8] sm:$0xff]
    %v272 = vld [vmem:[#allocation8 + $0x8] sm:$0xff]
    %v273 = vld [vmem:[#allocation8 + $0x10] sm:$0xff]
    %v274 = vld [vmem:[#allocation8 + $0x18] sm:$0xff]
    %v275 = vld [vmem:[#allocation8 + $0x20] sm:$0xff]
    %v276 = vld [vmem:[#allocation8 + $0x28] sm:$0xff]
    %v277 = vld [vmem:[#allocation8 + $0x30] sm:$0xff]
    %v278 = vld [vmem:[#allocation8 + $0x38] sm:$0xff]
    %v279 = vld [vmem:[#allocation8 + $0x40] sm:$0xff]
    %v280 = vld [vmem:[#allocation8 + $0x48] sm:$0xff]
    %v281 = vld [vmem:[#allocation8 + $0x50] sm:$0xff]
    %v282 = vld [vmem:[#allocation8 + $0x58] sm:$0xff]
    %v283 = vld [vmem:[#allocation8 + $0x60] sm:$0xff]
    %v284 = vld [vmem:[#allocation8 + $0x68] sm:$0xff]
    %v285 = vld [vmem:[#allocation8 + $0x70] sm:$0xff]
    %v286 = vld [vmem:[#allocation8 + $0x78] sm:$0xff]
    %v287 = vld [vmem:[#allocation8 + $0x80] sm:$0xff]
    %v288 = vld [vmem:[#allocation8 + $0x88] sm:$0xff]
    %v289 = vld [vmem:[#allocation8 + $0x90] sm:$0xff]
    %v290 = vld [vmem:[#allocation8 + $0x98] sm:$0xff]
    %v291 = vld [vmem:[#allocation8 + $0xa0] sm:$0xff]
    %v292 = vld [vmem:[#allocation8 + $0xa8] sm:$0xff]
    %v293 = vld [vmem:[#allocation8 + $0xb0] sm:$0xff]
    %v294 = vld [vmem:[#allocation8 + $0xb8] sm:$0xff]
    %v295 = vld [vmem:[#allocation8 + $0xc0] sm:$0xff]
    %v296 = vld [vmem:[#allocation8 + $0xc8] sm:$0xff]
    %v297 = vld [vmem:[#allocation8 + $0xd0] sm:$0xff]
    %v298 = vld [vmem:[#allocation8 + $0xd8] sm:$0xff]
    %v299 = vld [vmem:[#allocation8 + $0xe0] sm:$0xff]
    %v300 = vld [vmem:[#allocation8 + $0xe8] sm:$0xff]
    %v301 = vld [vmem:[#allocation8 + $0xf0] sm:$0xff]
    %v302 = vld [vmem:[#allocation8 + $0xf8] sm:$0xff]
    %v303 = vld [vmem:[#allocation10] sm:$0x1]
    %v304 = vlaneseq
    %v305 = vshrl.u32 %v304, 7
    %v306 = vsub.s32 0, %v305
    %v307 = vrot.slane %v303, %v306
    %308 = vmatprep.subr.mxu0 0.0
    %309 = vmatpush1.msra.mxu0 %v286
    %310 = vmatprep.subr.mxu0 0.0
    %311 = vmatpush1.msra.mxu0 %v285
    %312 = vmatprep.subr.mxu0 0.0
    %313 = vmatpush1.msra.mxu0 %v284
    %314 = vmatprep.subr.mxu0 0.0
    %315 = vmatpush1.msra.mxu0 %v283
    %316 = vmatprep.subr.mxu0 0.0
    %317 = vmatpush1.msra.mxu0 %v282
    %318 = vmatprep.subr.mxu0 0.0
    %319 = vmatpush1.msra.mxu0 %v281
    %320 = vmatprep.subr.mxu0 0.0
    %321 = vmatpush1.msra.mxu0 %v280
    %322 = vmatprep.subr.mxu0 0.0
    %323 = vmatpush1.msra.mxu0 %v279
    %324 = vmatprep.subr.mxu0 0.0
    %325 = vmatpush1.msra.mxu0 %v278
    %326 = vmatprep.subr.mxu0 0.0
    %327 = vmatpush1.msra.mxu0 %v277
    %328 = vmatprep.subr.mxu0 0.0
    %329 = vmatpush1.msra.mxu0 %v276
    %330 = vmatprep.subr.mxu0 0.0
    %331 = vmatpush1.msra.mxu0 %v275
    %332 = vmatprep.subr.mxu0 0.0
    %333 = vmatpush1.msra.mxu0 %v274
    %334 = vmatprep.subr.mxu0 0.0
    %335 = vmatpush1.msra.mxu0 %v273
    %336 = vmatprep.subr.mxu0 0.0
    %337 = vmatpush1.msra.mxu0 %v272
    %338 = vmatprep.subr.mxu0 0.0
    %339 = vmatpush1.msra.mxu0 %v271
    %340 = vmatprep.subr.mxu0 0.0
    %341 = vmatpush2.msra.mxu0 %v302
    %342 = vmatprep.subr.mxu0 0.0
    %343 = vmatpush2.msra.mxu0 %v301
    %344 = vmatprep.subr.mxu0 0.0
    %345 = vmatpush2.msra.mxu0 %v300
    %346 = vmatprep.subr.mxu0 0.0
    %347 = vmatpush2.msra.mxu0 %v299
    %348 = vmatprep.subr.mxu0 0.0
    %349 = vmatpush2.msra.mxu0 %v298
    %350 = vmatprep.subr.mxu0 0.0
    %351 = vmatpush2.msra.mxu0 %v297
    %352 = vmatprep.subr.mxu0 0.0
    %353 = vmatpush2.msra.mxu0 %v296
    %354 = vmatprep.subr.mxu0 0.0
    %355 = vmatpush2.msra.mxu0 %v295
    %356 = vmatprep.subr.mxu0 0.0
    %357 = vmatpush2.msra.mxu0 %v294
    %358 = vmatprep.subr.mxu0 0.0
    %359 = vmatpush2.msra.mxu0 %v293
    %360 = vmatprep.subr.mxu0 0.0
    %361 = vmatpush2.msra.mxu0 %v292
    %362 = vmatprep.subr.mxu0 0.0
    %363 = vmatpush2.msra.mxu0 %v291
    %364 = vmatprep.subr.mxu0 0.0
    %365 = vmatpush2.msra.mxu0 %v290
    %366 = vmatprep.subr.mxu0 0.0
    %367 = vmatpush2.msra.mxu0 %v289
    %368 = vmatprep.subr.mxu0 0.0
    %369 = vmatpush2.msra.mxu0 %v288
    %370 = vmatprep.subr.mxu0 0.0
    %371 = vmatpush2.msra.mxu0 %v287
    %372 = vmatprep.mubr.f32.mxu0 %v270
    %373 = vmatmul.mubr.f32.gmra.mxu0 %v269
    %v374 = vpop.f32.mrf.mxu0
    %v375 = vadd.f32 %v307, %v374
    %v376 = vpop.f32.mrf.mxu0
    %377 = vdwg.mxu0
    %v378 = vmul.f32 %v375, 0.5
    %v379 = vmul.f32 %v375, 0.70710677
    %vm380 = vcmp.ge.f32.partialorder %v379, 0.0
    %v381 = vsel %vm380, 1.0, -1.0
    %v382 = vand.u32 2147483647, %v379
    %v383 = vmul.f32 %v382, 0.3275911
    %v384 = vadd.f32 %v383, 1.0
    %v385 = vrcp.pop %v384
    %v386 = vmul.f32 %v385, 1.0614054
    %v387 = vadd.f32 %v386, -1.4531521
    %v388 = vmul.f32 %v387, %v385
    %v389 = vadd.f32 %v388, 1.4214138
    %v390 = vmul.f32 %v389, %v385
    %v391 = vadd.f32 %v390, -0.28449672
    %v392 = vmul.f32 %v391, %v385
    %v393 = vadd.f32 %v392, 0.2548296
    %v394 = vmul.f32 %v393, %v385
    %v395 = vsub.f32 0.0, %v382
    %v396 = vmul.f32 %v395, %v382
    %v397 = vmul.f32 %v396, 1.442695
    %v398 = vpow.pop %v397
    %v399 = vmul.f32 %v394, %v398
    %v400 = vsub.f32 1.0, %v399
    %v401 = vmul.f32 %v381, %v400
    %v402 = vadd.f32 %v401, 1.0
    %v403 = vmul.f32 %v378, %v402
    %v404 = vld [vmem:[#allocation11] sm:$0xff]
    %v405 = vld [vmem:[#allocation11 + $0x8] sm:$0xff]
    %v406 = vld [vmem:[#allocation11 + $0x10] sm:$0xff]
    %v407 = vld [vmem:[#allocation11 + $0x18] sm:$0xff]
    %v408 = vld [vmem:[#allocation11 + $0x20] sm:$0xff]
    %v409 = vld [vmem:[#allocation11 + $0x28] sm:$0xff]
    %v410 = vld [vmem:[#allocation11 + $0x30] sm:$0xff]
    %v411 = vld [vmem:[#allocation11 + $0x38] sm:$0xff]
    %v412 = vld [vmem:[#allocation11 + $0x40] sm:$0xff]
    %v413 = vld [vmem:[#allocation11 + $0x48] sm:$0xff]
    %v414 = vld [vmem:[#allocation11 + $0x50] sm:$0xff]
    %v415 = vld [vmem:[#allocation11 + $0x58] sm:$0xff]
    %v416 = vld [vmem:[#allocation11 + $0x60] sm:$0xff]
    %v417 = vld [vmem:[#allocation11 + $0x68] sm:$0xff]
    %v418 = vld [vmem:[#allocation11 + $0x70] sm:$0xff]
    %v419 = vld [vmem:[#allocation11 + $0x78] sm:$0xff]
    %v420 = vld [vmem:[#allocation2 + $0x8] sm:$0xff]
    %s421 = scalar_lea.vmem [#allocation5], 256
    %v422 = vld [vmem:[%s421] sm:$0xff]
    %v423 = vld [vmem:[%s421 + $0x8] sm:$0xff]
    %v424 = vld [vmem:[%s421 + $0x10] sm:$0xff]
    %v425 = vld [vmem:[%s421 + $0x18] sm:$0xff]
    %v426 = vld [vmem:[%s421 + $0x20] sm:$0xff]
    %v427 = vld [vmem:[%s421 + $0x28] sm:$0xff]
    %v428 = vld [vmem:[%s421 + $0x30] sm:$0xff]
    %v429 = vld [vmem:[%s421 + $0x38] sm:$0xff]
    %v430 = vld [vmem:[%s421 + $0x40] sm:$0xff]
    %v431 = vld [vmem:[%s421 + $0x48] sm:$0xff]
    %v432 = vld [vmem:[%s421 + $0x50] sm:$0xff]
    %v433 = vld [vmem:[%s421 + $0x58] sm:$0xff]
    %v434 = vld [vmem:[%s421 + $0x60] sm:$0xff]
    %v435 = vld [vmem:[%s421 + $0x68] sm:$0xff]
    %v436 = vld [vmem:[%s421 + $0x70] sm:$0xff]
    %v437 = vld [vmem:[%s421 + $0x78] sm:$0xff]
    %v438 = vld [vmem:[%s421 + $0x80] sm:$0xff]
    %v439 = vld [vmem:[%s421 + $0x88] sm:$0xff]
    %v440 = vld [vmem:[%s421 + $0x90] sm:$0xff]
    %v441 = vld [vmem:[%s421 + $0x98] sm:$0xff]
    %v442 = vld [vmem:[%s421 + $0xa0] sm:$0xff]
    %v443 = vld [vmem:[%s421 + $0xa8] sm:$0xff]
    %v444 = vld [vmem:[%s421 + $0xb0] sm:$0xff]
    %v445 = vld [vmem:[%s421 + $0xb8] sm:$0xff]
    %v446 = vld [vmem:[%s421 + $0xc0] sm:$0xff]
    %v447 = vld [vmem:[%s421 + $0xc8] sm:$0xff]
    %v448 = vld [vmem:[%s421 + $0xd0] sm:$0xff]
    %v449 = vld [vmem:[%s421 + $0xd8] sm:$0xff]
    %v450 = vld [vmem:[%s421 + $0xe0] sm:$0xff]
    %v451 = vld [vmem:[%s421 + $0xe8] sm:$0xff]
    %v452 = vld [vmem:[%s421 + $0xf0] sm:$0xff]
    %v453 = vld [vmem:[%s421 + $0xf8] sm:$0xff]
    %s454 = scalar_lea.vmem [#allocation7], 1
    %v455 = vld [vmem:[%s454] ss:$8 sm:$0x3]
    %v457 = vlaneseq
    %v458 = vshrl.u32 %v457, 7
    %v459 = vsub.s32 0, %v458
    %v460 = vrot.slane %v455, %v459
    %v461 = vlaneseq
    %v462 = vshrl.u32 %v461, 7
    %v463 = vsub.s32 1, %v462
    %v464 = vrot.slane %v455, %v463
    %467 = vmatprep.subr.mxu0 %v453
    %468 = vmatpush1.msra.mxu0 %v452
    %469 = vmatprep.subr.mxu0 %v451
    %470 = vmatpush1.msra.mxu0 %v450
    %471 = vmatprep.subr.mxu0 %v449
    %472 = vmatpush1.msra.mxu0 %v448
    %473 = vmatprep.subr.mxu0 %v447
    %474 = vmatpush1.msra.mxu0 %v446
    %475 = vmatprep.subr.mxu0 %v445
    %476 = vmatpush1.msra.mxu0 %v444
    %477 = vmatprep.subr.mxu0 %v443
    %478 = vmatpush1.msra.mxu0 %v442
    %479 = vmatprep.subr.mxu0 %v441
    %480 = vmatpush1.msra.mxu0 %v440
    %481 = vmatprep.subr.mxu0 %v439
    %482 = vmatpush1.msra.mxu0 %v438
    %483 = vmatprep.subr.mxu0 %v437
    %484 = vmatpush1.msra.mxu0 %v436
    %485 = vmatprep.subr.mxu0 %v435
    %486 = vmatpush1.msra.mxu0 %v434
    %487 = vmatprep.subr.mxu0 %v433
    %488 = vmatpush1.msra.mxu0 %v432
    %489 = vmatprep.subr.mxu0 %v431
    %490 = vmatpush1.msra.mxu0 %v430
    %491 = vmatprep.subr.mxu0 %v429
    %492 = vmatpush1.msra.mxu0 %v428
    %493 = vmatprep.subr.mxu0 %v427
    %494 = vmatpush1.msra.mxu0 %v426
    %495 = vmatprep.subr.mxu0 %v425
    %496 = vmatpush1.msra.mxu0 %v424
    %497 = vmatprep.subr.mxu0 %v423
    %498 = vmatpush1.msra.mxu0 %v422
    %499 = vmatprep.subr.mxu0 0.0
    %500 = vmatpush2.msra.mxu0 0.0
    %501 = vmatprep.subr.mxu0 0.0
    %502 = vmatpush2.msra.mxu0 0.0
    %503 = vmatprep.subr.mxu0 0.0
    %504 = vmatpush2.msra.mxu0 0.0
    %505 = vmatprep.subr.mxu0 0.0
    %506 = vmatpush2.msra.mxu0 0.0
    %507 = vmatprep.subr.mxu0 0.0
    %508 = vmatpush2.msra.mxu0 0.0
    %509 = vmatprep.subr.mxu0 0.0
    %510 = vmatpush2.msra.mxu0 0.0
    %511 = vmatprep.subr.mxu0 0.0
    %512 = vmatpush2.msra.mxu0 0.0
    %513 = vmatprep.subr.mxu0 0.0
    %514 = vmatpush2.msra.mxu0 0.0
    %515 = vmatprep.subr.mxu0 0.0
    %516 = vmatpush2.msra.mxu0 0.0
    %517 = vmatprep.subr.mxu0 0.0
    %518 = vmatpush2.msra.mxu0 0.0
    %519 = vmatprep.subr.mxu0 0.0
    %520 = vmatpush2.msra.mxu0 0.0
    %521 = vmatprep.subr.mxu0 0.0
    %522 = vmatpush2.msra.mxu0 0.0
    %523 = vmatprep.subr.mxu0 0.0
    %524 = vmatpush2.msra.mxu0 0.0
    %525 = vmatprep.subr.mxu0 0.0
    %526 = vmatpush2.msra.mxu0 0.0
    %527 = vmatprep.subr.mxu0 0.0
    %528 = vmatpush2.msra.mxu0 0.0
    %529 = vmatprep.subr.mxu0 0.0
    %530 = vmatpush2.msra.mxu0 0.0
    %531 = vmatprep.mubr.f32.mxu0 0.0
    %532 = vmatmul.mubr.f32.gmra.mxu0 %v420
    %v533 = vpop.f32.mrf.mxu0
    %v534 = vadd.f32 %v460, %v533
    %v535 = vpop.f32.mrf.mxu0
    %v536 = vadd.f32 %v464, %v535
    %537 = vdwg.mxu0
    %v538 = vmul.f32 %v534, 0.5
    %v539 = vmul.f32 %v536, 0.5
    %v540 = vmul.f32 %v534, 0.70710677
    %v541 = vmul.f32 %v536, 0.70710677
    %vm542 = vcmp.ge.f32.partialorder %v540, 0.0
    %vm543 = vcmp.ge.f32.partialorder %v541, 0.0
    %v544 = vsel %vm542, 1.0, -1.0
    %v545 = vsel %vm543, 1.0, -1.0
    %v546 = vand.u32 2147483647, %v540
    %v547 = vand.u32 2147483647, %v541
    %v548 = vmul.f32 %v546, 0.3275911
    %v549 = vmul.f32 %v547, 0.3275911
    %v550 = vadd.f32 %v548, 1.0
    %v551 = vadd.f32 %v549, 1.0
    %v552 = vrcp.pop %v550
    %v553 = vrcp.pop %v551
    %v554 = vmul.f32 %v552, 1.0614054
    %v555 = vmul.f32 %v553, 1.0614054
    %v556 = vadd.f32 %v554, -1.4531521
    %v557 = vadd.f32 %v555, -1.4531521
    %v558 = vmul.f32 %v556, %v552
    %v559 = vmul.f32 %v557, %v553
    %v560 = vadd.f32 %v558, 1.4214138
    %v561 = vadd.f32 %v559, 1.4214138
    %v562 = vmul.f32 %v560, %v552
    %v563 = vmul.f32 %v561, %v553
    %v564 = vadd.f32 %v562, -0.28449672
    %v565 = vadd.f32 %v563, -0.28449672
    %v566 = vmul.f32 %v564, %v552
    %v567 = vmul.f32 %v565, %v553
    %v568 = vadd.f32 %v566, 0.2548296
    %v569 = vadd.f32 %v567, 0.2548296
    %v570 = vmul.f32 %v568, %v552
    %v571 = vmul.f32 %v569, %v553
    %v572 = vsub.f32 0.0, %v546
    %v573 = vsub.f32 0.0, %v547
    %v574 = vmul.f32 %v572, %v546
    %v575 = vmul.f32 %v573, %v547
    %v576 = vmul.f32 %v574, 1.442695
    %v577 = vpow.pop %v576
    %v578 = vmul.f32 %v575, 1.442695
    %v579 = vpow.pop %v578
    %v580 = vmul.f32 %v570, %v577
    %v581 = vmul.f32 %v571, %v579
    %v582 = vsub.f32 1.0, %v580
    %v583 = vsub.f32 1.0, %v581
    %v584 = vmul.f32 %v544, %v582
    %v585 = vmul.f32 %v545, %v583
    %v586 = vadd.f32 %v584, 1.0
    %v587 = vadd.f32 %v585, 1.0
    %v588 = vmul.f32 %v538, %v586
    %v589 = vmul.f32 %v539, %v587
    %s590 = scalar_lea.vmem [#allocation8], 256
    %v591 = vld [vmem:[%s590] sm:$0xff]
    %v592 = vld [vmem:[%s590 + $0x8] sm:$0xff]
    %v593 = vld [vmem:[%s590 + $0x10] sm:$0xff]
    %v594 = vld [vmem:[%s590 + $0x18] sm:$0xff]
    %v595 = vld [vmem:[%s590 + $0x20] sm:$0xff]
    %v596 = vld [vmem:[%s590 + $0x28] sm:$0xff]
    %v597 = vld [vmem:[%s590 + $0x30] sm:$0xff]
    %v598 = vld [vmem:[%s590 + $0x38] sm:$0xff]
    %v599 = vld [vmem:[%s590 + $0x40] sm:$0xff]
    %v600 = vld [vmem:[%s590 + $0x48] sm:$0xff]
    %v601 = vld [vmem:[%s590 + $0x50] sm:$0xff]
    %v602 = vld [vmem:[%s590 + $0x58] sm:$0xff]
    %v603 = vld [vmem:[%s590 + $0x60] sm:$0xff]
    %v604 = vld [vmem:[%s590 + $0x68] sm:$0xff]
    %v605 = vld [vmem:[%s590 + $0x70] sm:$0xff]
    %v606 = vld [vmem:[%s590 + $0x78] sm:$0xff]
    %v607 = vld [vmem:[%s590 + $0x80] sm:$0xff]
    %v608 = vld [vmem:[%s590 + $0x88] sm:$0xff]
    %v609 = vld [vmem:[%s590 + $0x90] sm:$0xff]
    %v610 = vld [vmem:[%s590 + $0x98] sm:$0xff]
    %v611 = vld [vmem:[%s590 + $0xa0] sm:$0xff]
    %v612 = vld [vmem:[%s590 + $0xa8] sm:$0xff]
    %v613 = vld [vmem:[%s590 + $0xb0] sm:$0xff]
    %v614 = vld [vmem:[%s590 + $0xb8] sm:$0xff]
    %v615 = vld [vmem:[%s590 + $0xc0] sm:$0xff]
    %v616 = vld [vmem:[%s590 + $0xc8] sm:$0xff]
    %v617 = vld [vmem:[%s590 + $0xd0] sm:$0xff]
    %v618 = vld [vmem:[%s590 + $0xd8] sm:$0xff]
    %v619 = vld [vmem:[%s590 + $0xe0] sm:$0xff]
    %v620 = vld [vmem:[%s590 + $0xe8] sm:$0xff]
    %v621 = vld [vmem:[%s590 + $0xf0] sm:$0xff]
    %v622 = vld [vmem:[%s590 + $0xf8] sm:$0xff]
    %v623 = vld [vmem:[#allocation10 + $0x1] sm:$0x1]
    %v624 = vlaneseq
    %v625 = vshrl.u32 %v624, 7
    %v626 = vsub.s32 0, %v625
    %v627 = vrot.slane %v623, %v626
    %628 = vmatprep.subr.mxu0 0.0
    %629 = vmatpush1.msra.mxu0 %v606
    %630 = vmatprep.subr.mxu0 0.0
    %631 = vmatpush1.msra.mxu0 %v605
    %632 = vmatprep.subr.mxu0 0.0
    %633 = vmatpush1.msra.mxu0 %v604
    %634 = vmatprep.subr.mxu0 0.0
    %635 = vmatpush1.msra.mxu0 %v603
    %636 = vmatprep.subr.mxu0 0.0
    %637 = vmatpush1.msra.mxu0 %v602
    %638 = vmatprep.subr.mxu0 0.0
    %639 = vmatpush1.msra.mxu0 %v601
    %640 = vmatprep.subr.mxu0 0.0
    %641 = vmatpush1.msra.mxu0 %v600
    %642 = vmatprep.subr.mxu0 0.0
    %643 = vmatpush1.msra.mxu0 %v599
    %644 = vmatprep.subr.mxu0 0.0
    %645 = vmatpush1.msra.mxu0 %v598
    %646 = vmatprep.subr.mxu0 0.0
    %647 = vmatpush1.msra.mxu0 %v597
    %648 = vmatprep.subr.mxu0 0.0
    %649 = vmatpush1.msra.mxu0 %v596
    %650 = vmatprep.subr.mxu0 0.0
    %651 = vmatpush1.msra.mxu0 %v595
    %652 = vmatprep.subr.mxu0 0.0
    %653 = vmatpush1.msra.mxu0 %v594
    %654 = vmatprep.subr.mxu0 0.0
    %655 = vmatpush1.msra.mxu0 %v593
    %656 = vmatprep.subr.mxu0 0.0
    %657 = vmatpush1.msra.mxu0 %v592
    %658 = vmatprep.subr.mxu0 0.0
    %659 = vmatpush1.msra.mxu0 %v591
    %660 = vmatprep.subr.mxu0 0.0
    %661 = vmatpush2.msra.mxu0 %v622
    %662 = vmatprep.subr.mxu0 0.0
    %663 = vmatpush2.msra.mxu0 %v621
    %664 = vmatprep.subr.mxu0 0.0
    %665 = vmatpush2.msra.mxu0 %v620
    %666 = vmatprep.subr.mxu0 0.0
    %667 = vmatpush2.msra.mxu0 %v619
    %668 = vmatprep.subr.mxu0 0.0
    %669 = vmatpush2.msra.mxu0 %v618
    %670 = vmatprep.subr.mxu0 0.0
    %671 = vmatpush2.msra.mxu0 %v617
    %672 = vmatprep.subr.mxu0 0.0
    %673 = vmatpush2.msra.mxu0 %v616
    %674 = vmatprep.subr.mxu0 0.0
    %675 = vmatpush2.msra.mxu0 %v615
    %676 = vmatprep.subr.mxu0 0.0
    %677 = vmatpush2.msra.mxu0 %v614
    %678 = vmatprep.subr.mxu0 0.0
    %679 = vmatpush2.msra.mxu0 %v613
    %680 = vmatprep.subr.mxu0 0.0
    %681 = vmatpush2.msra.mxu0 %v612
    %682 = vmatprep.subr.mxu0 0.0
    %683 = vmatpush2.msra.mxu0 %v611
    %684 = vmatprep.subr.mxu0 0.0
    %685 = vmatpush2.msra.mxu0 %v610
    %686 = vmatprep.subr.mxu0 0.0
    %687 = vmatpush2.msra.mxu0 %v609
    %688 = vmatprep.subr.mxu0 0.0
    %689 = vmatpush2.msra.mxu0 %v608
    %690 = vmatprep.subr.mxu0 0.0
    %691 = vmatpush2.msra.mxu0 %v607
    %692 = vmatprep.mubr.f32.mxu0 %v589
    %693 = vmatmul.mubr.f32.gmra.mxu0 %v588
    %v694 = vpop.f32.mrf.mxu0
    %v695 = vadd.f32 %v627, %v694
    %v696 = vpop.f32.mrf.mxu0
    %697 = vdwg.mxu0
    %v698 = vmul.f32 %v695, 0.5
    %v699 = vmul.f32 %v695, 0.70710677
    %vm700 = vcmp.ge.f32.partialorder %v699, 0.0
    %v701 = vsel %vm700, 1.0, -1.0
    %v702 = vand.u32 2147483647, %v699
    %v703 = vmul.f32 %v702, 0.3275911
    %v704 = vadd.f32 %v703, 1.0
    %v705 = vrcp.pop %v704
    %v706 = vmul.f32 %v705, 1.0614054
    %v707 = vadd.f32 %v706, -1.4531521
    %v708 = vmul.f32 %v707, %v705
    %v709 = vadd.f32 %v708, 1.4214138
    %v710 = vmul.f32 %v709, %v705
    %v711 = vadd.f32 %v710, -0.28449672
    %v712 = vmul.f32 %v711, %v705
    %v713 = vadd.f32 %v712, 0.2548296
    %v714 = vmul.f32 %v713, %v705
    %v715 = vsub.f32 0.0, %v702
    %v716 = vmul.f32 %v715, %v702
    %v717 = vmul.f32 %v716, 1.442695
    %v718 = vpow.pop %v717
    %v719 = vmul.f32 %v714, %v718
    %v720 = vsub.f32 1.0, %v719
    %v721 = vmul.f32 %v701, %v720
    %v722 = vadd.f32 %v721, 1.0
    %v723 = vmul.f32 %v698, %v722
    %s724 = scalar_lea.vmem [#allocation11], 128
    %v725 = vld [vmem:[%s724] sm:$0xff]
    %v726 = vld [vmem:[%s724 + $0x8] sm:$0xff]
    %v727 = vld [vmem:[%s724 + $0x10] sm:$0xff]
    %v728 = vld [vmem:[%s724 + $0x18] sm:$0xff]
    %v729 = vld [vmem:[%s724 + $0x20] sm:$0xff]
    %v730 = vld [vmem:[%s724 + $0x28] sm:$0xff]
    %v731 = vld [vmem:[%s724 + $0x30] sm:$0xff]
    %v732 = vld [vmem:[%s724 + $0x38] sm:$0xff]
    %v733 = vld [vmem:[%s724 + $0x40] sm:$0xff]
    %v734 = vld [vmem:[%s724 + $0x48] sm:$0xff]
    %v735 = vld [vmem:[%s724 + $0x50] sm:$0xff]
    %v736 = vld [vmem:[%s724 + $0x58] sm:$0xff]
    %v737 = vld [vmem:[%s724 + $0x60] sm:$0xff]
    %v738 = vld [vmem:[%s724 + $0x68] sm:$0xff]
    %v739 = vld [vmem:[%s724 + $0x70] sm:$0xff]
    %v740 = vld [vmem:[%s724 + $0x78] sm:$0xff]
    %741 = vmatprep.subr.mxu0 0.0
    %742 = vmatpush1.msra.mxu0 %v740
    %743 = vmatprep.subr.mxu0 0.0
    %744 = vmatpush1.msra.mxu0 %v739
    %745 = vmatprep.subr.mxu0 0.0
    %746 = vmatpush1.msra.mxu0 %v738
    %747 = vmatprep.subr.mxu0 0.0
    %748 = vmatpush1.msra.mxu0 %v737
    %749 = vmatprep.subr.mxu0 0.0
    %750 = vmatpush1.msra.mxu0 %v736
    %751 = vmatprep.subr.mxu0 0.0
    %752 = vmatpush1.msra.mxu0 %v735
    %753 = vmatprep.subr.mxu0 0.0
    %754 = vmatpush1.msra.mxu0 %v734
    %755 = vmatprep.subr.mxu0 0.0
    %756 = vmatpush1.msra.mxu0 %v733
    %757 = vmatprep.subr.mxu0 0.0
    %758 = vmatpush1.msra.mxu0 %v732
    %759 = vmatprep.subr.mxu0 0.0
    %760 = vmatpush1.msra.mxu0 %v731
    %761 = vmatprep.subr.mxu0 0.0
    %762 = vmatpush1.msra.mxu0 %v730
    %763 = vmatprep.subr.mxu0 0.0
    %764 = vmatpush1.msra.mxu0 %v729
    %765 = vmatprep.subr.mxu0 0.0
    %766 = vmatpush1.msra.mxu0 %v728
    %767 = vmatprep.subr.mxu0 0.0
    %768 = vmatpush1.msra.mxu0 %v727
    %769 = vmatprep.subr.mxu0 0.0
    %770 = vmatpush1.msra.mxu0 %v726
    %771 = vmatprep.subr.mxu0 0.0
    %772 = vmatpush1.msra.mxu0 %v725
    %773 = vmatprep.subr.mxu0 0.0
    %774 = vmatpush2.msra.mxu0 0.0
    %775 = vmatprep.subr.mxu0 0.0
    %776 = vmatpush2.msra.mxu0 0.0
    %777 = vmatprep.subr.mxu0 0.0
    %778 = vmatpush2.msra.mxu0 0.0
    %779 = vmatprep.subr.mxu0 0.0
    %780 = vmatpush2.msra.mxu0 0.0
    %781 = vmatprep.subr.mxu0 0.0
    %782 = vmatpush2.msra.mxu0 0.0
    %783 = vmatprep.subr.mxu0 0.0
    %784 = vmatpush2.msra.mxu0 0.0
    %785 = vmatprep.subr.mxu0 0.0
    %786 = vmatpush2.msra.mxu0 0.0
    %787 = vmatprep.subr.mxu0 0.0
    %788 = vmatpush2.msra.mxu0 0.0
    %789 = vmatprep.subr.mxu0 0.0
    %790 = vmatpush2.msra.mxu0 0.0
    %791 = vmatprep.subr.mxu0 0.0
    %792 = vmatpush2.msra.mxu0 0.0
    %793 = vmatprep.subr.mxu0 0.0
    %794 = vmatpush2.msra.mxu0 0.0
    %795 = vmatprep.subr.mxu0 0.0
    %796 = vmatpush2.msra.mxu0 0.0
    %797 = vmatprep.subr.mxu0 0.0
    %798 = vmatpush2.msra.mxu0 0.0
    %799 = vmatprep.subr.mxu0 0.0
    %800 = vmatpush2.msra.mxu0 0.0
    %801 = vmatprep.subr.mxu0 0.0
    %802 = vmatpush2.msra.mxu0 0.0
    %803 = vmatprep.subr.mxu0 0.0
    %804 = vmatpush2.msra.mxu0 0.0
    %805 = vmatprep.mubr.f32.mxu0 0.0
    %806 = vmatmul.mubr.f32.gmra.mxu0 %v723
    %v807 = vpop.f32.mrf.mxu0
    %v808 = vadd.f32 0.0, %v807
    %v809 = vpop.f32.mrf.mxu0
    %810 = vdwg.mxu0
    %811 = vmatprep.subr.mxu0 0.0
    %812 = vmatpush1.msra.mxu0 %v419
    %813 = vmatprep.subr.mxu0 0.0
    %814 = vmatpush1.msra.mxu0 %v418
    %815 = vmatprep.subr.mxu0 0.0
    %816 = vmatpush1.msra.mxu0 %v417
    %817 = vmatprep.subr.mxu0 0.0
    %818 = vmatpush1.msra.mxu0 %v416
    %819 = vmatprep.subr.mxu0 0.0
    %820 = vmatpush1.msra.mxu0 %v415
    %821 = vmatprep.subr.mxu0 0.0
    %822 = vmatpush1.msra.mxu0 %v414
    %823 = vmatprep.subr.mxu0 0.0
    %824 = vmatpush1.msra.mxu0 %v413
    %825 = vmatprep.subr.mxu0 0.0
    %826 = vmatpush1.msra.mxu0 %v412
    %827 = vmatprep.subr.mxu0 0.0
    %828 = vmatpush1.msra.mxu0 %v411
    %829 = vmatprep.subr.mxu0 0.0
    %830 = vmatpush1.msra.mxu0 %v410
    %831 = vmatprep.subr.mxu0 0.0
    %832 = vmatpush1.msra.mxu0 %v409
    %833 = vmatprep.subr.mxu0 0.0
    %834 = vmatpush1.msra.mxu0 %v408
    %835 = vmatprep.subr.mxu0 0.0
    %836 = vmatpush1.msra.mxu0 %v407
    %837 = vmatprep.subr.mxu0 0.0
    %838 = vmatpush1.msra.mxu0 %v406
    %839 = vmatprep.subr.mxu0 0.0
    %840 = vmatpush1.msra.mxu0 %v405
    %841 = vmatprep.subr.mxu0 0.0
    %842 = vmatpush1.msra.mxu0 %v404
    %843 = vmatprep.subr.mxu0 0.0
    %844 = vmatpush2.msra.mxu0 0.0
    %845 = vmatprep.subr.mxu0 0.0
    %846 = vmatpush2.msra.mxu0 0.0
    %847 = vmatprep.subr.mxu0 0.0
    %848 = vmatpush2.msra.mxu0 0.0
    %849 = vmatprep.subr.mxu0 0.0
    %850 = vmatpush2.msra.mxu0 0.0
    %851 = vmatprep.subr.mxu0 0.0
    %852 = vmatpush2.msra.mxu0 0.0
    %853 = vmatprep.subr.mxu0 0.0
    %854 = vmatpush2.msra.mxu0 0.0
    %855 = vmatprep.subr.mxu0 0.0
    %856 = vmatpush2.msra.mxu0 0.0
    %857 = vmatprep.subr.mxu0 0.0
    %858 = vmatpush2.msra.mxu0 0.0
    %859 = vmatprep.subr.mxu0 0.0
    %860 = vmatpush2.msra.mxu0 0.0
    %861 = vmatprep.subr.mxu0 0.0
    %862 = vmatpush2.msra.mxu0 0.0
    %863 = vmatprep.subr.mxu0 0.0
    %864 = vmatpush2.msra.mxu0 0.0
    %865 = vmatprep.subr.mxu0 0.0
    %866 = vmatpush2.msra.mxu0 0.0
    %867 = vmatprep.subr.mxu0 0.0
    %868 = vmatpush2.msra.mxu0 0.0
    %869 = vmatprep.subr.mxu0 0.0
    %870 = vmatpush2.msra.mxu0 0.0
    %871 = vmatprep.subr.mxu0 0.0
    %872 = vmatpush2.msra.mxu0 0.0
    %873 = vmatprep.subr.mxu0 0.0
    %874 = vmatpush2.msra.mxu0 0.0
    %875 = vmatprep.mubr.f32.mxu0 0.0
    %876 = vmatmul.mubr.f32.gmra.mxu0 %v403
    %v877 = vpop.f32.mrf.mxu0
    %v878 = vadd.f32 %v808, %v877
    %v879 = vpop.f32.mrf.mxu0
    %880 = vdwg.mxu0
    %v881 = vld [vmem:[#allocation2 + $0x10] sm:$0xff]
    %s882 = scalar_lea.vmem [#allocation5], 512
    %v883 = vld [vmem:[%s882] sm:$0xff]
    %v884 = vld [vmem:[%s882 + $0x8] sm:$0xff]
    %v885 = vld [vmem:[%s882 + $0x10] sm:$0xff]
    %v886 = vld [vmem:[%s882 + $0x18] sm:$0xff]
    %v887 = vld [vmem:[%s882 + $0x20] sm:$0xff]
    %v888 = vld [vmem:[%s882 + $0x28] sm:$0xff]
    %v889 = vld [vmem:[%s882 + $0x30] sm:$0xff]
    %v890 = vld [vmem:[%s882 + $0x38] sm:$0xff]
    %v891 = vld [vmem:[%s882 + $0x40] sm:$0xff]
    %v892 = vld [vmem:[%s882 + $0x48] sm:$0xff]
    %v893 = vld [vmem:[%s882 + $0x50] sm:$0xff]
    %v894 = vld [vmem:[%s882 + $0x58] sm:$0xff]
    %v895 = vld [vmem:[%s882 + $0x60] sm:$0xff]
    %v896 = vld [vmem:[%s882 + $0x68] sm:$0xff]
    %v897 = vld [vmem:[%s882 + $0x70] sm:$0xff]
    %v898 = vld [vmem:[%s882 + $0x78] sm:$0xff]
    %v899 = vld [vmem:[%s882 + $0x80] sm:$0xff]
    %v900 = vld [vmem:[%s882 + $0x88] sm:$0xff]
    %v901 = vld [vmem:[%s882 + $0x90] sm:$0xff]
    %v902 = vld [vmem:[%s882 + $0x98] sm:$0xff]
    %v903 = vld [vmem:[%s882 + $0xa0] sm:$0xff]
    %v904 = vld [vmem:[%s882 + $0xa8] sm:$0xff]
    %v905 = vld [vmem:[%s882 + $0xb0] sm:$0xff]
    %v906 = vld [vmem:[%s882 + $0xb8] sm:$0xff]
    %v907 = vld [vmem:[%s882 + $0xc0] sm:$0xff]
    %v908 = vld [vmem:[%s882 + $0xc8] sm:$0xff]
    %v909 = vld [vmem:[%s882 + $0xd0] sm:$0xff]
    %v910 = vld [vmem:[%s882 + $0xd8] sm:$0xff]
    %v911 = vld [vmem:[%s882 + $0xe0] sm:$0xff]
    %v912 = vld [vmem:[%s882 + $0xe8] sm:$0xff]
    %v913 = vld [vmem:[%s882 + $0xf0] sm:$0xff]
    %v914 = vld [vmem:[%s882 + $0xf8] sm:$0xff]
    %s915 = scalar_lea.vmem [#allocation7], 2
    %v916 = vld [vmem:[%s915] ss:$8 sm:$0x3]
    %v918 = vlaneseq
    %v919 = vshrl.u32 %v918, 7
    %v920 = vsub.s32 0, %v919
    %v921 = vrot.slane %v916, %v920
    %v922 = vlaneseq
    %v923 = vshrl.u32 %v922, 7
    %v924 = vsub.s32 1, %v923
    %v925 = vrot.slane %v916, %v924
    %928 = vmatprep.subr.mxu0 %v914
    %929 = vmatpush1.msra.mxu0 %v913
    %930 = vmatprep.subr.mxu0 %v912
    %931 = vmatpush1.msra.mxu0 %v911
    %932 = vmatprep.subr.mxu0 %v910
    %933 = vmatpush1.msra.mxu0 %v909
    %934 = vmatprep.subr.mxu0 %v908
    %935 = vmatpush1.msra.mxu0 %v907
    %936 = vmatprep.subr.mxu0 %v906
    %937 = vmatpush1.msra.mxu0 %v905
    %938 = vmatprep.subr.mxu0 %v904
    %939 = vmatpush1.msra.mxu0 %v903
    %940 = vmatprep.subr.mxu0 %v902
    %941 = vmatpush1.msra.mxu0 %v901
    %942 = vmatprep.subr.mxu0 %v900
    %943 = vmatpush1.msra.mxu0 %v899
    %944 = vmatprep.subr.mxu0 %v898
    %945 = vmatpush1.msra.mxu0 %v897
    %946 = vmatprep.subr.mxu0 %v896
    %947 = vmatpush1.msra.mxu0 %v895
    %948 = vmatprep.subr.mxu0 %v894
    %949 = vmatpush1.msra.mxu0 %v893
    %950 = vmatprep.subr.mxu0 %v892
    %951 = vmatpush1.msra.mxu0 %v891
    %952 = vmatprep.subr.mxu0 %v890
    %953 = vmatpush1.msra.mxu0 %v889
    %954 = vmatprep.subr.mxu0 %v888
    %955 = vmatpush1.msra.mxu0 %v887
    %956 = vmatprep.subr.mxu0 %v886
    %957 = vmatpush1.msra.mxu0 %v885
    %958 = vmatprep.subr.mxu0 %v884
    %959 = vmatpush1.msra.mxu0 %v883
    %960 = vmatprep.subr.mxu0 0.0
    %961 = vmatpush2.msra.mxu0 0.0
    %962 = vmatprep.subr.mxu0 0.0
    %963 = vmatpush2.msra.mxu0 0.0
    %964 = vmatprep.subr.mxu0 0.0
    %965 = vmatpush2.msra.mxu0 0.0
    %966 = vmatprep.subr.mxu0 0.0
    %967 = vmatpush2.msra.mxu0 0.0
    %968 = vmatprep.subr.mxu0 0.0
    %969 = vmatpush2.msra.mxu0 0.0
    %970 = vmatprep.subr.mxu0 0.0
    %971 = vmatpush2.msra.mxu0 0.0
    %972 = vmatprep.subr.mxu0 0.0
    %973 = vmatpush2.msra.mxu0 0.0
    %974 = vmatprep.subr.mxu0 0.0
    %975 = vmatpush2.msra.mxu0 0.0
    %976 = vmatprep.subr.mxu0 0.0
    %977 = vmatpush2.msra.mxu0 0.0
    %978 = vmatprep.subr.mxu0 0.0
    %979 = vmatpush2.msra.mxu0 0.0
    %980 = vmatprep.subr.mxu0 0.0
    %981 = vmatpush2.msra.mxu0 0.0
    %982 = vmatprep.subr.mxu0 0.0
    %983 = vmatpush2.msra.mxu0 0.0
    %984 = vmatprep.subr.mxu0 0.0
    %985 = vmatpush2.msra.mxu0 0.0
    %986 = vmatprep.subr.mxu0 0.0
    %987 = vmatpush2.msra.mxu0 0.0
    %988 = vmatprep.subr.mxu0 0.0
    %989 = vmatpush2.msra.mxu0 0.0
    %990 = vmatprep.subr.mxu0 0.0
    %991 = vmatpush2.msra.mxu0 0.0
    %992 = vmatprep.mubr.f32.mxu0 0.0
    %993 = vmatmul.mubr.f32.gmra.mxu0 %v881
    %v994 = vpop.f32.mrf.mxu0
    %v995 = vadd.f32 %v921, %v994
    %v996 = vpop.f32.mrf.mxu0
    %v997 = vadd.f32 %v925, %v996
    %998 = vdwg.mxu0
    %v999 = vmul.f32 %v995, 0.5
    %v1000 = vmul.f32 %v997, 0.5
    %v1001 = vmul.f32 %v995, 0.70710677
    %v1002 = vmul.f32 %v997, 0.70710677
    %vm1003 = vcmp.ge.f32.partialorder %v1001, 0.0
    %vm1004 = vcmp.ge.f32.partialorder %v1002, 0.0
    %v1005 = vsel %vm1003, 1.0, -1.0
    %v1006 = vsel %vm1004, 1.0, -1.0
    %v1007 = vand.u32 2147483647, %v1001
    %v1008 = vand.u32 2147483647, %v1002
    %v1009 = vmul.f32 %v1007, 0.3275911
    %v1010 = vmul.f32 %v1008, 0.3275911
    %v1011 = vadd.f32 %v1009, 1.0
    %v1012 = vadd.f32 %v1010, 1.0
    %v1013 = vrcp.pop %v1011
    %v1014 = vrcp.pop %v1012
    %v1015 = vmul.f32 %v1013, 1.0614054
    %v1016 = vmul.f32 %v1014, 1.0614054
    %v1017 = vadd.f32 %v1015, -1.4531521
    %v1018 = vadd.f32 %v1016, -1.4531521
    %v1019 = vmul.f32 %v1017, %v1013
    %v1020 = vmul.f32 %v1018, %v1014
    %v1021 = vadd.f32 %v1019, 1.4214138
    %v1022 = vadd.f32 %v1020, 1.4214138
    %v1023 = vmul.f32 %v1021, %v1013
    %v1024 = vmul.f32 %v1022, %v1014
    %v1025 = vadd.f32 %v1023, -0.28449672
    %v1026 = vadd.f32 %v1024, -0.28449672
    %v1027 = vmul.f32 %v1025, %v1013
    %v1028 = vmul.f32 %v1026, %v1014
    %v1029 = vadd.f32 %v1027, 0.2548296
    %v1030 = vadd.f32 %v1028, 0.2548296
    %v1031 = vmul.f32 %v1029, %v1013
    %v1032 = vmul.f32 %v1030, %v1014
    %v1033 = vsub.f32 0.0, %v1007
    %v1034 = vsub.f32 0.0, %v1008
    %v1035 = vmul.f32 %v1033, %v1007
    %v1036 = vmul.f32 %v1034, %v1008
    %v1037 = vmul.f32 %v1035, 1.442695
    %v1038 = vpow.pop %v1037
    %v1039 = vmul.f32 %v1036, 1.442695
    %v1040 = vpow.pop %v1039
    %v1041 = vmul.f32 %v1031, %v1038
    %v1042 = vmul.f32 %v1032, %v1040
    %v1043 = vsub.f32 1.0, %v1041
    %v1044 = vsub.f32 1.0, %v1042
    %v1045 = vmul.f32 %v1005, %v1043
    %v1046 = vmul.f32 %v1006, %v1044
    %v1047 = vadd.f32 %v1045, 1.0
    %v1048 = vadd.f32 %v1046, 1.0
    %v1049 = vmul.f32 %v999, %v1047
    %v1050 = vmul.f32 %v1000, %v1048
    %s1051 = scalar_lea.vmem [#allocation8], 512
    %v1052 = vld [vmem:[%s1051] sm:$0xff]
    %v1053 = vld [vmem:[%s1051 + $0x8] sm:$0xff]
    %v1054 = vld [vmem:[%s1051 + $0x10] sm:$0xff]
    %v1055 = vld [vmem:[%s1051 + $0x18] sm:$0xff]
    %v1056 = vld [vmem:[%s1051 + $0x20] sm:$0xff]
    %v1057 = vld [vmem:[%s1051 + $0x28] sm:$0xff]
    %v1058 = vld [vmem:[%s1051 + $0x30] sm:$0xff]
    %v1059 = vld [vmem:[%s1051 + $0x38] sm:$0xff]
    %v1060 = vld [vmem:[%s1051 + $0x40] sm:$0xff]
    %v1061 = vld [vmem:[%s1051 + $0x48] sm:$0xff]
    %v1062 = vld [vmem:[%s1051 + $0x50] sm:$0xff]
    %v1063 = vld [vmem:[%s1051 + $0x58] sm:$0xff]
    %v1064 = vld [vmem:[%s1051 + $0x60] sm:$0xff]
    %v1065 = vld [vmem:[%s1051 + $0x68] sm:$0xff]
    %v1066 = vld [vmem:[%s1051 + $0x70] sm:$0xff]
    %v1067 = vld [vmem:[%s1051 + $0x78] sm:$0xff]
    %v1068 = vld [vmem:[%s1051 + $0x80] sm:$0xff]
    %v1069 = vld [vmem:[%s1051 + $0x88] sm:$0xff]
    %v1070 = vld [vmem:[%s1051 + $0x90] sm:$0xff]
    %v1071 = vld [vmem:[%s1051 + $0x98] sm:$0xff]
    %v1072 = vld [vmem:[%s1051 + $0xa0] sm:$0xff]
    %v1073 = vld [vmem:[%s1051 + $0xa8] sm:$0xff]
    %v1074 = vld [vmem:[%s1051 + $0xb0] sm:$0xff]
    %v1075 = vld [vmem:[%s1051 + $0xb8] sm:$0xff]
    %v1076 = vld [vmem:[%s1051 + $0xc0] sm:$0xff]
    %v1077 = vld [vmem:[%s1051 + $0xc8] sm:$0xff]
    %v1078 = vld [vmem:[%s1051 + $0xd0] sm:$0xff]
    %v1079 = vld [vmem:[%s1051 + $0xd8] sm:$0xff]
    %v1080 = vld [vmem:[%s1051 + $0xe0] sm:$0xff]
    %v1081 = vld [vmem:[%s1051 + $0xe8] sm:$0xff]
    %v1082 = vld [vmem:[%s1051 + $0xf0] sm:$0xff]
    %v1083 = vld [vmem:[%s1051 + $0xf8] sm:$0xff]
    %v1084 = vld [vmem:[#allocation10 + $0x2] sm:$0x1]
    %v1085 = vlaneseq
    %v1086 = vshrl.u32 %v1085, 7
    %v1087 = vsub.s32 0, %v1086
    %v1088 = vrot.slane %v1084, %v1087
    %1089 = vmatprep.subr.mxu0 0.0
    %1090 = vmatpush1.msra.mxu0 %v1067
    %1091 = vmatprep.subr.mxu0 0.0
    %1092 = vmatpush1.msra.mxu0 %v1066
    %1093 = vmatprep.subr.mxu0 0.0
    %1094 = vmatpush1.msra.mxu0 %v1065
    %1095 = vmatprep.subr.mxu0 0.0
    %1096 = vmatpush1.msra.mxu0 %v1064
    %1097 = vmatprep.subr.mxu0 0.0
    %1098 = vmatpush1.msra.mxu0 %v1063
    %1099 = vmatprep.subr.mxu0 0.0
    %1100 = vmatpush1.msra.mxu0 %v1062
    %1101 = vmatprep.subr.mxu0 0.0
    %1102 = vmatpush1.msra.mxu0 %v1061
    %1103 = vmatprep.subr.mxu0 0.0
    %1104 = vmatpush1.msra.mxu0 %v1060
    %1105 = vmatprep.subr.mxu0 0.0
    %1106 = vmatpush1.msra.mxu0 %v1059
    %1107 = vmatprep.subr.mxu0 0.0
    %1108 = vmatpush1.msra.mxu0 %v1058
    %1109 = vmatprep.subr.mxu0 0.0
    %1110 = vmatpush1.msra.mxu0 %v1057
    %1111 = vmatprep.subr.mxu0 0.0
    %1112 = vmatpush1.msra.mxu0 %v1056
    %1113 = vmatprep.subr.mxu0 0.0
    %1114 = vmatpush1.msra.mxu0 %v1055
    %1115 = vmatprep.subr.mxu0 0.0
    %1116 = vmatpush1.msra.mxu0 %v1054
    %1117 = vmatprep.subr.mxu0 0.0
    %1118 = vmatpush1.msra.mxu0 %v1053
    %1119 = vmatprep.subr.mxu0 0.0
    %1120 = vmatpush1.msra.mxu0 %v1052
    %1121 = vmatprep.subr.mxu0 0.0
    %1122 = vmatpush2.msra.mxu0 %v1083
    %1123 = vmatprep.subr.mxu0 0.0
    %1124 = vmatpush2.msra.mxu0 %v1082
    %1125 = vmatprep.subr.mxu0 0.0
    %1126 = vmatpush2.msra.mxu0 %v1081
    %1127 = vmatprep.subr.mxu0 0.0
    %1128 = vmatpush2.msra.mxu0 %v1080
    %1129 = vmatprep.subr.mxu0 0.0
    %1130 = vmatpush2.msra.mxu0 %v1079
    %1131 = vmatprep.subr.mxu0 0.0
    %1132 = vmatpush2.msra.mxu0 %v1078
    %1133 = vmatprep.subr.mxu0 0.0
    %1134 = vmatpush2.msra.mxu0 %v1077
    %1135 = vmatprep.subr.mxu0 0.0
    %1136 = vmatpush2.msra.mxu0 %v1076
    %1137 = vmatprep.subr.mxu0 0.0
    %1138 = vmatpush2.msra.mxu0 %v1075
    %1139 = vmatprep.subr.mxu0 0.0
    %1140 = vmatpush2.msra.mxu0 %v1074
    %1141 = vmatprep.subr.mxu0 0.0
    %1142 = vmatpush2.msra.mxu0 %v1073
    %1143 = vmatprep.subr.mxu0 0.0
    %1144 = vmatpush2.msra.mxu0 %v1072
    %1145 = vmatprep.subr.mxu0 0.0
    %1146 = vmatpush2.msra.mxu0 %v1071
    %1147 = vmatprep.subr.mxu0 0.0
    %1148 = vmatpush2.msra.mxu0 %v1070
    %1149 = vmatprep.subr.mxu0 0.0
    %1150 = vmatpush2.msra.mxu0 %v1069
    %1151 = vmatprep.subr.mxu0 0.0
    %1152 = vmatpush2.msra.mxu0 %v1068
    %1153 = vmatprep.mubr.f32.mxu0 %v1050
    %1154 = vmatmul.mubr.f32.gmra.mxu0 %v1049
    %v1155 = vpop.f32.mrf.mxu0
    %v1156 = vadd.f32 %v1088, %v1155
    %v1157 = vpop.f32.mrf.mxu0
    %1158 = vdwg.mxu0
    %v1159 = vmul.f32 %v1156, 0.5
    %v1160 = vmul.f32 %v1156, 0.70710677
    %vm1161 = vcmp.ge.f32.partialorder %v1160, 0.0
    %v1162 = vsel %vm1161, 1.0, -1.0
    %v1163 = vand.u32 2147483647, %v1160
    %v1164 = vmul.f32 %v1163, 0.3275911
    %v1165 = vadd.f32 %v1164, 1.0
    %v1166 = vrcp.pop %v1165
    %v1167 = vmul.f32 %v1166, 1.0614054
    %v1168 = vadd.f32 %v1167, -1.4531521
    %v1169 = vmul.f32 %v1168, %v1166
    %v1170 = vadd.f32 %v1169, 1.4214138
    %v1171 = vmul.f32 %v1170, %v1166
    %v1172 = vadd.f32 %v1171, -0.28449672
    %v1173 = vmul.f32 %v1172, %v1166
    %v1174 = vadd.f32 %v1173, 0.2548296
    %v1175 = vmul.f32 %v1174, %v1166
    %v1176 = vsub.f32 0.0, %v1163
    %v1177 = vmul.f32 %v1176, %v1163
    %v1178 = vmul.f32 %v1177, 1.442695
    %v1179 = vpow.pop %v1178
    %v1180 = vmul.f32 %v1175, %v1179
    %v1181 = vsub.f32 1.0, %v1180
    %v1182 = vmul.f32 %v1162, %v1181
    %v1183 = vadd.f32 %v1182, 1.0
    %v1184 = vmul.f32 %v1159, %v1183
    %s1185 = scalar_lea.vmem [#allocation11], 256
    %v1186 = vld [vmem:[%s1185] sm:$0xff]
    %v1187 = vld [vmem:[%s1185 + $0x8] sm:$0xff]
    %v1188 = vld [vmem:[%s1185 + $0x10] sm:$0xff]
    %v1189 = vld [vmem:[%s1185 + $0x18] sm:$0xff]
    %v1190 = vld [vmem:[%s1185 + $0x20] sm:$0xff]
    %v1191 = vld [vmem:[%s1185 + $0x28] sm:$0xff]
    %v1192 = vld [vmem:[%s1185 + $0x30] sm:$0xff]
    %v1193 = vld [vmem:[%s1185 + $0x38] sm:$0xff]
    %v1194 = vld [vmem:[%s1185 + $0x40] sm:$0xff]
    %v1195 = vld [vmem:[%s1185 + $0x48] sm:$0xff]
    %v1196 = vld [vmem:[%s1185 + $0x50] sm:$0xff]
    %v1197 = vld [vmem:[%s1185 + $0x58] sm:$0xff]
    %v1198 = vld [vmem:[%s1185 + $0x60] sm:$0xff]
    %v1199 = vld [vmem:[%s1185 + $0x68] sm:$0xff]
    %v1200 = vld [vmem:[%s1185 + $0x70] sm:$0xff]
    %v1201 = vld [vmem:[%s1185 + $0x78] sm:$0xff]
    %1202 = vmatprep.subr.mxu0 0.0
    %1203 = vmatpush1.msra.mxu0 %v1201
    %1204 = vmatprep.subr.mxu0 0.0
    %1205 = vmatpush1.msra.mxu0 %v1200
    %1206 = vmatprep.subr.mxu0 0.0
    %1207 = vmatpush1.msra.mxu0 %v1199
    %1208 = vmatprep.subr.mxu0 0.0
    %1209 = vmatpush1.msra.mxu0 %v1198
    %1210 = vmatprep.subr.mxu0 0.0
    %1211 = vmatpush1.msra.mxu0 %v1197
    %1212 = vmatprep.subr.mxu0 0.0
    %1213 = vmatpush1.msra.mxu0 %v1196
    %1214 = vmatprep.subr.mxu0 0.0
    %1215 = vmatpush1.msra.mxu0 %v1195
    %1216 = vmatprep.subr.mxu0 0.0
    %1217 = vmatpush1.msra.mxu0 %v1194
    %1218 = vmatprep.subr.mxu0 0.0
    %1219 = vmatpush1.msra.mxu0 %v1193
    %1220 = vmatprep.subr.mxu0 0.0
    %1221 = vmatpush1.msra.mxu0 %v1192
    %1222 = vmatprep.subr.mxu0 0.0
    %1223 = vmatpush1.msra.mxu0 %v1191
    %1224 = vmatprep.subr.mxu0 0.0
    %1225 = vmatpush1.msra.mxu0 %v1190
    %1226 = vmatprep.subr.mxu0 0.0
    %1227 = vmatpush1.msra.mxu0 %v1189
    %1228 = vmatprep.subr.mxu0 0.0
    %1229 = vmatpush1.msra.mxu0 %v1188
    %1230 = vmatprep.subr.mxu0 0.0
    %1231 = vmatpush1.msra.mxu0 %v1187
    %1232 = vmatprep.subr.mxu0 0.0
    %1233 = vmatpush1.msra.mxu0 %v1186
    %1234 = vmatprep.subr.mxu0 0.0
    %1235 = vmatpush2.msra.mxu0 0.0
    %1236 = vmatprep.subr.mxu0 0.0
    %1237 = vmatpush2.msra.mxu0 0.0
    %1238 = vmatprep.subr.mxu0 0.0
    %1239 = vmatpush2.msra.mxu0 0.0
    %1240 = vmatprep.subr.mxu0 0.0
    %1241 = vmatpush2.msra.mxu0 0.0
    %1242 = vmatprep.subr.mxu0 0.0
    %1243 = vmatpush2.msra.mxu0 0.0
    %1244 = vmatprep.subr.mxu0 0.0
    %1245 = vmatpush2.msra.mxu0 0.0
    %1246 = vmatprep.subr.mxu0 0.0
    %1247 = vmatpush2.msra.mxu0 0.0
    %1248 = vmatprep.subr.mxu0 0.0
    %1249 = vmatpush2.msra.mxu0 0.0
    %1250 = vmatprep.subr.mxu0 0.0
    %1251 = vmatpush2.msra.mxu0 0.0
    %1252 = vmatprep.subr.mxu0 0.0
    %1253 = vmatpush2.msra.mxu0 0.0
    %1254 = vmatprep.subr.mxu0 0.0
    %1255 = vmatpush2.msra.mxu0 0.0
    %1256 = vmatprep.subr.mxu0 0.0
    %1257 = vmatpush2.msra.mxu0 0.0
    %1258 = vmatprep.subr.mxu0 0.0
    %1259 = vmatpush2.msra.mxu0 0.0
    %1260 = vmatprep.subr.mxu0 0.0
    %1261 = vmatpush2.msra.mxu0 0.0
    %1262 = vmatprep.subr.mxu0 0.0
    %1263 = vmatpush2.msra.mxu0 0.0
    %1264 = vmatprep.subr.mxu0 0.0
    %1265 = vmatpush2.msra.mxu0 0.0
    %1266 = vmatprep.mubr.f32.mxu0 0.0
    %1267 = vmatmul.mubr.f32.gmra.mxu0 %v1184
    %v1268 = vpop.f32.mrf.mxu0
    %v1269 = vadd.f32 0.0, %v1268
    %v1270 = vpop.f32.mrf.mxu0
    %1271 = vdwg.mxu0
    %v1272 = vadd.f32 %v878, %v1269
    %v1273 = vld [vmem:[#allocation2 + $0x18] sm:$0xff]
    %s1274 = scalar_lea.vmem [#allocation5], 768
    %v1275 = vld [vmem:[%s1274] sm:$0xff]
    %v1276 = vld [vmem:[%s1274 + $0x8] sm:$0xff]
    %v1277 = vld [vmem:[%s1274 + $0x10] sm:$0xff]
    %v1278 = vld [vmem:[%s1274 + $0x18] sm:$0xff]
    %v1279 = vld [vmem:[%s1274 + $0x20] sm:$0xff]
    %v1280 = vld [vmem:[%s1274 + $0x28] sm:$0xff]
    %v1281 = vld [vmem:[%s1274 + $0x30] sm:$0xff]
    %v1282 = vld [vmem:[%s1274 + $0x38] sm:$0xff]
    %v1283 = vld [vmem:[%s1274 + $0x40] sm:$0xff]
    %v1284 = vld [vmem:[%s1274 + $0x48] sm:$0xff]
    %v1285 = vld [vmem:[%s1274 + $0x50] sm:$0xff]
    %v1286 = vld [vmem:[%s1274 + $0x58] sm:$0xff]
    %v1287 = vld [vmem:[%s1274 + $0x60] sm:$0xff]
    %v1288 = vld [vmem:[%s1274 + $0x68] sm:$0xff]
    %v1289 = vld [vmem:[%s1274 + $0x70] sm:$0xff]
    %v1290 = vld [vmem:[%s1274 + $0x78] sm:$0xff]
    %v1291 = vld [vmem:[%s1274 + $0x80] sm:$0xff]
    %v1292 = vld [vmem:[%s1274 + $0x88] sm:$0xff]
    %v1293 = vld [vmem:[%s1274 + $0x90] sm:$0xff]
    %v1294 = vld [vmem:[%s1274 + $0x98] sm:$0xff]
    %v1295 = vld [vmem:[%s1274 + $0xa0] sm:$0xff]
    %v1296 = vld [vmem:[%s1274 + $0xa8] sm:$0xff]
    %v1297 = vld [vmem:[%s1274 + $0xb0] sm:$0xff]
    %v1298 = vld [vmem:[%s1274 + $0xb8] sm:$0xff]
    %v1299 = vld [vmem:[%s1274 + $0xc0] sm:$0xff]
    %v1300 = vld [vmem:[%s1274 + $0xc8] sm:$0xff]
    %v1301 = vld [vmem:[%s1274 + $0xd0] sm:$0xff]
    %v1302 = vld [vmem:[%s1274 + $0xd8] sm:$0xff]
    %v1303 = vld [vmem:[%s1274 + $0xe0] sm:$0xff]
    %v1304 = vld [vmem:[%s1274 + $0xe8] sm:$0xff]
    %v1305 = vld [vmem:[%s1274 + $0xf0] sm:$0xff]
    %v1306 = vld [vmem:[%s1274 + $0xf8] sm:$0xff]
    %s1307 = scalar_lea.vmem [#allocation7], 3
    %v1308 = vld [vmem:[%s1307] ss:$8 sm:$0x3]
    %v1310 = vlaneseq
    %v1311 = vshrl.u32 %v1310, 7
    %v1312 = vsub.s32 0, %v1311
    %v1313 = vrot.slane %v1308, %v1312
    %v1314 = vlaneseq
    %v1315 = vshrl.u32 %v1314, 7
    %v1316 = vsub.s32 1, %v1315
    %v1317 = vrot.slane %v1308, %v1316
    %1320 = vmatprep.subr.mxu0 %v1306
    %1321 = vmatpush1.msra.mxu0 %v1305
    %1322 = vmatprep.subr.mxu0 %v1304
    %1323 = vmatpush1.msra.mxu0 %v1303
    %1324 = vmatprep.subr.mxu0 %v1302
    %1325 = vmatpush1.msra.mxu0 %v1301
    %1326 = vmatprep.subr.mxu0 %v1300
    %1327 = vmatpush1.msra.mxu0 %v1299
    %1328 = vmatprep.subr.mxu0 %v1298
    %1329 = vmatpush1.msra.mxu0 %v1297
    %1330 = vmatprep.subr.mxu0 %v1296
    %1331 = vmatpush1.msra.mxu0 %v1295
    %1332 = vmatprep.subr.mxu0 %v1294
    %1333 = vmatpush1.msra.mxu0 %v1293
    %1334 = vmatprep.subr.mxu0 %v1292
    %1335 = vmatpush1.msra.mxu0 %v1291
    %1336 = vmatprep.subr.mxu0 %v1290
    %1337 = vmatpush1.msra.mxu0 %v1289
    %1338 = vmatprep.subr.mxu0 %v1288
    %1339 = vmatpush1.msra.mxu0 %v1287
    %1340 = vmatprep.subr.mxu0 %v1286
    %1341 = vmatpush1.msra.mxu0 %v1285
    %1342 = vmatprep.subr.mxu0 %v1284
    %1343 = vmatpush1.msra.mxu0 %v1283
    %1344 = vmatprep.subr.mxu0 %v1282
    %1345 = vmatpush1.msra.mxu0 %v1281
    %1346 = vmatprep.subr.mxu0 %v1280
    %1347 = vmatpush1.msra.mxu0 %v1279
    %1348 = vmatprep.subr.mxu0 %v1278
    %1349 = vmatpush1.msra.mxu0 %v1277
    %1350 = vmatprep.subr.mxu0 %v1276
    %1351 = vmatpush1.msra.mxu0 %v1275
    %1352 = vmatprep.subr.mxu0 0.0
    %1353 = vmatpush2.msra.mxu0 0.0
    %1354 = vmatprep.subr.mxu0 0.0
    %1355 = vmatpush2.msra.mxu0 0.0
    %1356 = vmatprep.subr.mxu0 0.0
    %1357 = vmatpush2.msra.mxu0 0.0
    %1358 = vmatprep.subr.mxu0 0.0
    %1359 = vmatpush2.msra.mxu0 0.0
    %1360 = vmatprep.subr.mxu0 0.0
    %1361 = vmatpush2.msra.mxu0 0.0
    %1362 = vmatprep.subr.mxu0 0.0
    %1363 = vmatpush2.msra.mxu0 0.0
    %1364 = vmatprep.subr.mxu0 0.0
    %1365 = vmatpush2.msra.mxu0 0.0
    %1366 = vmatprep.subr.mxu0 0.0
    %1367 = vmatpush2.msra.mxu0 0.0
    %1368 = vmatprep.subr.mxu0 0.0
    %1369 = vmatpush2.msra.mxu0 0.0
    %1370 = vmatprep.subr.mxu0 0.0
    %1371 = vmatpush2.msra.mxu0 0.0
    %1372 = vmatprep.subr.mxu0 0.0
    %1373 = vmatpush2.msra.mxu0 0.0
    %1374 = vmatprep.subr.mxu0 0.0
    %1375 = vmatpush2.msra.mxu0 0.0
    %1376 = vmatprep.subr.mxu0 0.0
    %1377 = vmatpush2.msra.mxu0 0.0
    %1378 = vmatprep.subr.mxu0 0.0
    %1379 = vmatpush2.msra.mxu0 0.0
    %1380 = vmatprep.subr.mxu0 0.0
    %1381 = vmatpush2.msra.mxu0 0.0
    %1382 = vmatprep.subr.mxu0 0.0
    %1383 = vmatpush2.msra.mxu0 0.0
    %1384 = vmatprep.mubr.f32.mxu0 0.0
    %1385 = vmatmul.mubr.f32.gmra.mxu0 %v1273
    %v1386 = vpop.f32.mrf.mxu0
    %v1387 = vadd.f32 %v1313, %v1386
    %v1388 = vpop.f32.mrf.mxu0
    %v1389 = vadd.f32 %v1317, %v1388
    %1390 = vdwg.mxu0
    %v1391 = vmul.f32 %v1387, 0.5
    %v1392 = vmul.f32 %v1389, 0.5
    %v1393 = vmul.f32 %v1387, 0.70710677
    %v1394 = vmul.f32 %v1389, 0.70710677
    %vm1395 = vcmp.ge.f32.partialorder %v1393, 0.0
    %vm1396 = vcmp.ge.f32.partialorder %v1394, 0.0
    %v1397 = vsel %vm1395, 1.0, -1.0
    %v1398 = vsel %vm1396, 1.0, -1.0
    %v1399 = vand.u32 2147483647, %v1393
    %v1400 = vand.u32 2147483647, %v1394
    %v1401 = vmul.f32 %v1399, 0.3275911
    %v1402 = vmul.f32 %v1400, 0.3275911
    %v1403 = vadd.f32 %v1401, 1.0
    %v1404 = vadd.f32 %v1402, 1.0
    %v1405 = vrcp.pop %v1403
    %v1406 = vrcp.pop %v1404
    %v1407 = vmul.f32 %v1405, 1.0614054
    %v1408 = vmul.f32 %v1406, 1.0614054
    %v1409 = vadd.f32 %v1407, -1.4531521
    %v1410 = vadd.f32 %v1408, -1.4531521
    %v1411 = vmul.f32 %v1409, %v1405
    %v1412 = vmul.f32 %v1410, %v1406
    %v1413 = vadd.f32 %v1411, 1.4214138
    %v1414 = vadd.f32 %v1412, 1.4214138
    %v1415 = vmul.f32 %v1413, %v1405
    %v1416 = vmul.f32 %v1414, %v1406
    %v1417 = vadd.f32 %v1415, -0.28449672
    %v1418 = vadd.f32 %v1416, -0.28449672
    %v1419 = vmul.f32 %v1417, %v1405
    %v1420 = vmul.f32 %v1418, %v1406
    %v1421 = vadd.f32 %v1419, 0.2548296
    %v1422 = vadd.f32 %v1420, 0.2548296
    %v1423 = vmul.f32 %v1421, %v1405
    %v1424 = vmul.f32 %v1422, %v1406
    %v1425 = vsub.f32 0.0, %v1399
    %v1426 = vsub.f32 0.0, %v1400
    %v1427 = vmul.f32 %v1425, %v1399
    %v1428 = vmul.f32 %v1426, %v1400
    %v1429 = vmul.f32 %v1427, 1.442695
    %v1430 = vpow.pop %v1429
    %v1431 = vmul.f32 %v1428, 1.442695
    %v1432 = vpow.pop %v1431
    %v1433 = vmul.f32 %v1423, %v1430
    %v1434 = vmul.f32 %v1424, %v1432
    %v1435 = vsub.f32 1.0, %v1433
    %v1436 = vsub.f32 1.0, %v1434
    %v1437 = vmul.f32 %v1397, %v1435
    %v1438 = vmul.f32 %v1398, %v1436
    %v1439 = vadd.f32 %v1437, 1.0
    %v1440 = vadd.f32 %v1438, 1.0
    %v1441 = vmul.f32 %v1391, %v1439
    %v1442 = vmul.f32 %v1392, %v1440
    %s1443 = scalar_lea.vmem [#allocation8], 768
    %v1444 = vld [vmem:[%s1443] sm:$0xff]
    %v1445 = vld [vmem:[%s1443 + $0x8] sm:$0xff]
    %v1446 = vld [vmem:[%s1443 + $0x10] sm:$0xff]
    %v1447 = vld [vmem:[%s1443 + $0x18] sm:$0xff]
    %v1448 = vld [vmem:[%s1443 + $0x20] sm:$0xff]
    %v1449 = vld [vmem:[%s1443 + $0x28] sm:$0xff]
    %v1450 = vld [vmem:[%s1443 + $0x30] sm:$0xff]
    %v1451 = vld [vmem:[%s1443 + $0x38] sm:$0xff]
    %v1452 = vld [vmem:[%s1443 + $0x40] sm:$0xff]
    %v1453 = vld [vmem:[%s1443 + $0x48] sm:$0xff]
    %v1454 = vld [vmem:[%s1443 + $0x50] sm:$0xff]
    %v1455 = vld [vmem:[%s1443 + $0x58] sm:$0xff]
    %v1456 = vld [vmem:[%s1443 + $0x60] sm:$0xff]
    %v1457 = vld [vmem:[%s1443 + $0x68] sm:$0xff]
    %v1458 = vld [vmem:[%s1443 + $0x70] sm:$0xff]
    %v1459 = vld [vmem:[%s1443 + $0x78] sm:$0xff]
    %v1460 = vld [vmem:[%s1443 + $0x80] sm:$0xff]
    %v1461 = vld [vmem:[%s1443 + $0x88] sm:$0xff]
    %v1462 = vld [vmem:[%s1443 + $0x90] sm:$0xff]
    %v1463 = vld [vmem:[%s1443 + $0x98] sm:$0xff]
    %v1464 = vld [vmem:[%s1443 + $0xa0] sm:$0xff]
    %v1465 = vld [vmem:[%s1443 + $0xa8] sm:$0xff]
    %v1466 = vld [vmem:[%s1443 + $0xb0] sm:$0xff]
    %v1467 = vld [vmem:[%s1443 + $0xb8] sm:$0xff]
    %v1468 = vld [vmem:[%s1443 + $0xc0] sm:$0xff]
    %v1469 = vld [vmem:[%s1443 + $0xc8] sm:$0xff]
    %v1470 = vld [vmem:[%s1443 + $0xd0] sm:$0xff]
    %v1471 = vld [vmem:[%s1443 + $0xd8] sm:$0xff]
    %v1472 = vld [vmem:[%s1443 + $0xe0] sm:$0xff]
    %v1473 = vld [vmem:[%s1443 + $0xe8] sm:$0xff]
    %v1474 = vld [vmem:[%s1443 + $0xf0] sm:$0xff]
    %v1475 = vld [vmem:[%s1443 + $0xf8] sm:$0xff]
    %v1476 = vld [vmem:[#allocation10 + $0x3] sm:$0x1]
    %v1477 = vlaneseq
    %v1478 = vshrl.u32 %v1477, 7
    %v1479 = vsub.s32 0, %v1478
    %v1480 = vrot.slane %v1476, %v1479
    %1481 = vmatprep.subr.mxu0 0.0
    %1482 = vmatpush1.msra.mxu0 %v1459
    %1483 = vmatprep.subr.mxu0 0.0
    %1484 = vmatpush1.msra.mxu0 %v1458
    %1485 = vmatprep.subr.mxu0 0.0
    %1486 = vmatpush1.msra.mxu0 %v1457
    %1487 = vmatprep.subr.mxu0 0.0
    %1488 = vmatpush1.msra.mxu0 %v1456
    %1489 = vmatprep.subr.mxu0 0.0
    %1490 = vmatpush1.msra.mxu0 %v1455
    %1491 = vmatprep.subr.mxu0 0.0
    %1492 = vmatpush1.msra.mxu0 %v1454
    %1493 = vmatprep.subr.mxu0 0.0
    %1494 = vmatpush1.msra.mxu0 %v1453
    %1495 = vmatprep.subr.mxu0 0.0
    %1496 = vmatpush1.msra.mxu0 %v1452
    %1497 = vmatprep.subr.mxu0 0.0
    %1498 = vmatpush1.msra.mxu0 %v1451
    %1499 = vmatprep.subr.mxu0 0.0
    %1500 = vmatpush1.msra.mxu0 %v1450
    %1501 = vmatprep.subr.mxu0 0.0
    %1502 = vmatpush1.msra.mxu0 %v1449
    %1503 = vmatprep.subr.mxu0 0.0
    %1504 = vmatpush1.msra.mxu0 %v1448
    %1505 = vmatprep.subr.mxu0 0.0
    %1506 = vmatpush1.msra.mxu0 %v1447
    %1507 = vmatprep.subr.mxu0 0.0
    %1508 = vmatpush1.msra.mxu0 %v1446
    %1509 = vmatprep.subr.mxu0 0.0
    %1510 = vmatpush1.msra.mxu0 %v1445
    %1511 = vmatprep.subr.mxu0 0.0
    %1512 = vmatpush1.msra.mxu0 %v1444
    %1513 = vmatprep.subr.mxu0 0.0
    %1514 = vmatpush2.msra.mxu0 %v1475
    %1515 = vmatprep.subr.mxu0 0.0
    %1516 = vmatpush2.msra.mxu0 %v1474
    %1517 = vmatprep.subr.mxu0 0.0
    %1518 = vmatpush2.msra.mxu0 %v1473
    %1519 = vmatprep.subr.mxu0 0.0
    %1520 = vmatpush2.msra.mxu0 %v1472
    %1521 = vmatprep.subr.mxu0 0.0
    %1522 = vmatpush2.msra.mxu0 %v1471
    %1523 = vmatprep.subr.mxu0 0.0
    %1524 = vmatpush2.msra.mxu0 %v1470
    %1525 = vmatprep.subr.mxu0 0.0
    %1526 = vmatpush2.msra.mxu0 %v1469
    %1527 = vmatprep.subr.mxu0 0.0
    %1528 = vmatpush2.msra.mxu0 %v1468
    %1529 = vmatprep.subr.mxu0 0.0
    %1530 = vmatpush2.msra.mxu0 %v1467
    %1531 = vmatprep.subr.mxu0 0.0
    %1532 = vmatpush2.msra.mxu0 %v1466
    %1533 = vmatprep.subr.mxu0 0.0
    %1534 = vmatpush2.msra.mxu0 %v1465
    %1535 = vmatprep.subr.mxu0 0.0
    %1536 = vmatpush2.msra.mxu0 %v1464
    %1537 = vmatprep.subr.mxu0 0.0
    %1538 = vmatpush2.msra.mxu0 %v1463
    %1539 = vmatprep.subr.mxu0 0.0
    %1540 = vmatpush2.msra.mxu0 %v1462
    %1541 = vmatprep.subr.mxu0 0.0
    %1542 = vmatpush2.msra.mxu0 %v1461
    %1543 = vmatprep.subr.mxu0 0.0
    %1544 = vmatpush2.msra.mxu0 %v1460
    %1545 = vmatprep.mubr.f32.mxu0 %v1442
    %1546 = vmatmul.mubr.f32.gmra.mxu0 %v1441
    %v1547 = vpop.f32.mrf.mxu0
    %v1548 = vadd.f32 %v1480, %v1547
    %v1549 = vpop.f32.mrf.mxu0
    %1550 = vdwg.mxu0
    %v1551 = vmul.f32 %v1548, 0.5
    %v1552 = vmul.f32 %v1548, 0.70710677
    %vm1553 = vcmp.ge.f32.partialorder %v1552, 0.0
    %v1554 = vsel %vm1553, 1.0, -1.0
    %v1555 = vand.u32 2147483647, %v1552
    %v1556 = vmul.f32 %v1555, 0.3275911
    %v1557 = vadd.f32 %v1556, 1.0
    %v1558 = vrcp.pop %v1557
    %v1559 = vmul.f32 %v1558, 1.0614054
    %v1560 = vadd.f32 %v1559, -1.4531521
    %v1561 = vmul.f32 %v1560, %v1558
    %v1562 = vadd.f32 %v1561, 1.4214138
    %v1563 = vmul.f32 %v1562, %v1558
    %v1564 = vadd.f32 %v1563, -0.28449672
    %v1565 = vmul.f32 %v1564, %v1558
    %v1566 = vadd.f32 %v1565, 0.2548296
    %v1567 = vmul.f32 %v1566, %v1558
    %v1568 = vsub.f32 0.0, %v1555
    %v1569 = vmul.f32 %v1568, %v1555
    %v1570 = vmul.f32 %v1569, 1.442695
    %v1571 = vpow.pop %v1570
    %v1572 = vmul.f32 %v1567, %v1571
    %v1573 = vsub.f32 1.0, %v1572
    %v1574 = vmul.f32 %v1554, %v1573
    %v1575 = vadd.f32 %v1574, 1.0
    %v1576 = vmul.f32 %v1551, %v1575
    %s1577 = scalar_lea.vmem [#allocation11], 384
    %v1578 = vld [vmem:[%s1577] sm:$0xff]
    %v1579 = vld [vmem:[%s1577 + $0x8] sm:$0xff]
    %v1580 = vld [vmem:[%s1577 + $0x10] sm:$0xff]
    %v1581 = vld [vmem:[%s1577 + $0x18] sm:$0xff]
    %v1582 = vld [vmem:[%s1577 + $0x20] sm:$0xff]
    %v1583 = vld [vmem:[%s1577 + $0x28] sm:$0xff]
    %v1584 = vld [vmem:[%s1577 + $0x30] sm:$0xff]
    %v1585 = vld [vmem:[%s1577 + $0x38] sm:$0xff]
    %v1586 = vld [vmem:[%s1577 + $0x40] sm:$0xff]
    %v1587 = vld [vmem:[%s1577 + $0x48] sm:$0xff]
    %v1588 = vld [vmem:[%s1577 + $0x50] sm:$0xff]
    %v1589 = vld [vmem:[%s1577 + $0x58] sm:$0xff]
    %v1590 = vld [vmem:[%s1577 + $0x60] sm:$0xff]
    %v1591 = vld [vmem:[%s1577 + $0x68] sm:$0xff]
    %v1592 = vld [vmem:[%s1577 + $0x70] sm:$0xff]
    %v1593 = vld [vmem:[%s1577 + $0x78] sm:$0xff]
    %1594 = vmatprep.subr.mxu0 0.0
    %1595 = vmatpush1.msra.mxu0 %v1593
    %1596 = vmatprep.subr.mxu0 0.0
    %1597 = vmatpush1.msra.mxu0 %v1592
    %1598 = vmatprep.subr.mxu0 0.0
    %1599 = vmatpush1.msra.mxu0 %v1591
    %1600 = vmatprep.subr.mxu0 0.0
    %1601 = vmatpush1.msra.mxu0 %v1590
    %1602 = vmatprep.subr.mxu0 0.0
    %1603 = vmatpush1.msra.mxu0 %v1589
    %1604 = vmatprep.subr.mxu0 0.0
    %1605 = vmatpush1.msra.mxu0 %v1588
    %1606 = vmatprep.subr.mxu0 0.0
    %1607 = vmatpush1.msra.mxu0 %v1587
    %1608 = vmatprep.subr.mxu0 0.0
    %1609 = vmatpush1.msra.mxu0 %v1586
    %1610 = vmatprep.subr.mxu0 0.0
    %1611 = vmatpush1.msra.mxu0 %v1585
    %1612 = vmatprep.subr.mxu0 0.0
    %1613 = vmatpush1.msra.mxu0 %v1584
    %1614 = vmatprep.subr.mxu0 0.0
    %1615 = vmatpush1.msra.mxu0 %v1583
    %1616 = vmatprep.subr.mxu0 0.0
    %1617 = vmatpush1.msra.mxu0 %v1582
    %1618 = vmatprep.subr.mxu0 0.0
    %1619 = vmatpush1.msra.mxu0 %v1581
    %1620 = vmatprep.subr.mxu0 0.0
    %1621 = vmatpush1.msra.mxu0 %v1580
    %1622 = vmatprep.subr.mxu0 0.0
    %1623 = vmatpush1.msra.mxu0 %v1579
    %1624 = vmatprep.subr.mxu0 0.0
    %1625 = vmatpush1.msra.mxu0 %v1578
    %1626 = vmatprep.subr.mxu0 0.0
    %1627 = vmatpush2.msra.mxu0 0.0
    %1628 = vmatprep.subr.mxu0 0.0
    %1629 = vmatpush2.msra.mxu0 0.0
    %1630 = vmatprep.subr.mxu0 0.0
    %1631 = vmatpush2.msra.mxu0 0.0
    %1632 = vmatprep.subr.mxu0 0.0
    %1633 = vmatpush2.msra.mxu0 0.0
    %1634 = vmatprep.subr.mxu0 0.0
    %1635 = vmatpush2.msra.mxu0 0.0
    %1636 = vmatprep.subr.mxu0 0.0
    %1637 = vmatpush2.msra.mxu0 0.0
    %1638 = vmatprep.subr.mxu0 0.0
    %1639 = vmatpush2.msra.mxu0 0.0
    %1640 = vmatprep.subr.mxu0 0.0
    %1641 = vmatpush2.msra.mxu0 0.0
    %1642 = vmatprep.subr.mxu0 0.0
    %1643 = vmatpush2.msra.mxu0 0.0
    %1644 = vmatprep.subr.mxu0 0.0
    %1645 = vmatpush2.msra.mxu0 0.0
    %1646 = vmatprep.subr.mxu0 0.0
    %1647 = vmatpush2.msra.mxu0 0.0
    %1648 = vmatprep.subr.mxu0 0.0
    %1649 = vmatpush2.msra.mxu0 0.0
    %1650 = vmatprep.subr.mxu0 0.0
    %1651 = vmatpush2.msra.mxu0 0.0
    %1652 = vmatprep.subr.mxu0 0.0
    %1653 = vmatpush2.msra.mxu0 0.0
    %1654 = vmatprep.subr.mxu0 0.0
    %1655 = vmatpush2.msra.mxu0 0.0
    %1656 = vmatprep.subr.mxu0 0.0
    %1657 = vmatpush2.msra.mxu0 0.0
    %1658 = vmatprep.mubr.f32.mxu0 0.0
    %1659 = vmatmul.mubr.f32.gmra.mxu0 %v1576
    %v1660 = vpop.f32.mrf.mxu0
    %v1661 = vadd.f32 0.0, %v1660
    %v1662 = vpop.f32.mrf.mxu0
    %1663 = vdwg.mxu0
    %v1664 = vadd.f32 %v1272, %v1661
    %v1665 = vld [vmem:[#allocation2 + $0x20] sm:$0xff]
    %s1666 = scalar_lea.vmem [#allocation5], 1024
    %v1667 = vld [vmem:[%s1666] sm:$0xff]
    %v1668 = vld [vmem:[%s1666 + $0x8] sm:$0xff]
    %v1669 = vld [vmem:[%s1666 + $0x10] sm:$0xff]
    %v1670 = vld [vmem:[%s1666 + $0x18] sm:$0xff]
    %v1671 = vld [vmem:[%s1666 + $0x20] sm:$0xff]
    %v1672 = vld [vmem:[%s1666 + $0x28] sm:$0xff]
    %v1673 = vld [vmem:[%s1666 + $0x30] sm:$0xff]
    %v1674 = vld [vmem:[%s1666 + $0x38] sm:$0xff]
    %v1675 = vld [vmem:[%s1666 + $0x40] sm:$0xff]
    %v1676 = vld [vmem:[%s1666 + $0x48] sm:$0xff]
    %v1677 = vld [vmem:[%s1666 + $0x50] sm:$0xff]
    %v1678 = vld [vmem:[%s1666 + $0x58] sm:$0xff]
    %v1679 = vld [vmem:[%s1666 + $0x60] sm:$0xff]
    %v1680 = vld [vmem:[%s1666 + $0x68] sm:$0xff]
    %v1681 = vld [vmem:[%s1666 + $0x70] sm:$0xff]
    %v1682 = vld [vmem:[%s1666 + $0x78] sm:$0xff]
    %v1683 = vld [vmem:[%s1666 + $0x80] sm:$0xff]
    %v1684 = vld [vmem:[%s1666 + $0x88] sm:$0xff]
    %v1685 = vld [vmem:[%s1666 + $0x90] sm:$0xff]
    %v1686 = vld [vmem:[%s1666 + $0x98] sm:$0xff]
    %v1687 = vld [vmem:[%s1666 + $0xa0] sm:$0xff]
    %v1688 = vld [vmem:[%s1666 + $0xa8] sm:$0xff]
    %v1689 = vld [vmem:[%s1666 + $0xb0] sm:$0xff]
    %v1690 = vld [vmem:[%s1666 + $0xb8] sm:$0xff]
    %v1691 = vld [vmem:[%s1666 + $0xc0] sm:$0xff]
    %v1692 = vld [vmem:[%s1666 + $0xc8] sm:$0xff]
    %v1693 = vld [vmem:[%s1666 + $0xd0] sm:$0xff]
    %v1694 = vld [vmem:[%s1666 + $0xd8] sm:$0xff]
    %v1695 = vld [vmem:[%s1666 + $0xe0] sm:$0xff]
    %v1696 = vld [vmem:[%s1666 + $0xe8] sm:$0xff]
    %v1697 = vld [vmem:[%s1666 + $0xf0] sm:$0xff]
    %v1698 = vld [vmem:[%s1666 + $0xf8] sm:$0xff]
    %s1699 = scalar_lea.vmem [#allocation7], 4
    %v1700 = vld [vmem:[%s1699] ss:$8 sm:$0x3]
    %v1702 = vlaneseq
    %v1703 = vshrl.u32 %v1702, 7
    %v1704 = vsub.s32 0, %v1703
    %v1705 = vrot.slane %v1700, %v1704
    %v1706 = vlaneseq
    %v1707 = vshrl.u32 %v1706, 7
    %v1708 = vsub.s32 1, %v1707
    %v1709 = vrot.slane %v1700, %v1708
    %1712 = vmatprep.subr.mxu0 %v1698
    %1713 = vmatpush1.msra.mxu0 %v1697
    %1714 = vmatprep.subr.mxu0 %v1696
    %1715 = vmatpush1.msra.mxu0 %v1695
    %1716 = vmatprep.subr.mxu0 %v1694
    %1717 = vmatpush1.msra.mxu0 %v1693
    %1718 = vmatprep.subr.mxu0 %v1692
    %1719 = vmatpush1.msra.mxu0 %v1691
    %1720 = vmatprep.subr.mxu0 %v1690
    %1721 = vmatpush1.msra.mxu0 %v1689
    %1722 = vmatprep.subr.mxu0 %v1688
    %1723 = vmatpush1.msra.mxu0 %v1687
    %1724 = vmatprep.subr.mxu0 %v1686
    %1725 = vmatpush1.msra.mxu0 %v1685
    %1726 = vmatprep.subr.mxu0 %v1684
    %1727 = vmatpush1.msra.mxu0 %v1683
    %1728 = vmatprep.subr.mxu0 %v1682
    %1729 = vmatpush1.msra.mxu0 %v1681
    %1730 = vmatprep.subr.mxu0 %v1680
    %1731 = vmatpush1.msra.mxu0 %v1679
    %1732 = vmatprep.subr.mxu0 %v1678
    %1733 = vmatpush1.msra.mxu0 %v1677
    %1734 = vmatprep.subr.mxu0 %v1676
    %1735 = vmatpush1.msra.mxu0 %v1675
    %1736 = vmatprep.subr.mxu0 %v1674
    %1737 = vmatpush1.msra.mxu0 %v1673
    %1738 = vmatprep.subr.mxu0 %v1672
    %1739 = vmatpush1.msra.mxu0 %v1671
    %1740 = vmatprep.subr.mxu0 %v1670
    %1741 = vmatpush1.msra.mxu0 %v1669
    %1742 = vmatprep.subr.mxu0 %v1668
    %1743 = vmatpush1.msra.mxu0 %v1667
    %1744 = vmatprep.subr.mxu0 0.0
    %1745 = vmatpush2.msra.mxu0 0.0
    %1746 = vmatprep.subr.mxu0 0.0
    %1747 = vmatpush2.msra.mxu0 0.0
    %1748 = vmatprep.subr.mxu0 0.0
    %1749 = vmatpush2.msra.mxu0 0.0
    %1750 = vmatprep.subr.mxu0 0.0
    %1751 = vmatpush2.msra.mxu0 0.0
    %1752 = vmatprep.subr.mxu0 0.0
    %1753 = vmatpush2.msra.mxu0 0.0
    %1754 = vmatprep.subr.mxu0 0.0
    %1755 = vmatpush2.msra.mxu0 0.0
    %1756 = vmatprep.subr.mxu0 0.0
    %1757 = vmatpush2.msra.mxu0 0.0
    %1758 = vmatprep.subr.mxu0 0.0
    %1759 = vmatpush2.msra.mxu0 0.0
    %1760 = vmatprep.subr.mxu0 0.0
    %1761 = vmatpush2.msra.mxu0 0.0
    %1762 = vmatprep.subr.mxu0 0.0
    %1763 = vmatpush2.msra.mxu0 0.0
    %1764 = vmatprep.subr.mxu0 0.0
    %1765 = vmatpush2.msra.mxu0 0.0
    %1766 = vmatprep.subr.mxu0 0.0
    %1767 = vmatpush2.msra.mxu0 0.0
    %1768 = vmatprep.subr.mxu0 0.0
    %1769 = vmatpush2.msra.mxu0 0.0
    %1770 = vmatprep.subr.mxu0 0.0
    %1771 = vmatpush2.msra.mxu0 0.0
    %1772 = vmatprep.subr.mxu0 0.0
    %1773 = vmatpush2.msra.mxu0 0.0
    %1774 = vmatprep.subr.mxu0 0.0
    %1775 = vmatpush2.msra.mxu0 0.0
    %1776 = vmatprep.mubr.f32.mxu0 0.0
    %1777 = vmatmul.mubr.f32.gmra.mxu0 %v1665
    %v1778 = vpop.f32.mrf.mxu0
    %v1779 = vadd.f32 %v1705, %v1778
    %v1780 = vpop.f32.mrf.mxu0
    %v1781 = vadd.f32 %v1709, %v1780
    %1782 = vdwg.mxu0
    %v1783 = vmul.f32 %v1779, 0.5
    %v1784 = vmul.f32 %v1781, 0.5
    %v1785 = vmul.f32 %v1779, 0.70710677
    %v1786 = vmul.f32 %v1781, 0.70710677
    %vm1787 = vcmp.ge.f32.partialorder %v1785, 0.0
    %vm1788 = vcmp.ge.f32.partialorder %v1786, 0.0
    %v1789 = vsel %vm1787, 1.0, -1.0
    %v1790 = vsel %vm1788, 1.0, -1.0
    %v1791 = vand.u32 2147483647, %v1785
    %v1792 = vand.u32 2147483647, %v1786
    %v1793 = vmul.f32 %v1791, 0.3275911
    %v1794 = vmul.f32 %v1792, 0.3275911
    %v1795 = vadd.f32 %v1793, 1.0
    %v1796 = vadd.f32 %v1794, 1.0
    %v1797 = vrcp.pop %v1795
    %v1798 = vrcp.pop %v1796
    %v1799 = vmul.f32 %v1797, 1.0614054
    %v1800 = vmul.f32 %v1798, 1.0614054
    %v1801 = vadd.f32 %v1799, -1.4531521
    %v1802 = vadd.f32 %v1800, -1.4531521
    %v1803 = vmul.f32 %v1801, %v1797
    %v1804 = vmul.f32 %v1802, %v1798
    %v1805 = vadd.f32 %v1803, 1.4214138
    %v1806 = vadd.f32 %v1804, 1.4214138
    %v1807 = vmul.f32 %v1805, %v1797
    %v1808 = vmul.f32 %v1806, %v1798
    %v1809 = vadd.f32 %v1807, -0.28449672
    %v1810 = vadd.f32 %v1808, -0.28449672
    %v1811 = vmul.f32 %v1809, %v1797
    %v1812 = vmul.f32 %v1810, %v1798
    %v1813 = vadd.f32 %v1811, 0.2548296
    %v1814 = vadd.f32 %v1812, 0.2548296
    %v1815 = vmul.f32 %v1813, %v1797
    %v1816 = vmul.f32 %v1814, %v1798
    %v1817 = vsub.f32 0.0, %v1791
    %v1818 = vsub.f32 0.0, %v1792
    %v1819 = vmul.f32 %v1817, %v1791
    %v1820 = vmul.f32 %v1818, %v1792
    %v1821 = vmul.f32 %v1819, 1.442695
    %v1822 = vpow.pop %v1821
    %v1823 = vmul.f32 %v1820, 1.442695
    %v1824 = vpow.pop %v1823
    %v1825 = vmul.f32 %v1815, %v1822
    %v1826 = vmul.f32 %v1816, %v1824
    %v1827 = vsub.f32 1.0, %v1825
    %v1828 = vsub.f32 1.0, %v1826
    %v1829 = vmul.f32 %v1789, %v1827
    %v1830 = vmul.f32 %v1790, %v1828
    %v1831 = vadd.f32 %v1829, 1.0
    %v1832 = vadd.f32 %v1830, 1.0
    %v1833 = vmul.f32 %v1783, %v1831
    %v1834 = vmul.f32 %v1784, %v1832
    %s1835 = scalar_lea.vmem [#allocation8], 1024
    %v1836 = vld [vmem:[%s1835] sm:$0xff]
    %v1837 = vld [vmem:[%s1835 + $0x8] sm:$0xff]
    %v1838 = vld [vmem:[%s1835 + $0x10] sm:$0xff]
    %v1839 = vld [vmem:[%s1835 + $0x18] sm:$0xff]
    %v1840 = vld [vmem:[%s1835 + $0x20] sm:$0xff]
    %v1841 = vld [vmem:[%s1835 + $0x28] sm:$0xff]
    %v1842 = vld [vmem:[%s1835 + $0x30] sm:$0xff]
    %v1843 = vld [vmem:[%s1835 + $0x38] sm:$0xff]
    %v1844 = vld [vmem:[%s1835 + $0x40] sm:$0xff]
    %v1845 = vld [vmem:[%s1835 + $0x48] sm:$0xff]
    %v1846 = vld [vmem:[%s1835 + $0x50] sm:$0xff]
    %v1847 = vld [vmem:[%s1835 + $0x58] sm:$0xff]
    %v1848 = vld [vmem:[%s1835 + $0x60] sm:$0xff]
    %v1849 = vld [vmem:[%s1835 + $0x68] sm:$0xff]
    %v1850 = vld [vmem:[%s1835 + $0x70] sm:$0xff]
    %v1851 = vld [vmem:[%s1835 + $0x78] sm:$0xff]
    %v1852 = vld [vmem:[%s1835 + $0x80] sm:$0xff]
    %v1853 = vld [vmem:[%s1835 + $0x88] sm:$0xff]
    %v1854 = vld [vmem:[%s1835 + $0x90] sm:$0xff]
    %v1855 = vld [vmem:[%s1835 + $0x98] sm:$0xff]
    %v1856 = vld [vmem:[%s1835 + $0xa0] sm:$0xff]
    %v1857 = vld [vmem:[%s1835 + $0xa8] sm:$0xff]
    %v1858 = vld [vmem:[%s1835 + $0xb0] sm:$0xff]
    %v1859 = vld [vmem:[%s1835 + $0xb8] sm:$0xff]
    %v1860 = vld [vmem:[%s1835 + $0xc0] sm:$0xff]
    %v1861 = vld [vmem:[%s1835 + $0xc8] sm:$0xff]
    %v1862 = vld [vmem:[%s1835 + $0xd0] sm:$0xff]
    %v1863 = vld [vmem:[%s1835 + $0xd8] sm:$0xff]
    %v1864 = vld [vmem:[%s1835 + $0xe0] sm:$0xff]
    %v1865 = vld [vmem:[%s1835 + $0xe8] sm:$0xff]
    %v1866 = vld [vmem:[%s1835 + $0xf0] sm:$0xff]
    %v1867 = vld [vmem:[%s1835 + $0xf8] sm:$0xff]
    %v1868 = vld [vmem:[#allocation10 + $0x4] sm:$0x1]
    %v1869 = vlaneseq
    %v1870 = vshrl.u32 %v1869, 7
    %v1871 = vsub.s32 0, %v1870
    %v1872 = vrot.slane %v1868, %v1871
    %1873 = vmatprep.subr.mxu0 0.0
    %1874 = vmatpush1.msra.mxu0 %v1851
    %1875 = vmatprep.subr.mxu0 0.0
    %1876 = vmatpush1.msra.mxu0 %v1850
    %1877 = vmatprep.subr.mxu0 0.0
    %1878 = vmatpush1.msra.mxu0 %v1849
    %1879 = vmatprep.subr.mxu0 0.0
    %1880 = vmatpush1.msra.mxu0 %v1848
    %1881 = vmatprep.subr.mxu0 0.0
    %1882 = vmatpush1.msra.mxu0 %v1847
    %1883 = vmatprep.subr.mxu0 0.0
    %1884 = vmatpush1.msra.mxu0 %v1846
    %1885 = vmatprep.subr.mxu0 0.0
    %1886 = vmatpush1.msra.mxu0 %v1845
    %1887 = vmatprep.subr.mxu0 0.0
    %1888 = vmatpush1.msra.mxu0 %v1844
    %1889 = vmatprep.subr.mxu0 0.0
    %1890 = vmatpush1.msra.mxu0 %v1843
    %1891 = vmatprep.subr.mxu0 0.0
    %1892 = vmatpush1.msra.mxu0 %v1842
    %1893 = vmatprep.subr.mxu0 0.0
    %1894 = vmatpush1.msra.mxu0 %v1841
    %1895 = vmatprep.subr.mxu0 0.0
    %1896 = vmatpush1.msra.mxu0 %v1840
    %1897 = vmatprep.subr.mxu0 0.0
    %1898 = vmatpush1.msra.mxu0 %v1839
    %1899 = vmatprep.subr.mxu0 0.0
    %1900 = vmatpush1.msra.mxu0 %v1838
    %1901 = vmatprep.subr.mxu0 0.0
    %1902 = vmatpush1.msra.mxu0 %v1837
    %1903 = vmatprep.subr.mxu0 0.0
    %1904 = vmatpush1.msra.mxu0 %v1836
    %1905 = vmatprep.subr.mxu0 0.0
    %1906 = vmatpush2.msra.mxu0 %v1867
    %1907 = vmatprep.subr.mxu0 0.0
    %1908 = vmatpush2.msra.mxu0 %v1866
    %1909 = vmatprep.subr.mxu0 0.0
    %1910 = vmatpush2.msra.mxu0 %v1865
    %1911 = vmatprep.subr.mxu0 0.0
    %1912 = vmatpush2.msra.mxu0 %v1864
    %1913 = vmatprep.subr.mxu0 0.0
    %1914 = vmatpush2.msra.mxu0 %v1863
    %1915 = vmatprep.subr.mxu0 0.0
    %1916 = vmatpush2.msra.mxu0 %v1862
    %1917 = vmatprep.subr.mxu0 0.0
    %1918 = vmatpush2.msra.mxu0 %v1861
    %1919 = vmatprep.subr.mxu0 0.0
    %1920 = vmatpush2.msra.mxu0 %v1860
    %1921 = vmatprep.subr.mxu0 0.0
    %1922 = vmatpush2.msra.mxu0 %v1859
    %1923 = vmatprep.subr.mxu0 0.0
    %1924 = vmatpush2.msra.mxu0 %v1858
    %1925 = vmatprep.subr.mxu0 0.0
    %1926 = vmatpush2.msra.mxu0 %v1857
    %1927 = vmatprep.subr.mxu0 0.0
    %1928 = vmatpush2.msra.mxu0 %v1856
    %1929 = vmatprep.subr.mxu0 0.0
    %1930 = vmatpush2.msra.mxu0 %v1855
    %1931 = vmatprep.subr.mxu0 0.0
    %1932 = vmatpush2.msra.mxu0 %v1854
    %1933 = vmatprep.subr.mxu0 0.0
    %1934 = vmatpush2.msra.mxu0 %v1853
    %1935 = vmatprep.subr.mxu0 0.0
    %1936 = vmatpush2.msra.mxu0 %v1852
    %1937 = vmatprep.mubr.f32.mxu0 %v1834
    %1938 = vmatmul.mubr.f32.gmra.mxu0 %v1833
    %v1939 = vpop.f32.mrf.mxu0
    %v1940 = vadd.f32 %v1872, %v1939
    %v1941 = vpop.f32.mrf.mxu0
    %1942 = vdwg.mxu0
    %v1943 = vmul.f32 %v1940, 0.5
    %v1944 = vmul.f32 %v1940, 0.70710677
    %vm1945 = vcmp.ge.f32.partialorder %v1944, 0.0
    %v1946 = vsel %vm1945, 1.0, -1.0
    %v1947 = vand.u32 2147483647, %v1944
    %v1948 = vmul.f32 %v1947, 0.3275911
    %v1949 = vadd.f32 %v1948, 1.0
    %v1950 = vrcp.pop %v1949
    %v1951 = vmul.f32 %v1950, 1.0614054
    %v1952 = vadd.f32 %v1951, -1.4531521
    %v1953 = vmul.f32 %v1952, %v1950
    %v1954 = vadd.f32 %v1953, 1.4214138
    %v1955 = vmul.f32 %v1954, %v1950
    %v1956 = vadd.f32 %v1955, -0.28449672
    %v1957 = vmul.f32 %v1956, %v1950
    %v1958 = vadd.f32 %v1957, 0.2548296
    %v1959 = vmul.f32 %v1958, %v1950
    %v1960 = vsub.f32 0.0, %v1947
    %v1961 = vmul.f32 %v1960, %v1947
    %v1962 = vmul.f32 %v1961, 1.442695
    %v1963 = vpow.pop %v1962
    %v1964 = vmul.f32 %v1959, %v1963
    %v1965 = vsub.f32 1.0, %v1964
    %v1966 = vmul.f32 %v1946, %v1965
    %v1967 = vadd.f32 %v1966, 1.0
    %v1968 = vmul.f32 %v1943, %v1967
    %s1969 = scalar_lea.vmem [#allocation11], 512
    %v1970 = vld [vmem:[%s1969] sm:$0xff]
    %v1971 = vld [vmem:[%s1969 + $0x8] sm:$0xff]
    %v1972 = vld [vmem:[%s1969 + $0x10] sm:$0xff]
    %v1973 = vld [vmem:[%s1969 + $0x18] sm:$0xff]
    %v1974 = vld [vmem:[%s1969 + $0x20] sm:$0xff]
    %v1975 = vld [vmem:[%s1969 + $0x28] sm:$0xff]
    %v1976 = vld [vmem:[%s1969 + $0x30] sm:$0xff]
    %v1977 = vld [vmem:[%s1969 + $0x38] sm:$0xff]
    %v1978 = vld [vmem:[%s1969 + $0x40] sm:$0xff]
    %v1979 = vld [vmem:[%s1969 + $0x48] sm:$0xff]
    %v1980 = vld [vmem:[%s1969 + $0x50] sm:$0xff]
    %v1981 = vld [vmem:[%s1969 + $0x58] sm:$0xff]
    %v1982 = vld [vmem:[%s1969 + $0x60] sm:$0xff]
    %v1983 = vld [vmem:[%s1969 + $0x68] sm:$0xff]
    %v1984 = vld [vmem:[%s1969 + $0x70] sm:$0xff]
    %v1985 = vld [vmem:[%s1969 + $0x78] sm:$0xff]
    %1986 = vmatprep.subr.mxu0 0.0
    %1987 = vmatpush1.msra.mxu0 %v1985
    %1988 = vmatprep.subr.mxu0 0.0
    %1989 = vmatpush1.msra.mxu0 %v1984
    %1990 = vmatprep.subr.mxu0 0.0
    %1991 = vmatpush1.msra.mxu0 %v1983
    %1992 = vmatprep.subr.mxu0 0.0
    %1993 = vmatpush1.msra.mxu0 %v1982
    %1994 = vmatprep.subr.mxu0 0.0
    %1995 = vmatpush1.msra.mxu0 %v1981
    %1996 = vmatprep.subr.mxu0 0.0
    %1997 = vmatpush1.msra.mxu0 %v1980
    %1998 = vmatprep.subr.mxu0 0.0
    %1999 = vmatpush1.msra.mxu0 %v1979
    %2000 = vmatprep.subr.mxu0 0.0
    %2001 = vmatpush1.msra.mxu0 %v1978
    %2002 = vmatprep.subr.mxu0 0.0
    %2003 = vmatpush1.msra.mxu0 %v1977
    %2004 = vmatprep.subr.mxu0 0.0
    %2005 = vmatpush1.msra.mxu0 %v1976
    %2006 = vmatprep.subr.mxu0 0.0
    %2007 = vmatpush1.msra.mxu0 %v1975
    %2008 = vmatprep.subr.mxu0 0.0
    %2009 = vmatpush1.msra.mxu0 %v1974
    %2010 = vmatprep.subr.mxu0 0.0
    %2011 = vmatpush1.msra.mxu0 %v1973
    %2012 = vmatprep.subr.mxu0 0.0
    %2013 = vmatpush1.msra.mxu0 %v1972
    %2014 = vmatprep.subr.mxu0 0.0
    %2015 = vmatpush1.msra.mxu0 %v1971
    %2016 = vmatprep.subr.mxu0 0.0
    %2017 = vmatpush1.msra.mxu0 %v1970
    %2018 = vmatprep.subr.mxu0 0.0
    %2019 = vmatpush2.msra.mxu0 0.0
    %2020 = vmatprep.subr.mxu0 0.0
    %2021 = vmatpush2.msra.mxu0 0.0
    %2022 = vmatprep.subr.mxu0 0.0
    %2023 = vmatpush2.msra.mxu0 0.0
    %2024 = vmatprep.subr.mxu0 0.0
    %2025 = vmatpush2.msra.mxu0 0.0
    %2026 = vmatprep.subr.mxu0 0.0
    %2027 = vmatpush2.msra.mxu0 0.0
    %2028 = vmatprep.subr.mxu0 0.0
    %2029 = vmatpush2.msra.mxu0 0.0
    %2030 = vmatprep.subr.mxu0 0.0
    %2031 = vmatpush2.msra.mxu0 0.0
    %2032 = vmatprep.subr.mxu0 0.0
    %2033 = vmatpush2.msra.mxu0 0.0
    %2034 = vmatprep.subr.mxu0 0.0
    %2035 = vmatpush2.msra.mxu0 0.0
    %2036 = vmatprep.subr.mxu0 0.0
    %2037 = vmatpush2.msra.mxu0 0.0
    %2038 = vmatprep.subr.mxu0 0.0
    %2039 = vmatpush2.msra.mxu0 0.0
    %2040 = vmatprep.subr.mxu0 0.0
    %2041 = vmatpush2.msra.mxu0 0.0
    %2042 = vmatprep.subr.mxu0 0.0
    %2043 = vmatpush2.msra.mxu0 0.0
    %2044 = vmatprep.subr.mxu0 0.0
    %2045 = vmatpush2.msra.mxu0 0.0
    %2046 = vmatprep.subr.mxu0 0.0
    %2047 = vmatpush2.msra.mxu0 0.0
    %2048 = vmatprep.subr.mxu0 0.0
    %2049 = vmatpush2.msra.mxu0 0.0
    %2050 = vmatprep.mubr.f32.mxu0 0.0
    %2051 = vmatmul.mubr.f32.gmra.mxu0 %v1968
    %v2052 = vpop.f32.mrf.mxu0
    %v2053 = vadd.f32 0.0, %v2052
    %v2054 = vpop.f32.mrf.mxu0
    %2055 = vdwg.mxu0
    %v2056 = vadd.f32 %v1664, %v2053
    %v2057 = vld [vmem:[#allocation2 + $0x28] sm:$0xff]
    %s2058 = scalar_lea.vmem [#allocation5], 1280
    %v2059 = vld [vmem:[%s2058] sm:$0xff]
    %v2060 = vld [vmem:[%s2058 + $0x8] sm:$0xff]
    %v2061 = vld [vmem:[%s2058 + $0x10] sm:$0xff]
    %v2062 = vld [vmem:[%s2058 + $0x18] sm:$0xff]
    %v2063 = vld [vmem:[%s2058 + $0x20] sm:$0xff]
    %v2064 = vld [vmem:[%s2058 + $0x28] sm:$0xff]
    %v2065 = vld [vmem:[%s2058 + $0x30] sm:$0xff]
    %v2066 = vld [vmem:[%s2058 + $0x38] sm:$0xff]
    %v2067 = vld [vmem:[%s2058 + $0x40] sm:$0xff]
    %v2068 = vld [vmem:[%s2058 + $0x48] sm:$0xff]
    %v2069 = vld [vmem:[%s2058 + $0x50] sm:$0xff]
    %v2070 = vld [vmem:[%s2058 + $0x58] sm:$0xff]
    %v2071 = vld [vmem:[%s2058 + $0x60] sm:$0xff]
    %v2072 = vld [vmem:[%s2058 + $0x68] sm:$0xff]
    %v2073 = vld [vmem:[%s2058 + $0x70] sm:$0xff]
    %v2074 = vld [vmem:[%s2058 + $0x78] sm:$0xff]
    %v2075 = vld [vmem:[%s2058 + $0x80] sm:$0xff]
    %v2076 = vld [vmem:[%s2058 + $0x88] sm:$0xff]
    %v2077 = vld [vmem:[%s2058 + $0x90] sm:$0xff]
    %v2078 = vld [vmem:[%s2058 + $0x98] sm:$0xff]
    %v2079 = vld [vmem:[%s2058 + $0xa0] sm:$0xff]
    %v2080 = vld [vmem:[%s2058 + $0xa8] sm:$0xff]
    %v2081 = vld [vmem:[%s2058 + $0xb0] sm:$0xff]
    %v2082 = vld [vmem:[%s2058 + $0xb8] sm:$0xff]
    %v2083 = vld [vmem:[%s2058 + $0xc0] sm:$0xff]
    %v2084 = vld [vmem:[%s2058 + $0xc8] sm:$0xff]
    %v2085 = vld [vmem:[%s2058 + $0xd0] sm:$0xff]
    %v2086 = vld [vmem:[%s2058 + $0xd8] sm:$0xff]
    %v2087 = vld [vmem:[%s2058 + $0xe0] sm:$0xff]
    %v2088 = vld [vmem:[%s2058 + $0xe8] sm:$0xff]
    %v2089 = vld [vmem:[%s2058 + $0xf0] sm:$0xff]
    %v2090 = vld [vmem:[%s2058 + $0xf8] sm:$0xff]
    %s2091 = scalar_lea.vmem [#allocation7], 5
    %v2092 = vld [vmem:[%s2091] ss:$8 sm:$0x3]
    %v2094 = vlaneseq
    %v2095 = vshrl.u32 %v2094, 7
    %v2096 = vsub.s32 0, %v2095
    %v2097 = vrot.slane %v2092, %v2096
    %v2098 = vlaneseq
    %v2099 = vshrl.u32 %v2098, 7
    %v2100 = vsub.s32 1, %v2099
    %v2101 = vrot.slane %v2092, %v2100
    %2104 = vmatprep.subr.mxu0 %v2090
    %2105 = vmatpush1.msra.mxu0 %v2089
    %2106 = vmatprep.subr.mxu0 %v2088
    %2107 = vmatpush1.msra.mxu0 %v2087
    %2108 = vmatprep.subr.mxu0 %v2086
    %2109 = vmatpush1.msra.mxu0 %v2085
    %2110 = vmatprep.subr.mxu0 %v2084
    %2111 = vmatpush1.msra.mxu0 %v2083
    %2112 = vmatprep.subr.mxu0 %v2082
    %2113 = vmatpush1.msra.mxu0 %v2081
    %2114 = vmatprep.subr.mxu0 %v2080
    %2115 = vmatpush1.msra.mxu0 %v2079
    %2116 = vmatprep.subr.mxu0 %v2078
    %2117 = vmatpush1.msra.mxu0 %v2077
    %2118 = vmatprep.subr.mxu0 %v2076
    %2119 = vmatpush1.msra.mxu0 %v2075
    %2120 = vmatprep.subr.mxu0 %v2074
    %2121 = vmatpush1.msra.mxu0 %v2073
    %2122 = vmatprep.subr.mxu0 %v2072
    %2123 = vmatpush1.msra.mxu0 %v2071
    %2124 = vmatprep.subr.mxu0 %v2070
    %2125 = vmatpush1.msra.mxu0 %v2069
    %2126 = vmatprep.subr.mxu0 %v2068
    %2127 = vmatpush1.msra.mxu0 %v2067
    %2128 = vmatprep.subr.mxu0 %v2066
    %2129 = vmatpush1.msra.mxu0 %v2065
    %2130 = vmatprep.subr.mxu0 %v2064
    %2131 = vmatpush1.msra.mxu0 %v2063
    %2132 = vmatprep.subr.mxu0 %v2062
    %2133 = vmatpush1.msra.mxu0 %v2061
    %2134 = vmatprep.subr.mxu0 %v2060
    %2135 = vmatpush1.msra.mxu0 %v2059
    %2136 = vmatprep.subr.mxu0 0.0
    %2137 = vmatpush2.msra.mxu0 0.0
    %2138 = vmatprep.subr.mxu0 0.0
    %2139 = vmatpush2.msra.mxu0 0.0
    %2140 = vmatprep.subr.mxu0 0.0
    %2141 = vmatpush2.msra.mxu0 0.0
    %2142 = vmatprep.subr.mxu0 0.0
    %2143 = vmatpush2.msra.mxu0 0.0
    %2144 = vmatprep.subr.mxu0 0.0
    %2145 = vmatpush2.msra.mxu0 0.0
    %2146 = vmatprep.subr.mxu0 0.0
    %2147 = vmatpush2.msra.mxu0 0.0
    %2148 = vmatprep.subr.mxu0 0.0
    %2149 = vmatpush2.msra.mxu0 0.0
    %2150 = vmatprep.subr.mxu0 0.0
    %2151 = vmatpush2.msra.mxu0 0.0
    %2152 = vmatprep.subr.mxu0 0.0
    %2153 = vmatpush2.msra.mxu0 0.0
    %2154 = vmatprep.subr.mxu0 0.0
    %2155 = vmatpush2.msra.mxu0 0.0
    %2156 = vmatprep.subr.mxu0 0.0
    %2157 = vmatpush2.msra.mxu0 0.0
    %2158 = vmatprep.subr.mxu0 0.0
    %2159 = vmatpush2.msra.mxu0 0.0
    %2160 = vmatprep.subr.mxu0 0.0
    %2161 = vmatpush2.msra.mxu0 0.0
    %2162 = vmatprep.subr.mxu0 0.0
    %2163 = vmatpush2.msra.mxu0 0.0
    %2164 = vmatprep.subr.mxu0 0.0
    %2165 = vmatpush2.msra.mxu0 0.0
    %2166 = vmatprep.subr.mxu0 0.0
    %2167 = vmatpush2.msra.mxu0 0.0
    %2168 = vmatprep.mubr.f32.mxu0 0.0
    %2169 = vmatmul.mubr.f32.gmra.mxu0 %v2057
    %v2170 = vpop.f32.mrf.mxu0
    %v2171 = vadd.f32 %v2097, %v2170
    %v2172 = vpop.f32.mrf.mxu0
    %v2173 = vadd.f32 %v2101, %v2172
    %2174 = vdwg.mxu0
    %v2175 = vmul.f32 %v2171, 0.5
    %v2176 = vmul.f32 %v2173, 0.5
    %v2177 = vmul.f32 %v2171, 0.70710677
    %v2178 = vmul.f32 %v2173, 0.70710677
    %vm2179 = vcmp.ge.f32.partialorder %v2177, 0.0
    %vm2180 = vcmp.ge.f32.partialorder %v2178, 0.0
    %v2181 = vsel %vm2179, 1.0, -1.0
    %v2182 = vsel %vm2180, 1.0, -1.0
    %v2183 = vand.u32 2147483647, %v2177
    %v2184 = vand.u32 2147483647, %v2178
    %v2185 = vmul.f32 %v2183, 0.3275911
    %v2186 = vmul.f32 %v2184, 0.3275911
    %v2187 = vadd.f32 %v2185, 1.0
    %v2188 = vadd.f32 %v2186, 1.0
    %v2189 = vrcp.pop %v2187
    %v2190 = vrcp.pop %v2188
    %v2191 = vmul.f32 %v2189, 1.0614054
    %v2192 = vmul.f32 %v2190, 1.0614054
    %v2193 = vadd.f32 %v2191, -1.4531521
    %v2194 = vadd.f32 %v2192, -1.4531521
    %v2195 = vmul.f32 %v2193, %v2189
    %v2196 = vmul.f32 %v2194, %v2190
    %v2197 = vadd.f32 %v2195, 1.4214138
    %v2198 = vadd.f32 %v2196, 1.4214138
    %v2199 = vmul.f32 %v2197, %v2189
    %v2200 = vmul.f32 %v2198, %v2190
    %v2201 = vadd.f32 %v2199, -0.28449672
    %v2202 = vadd.f32 %v2200, -0.28449672
    %v2203 = vmul.f32 %v2201, %v2189
    %v2204 = vmul.f32 %v2202, %v2190
    %v2205 = vadd.f32 %v2203, 0.2548296
    %v2206 = vadd.f32 %v2204, 0.2548296
    %v2207 = vmul.f32 %v2205, %v2189
    %v2208 = vmul.f32 %v2206, %v2190
    %v2209 = vsub.f32 0.0, %v2183
    %v2210 = vsub.f32 0.0, %v2184
    %v2211 = vmul.f32 %v2209, %v2183
    %v2212 = vmul.f32 %v2210, %v2184
    %v2213 = vmul.f32 %v2211, 1.442695
    %v2214 = vpow.pop %v2213
    %v2215 = vmul.f32 %v2212, 1.442695
    %v2216 = vpow.pop %v2215
    %v2217 = vmul.f32 %v2207, %v2214
    %v2218 = vmul.f32 %v2208, %v2216
    %v2219 = vsub.f32 1.0, %v2217
    %v2220 = vsub.f32 1.0, %v2218
    %v2221 = vmul.f32 %v2181, %v2219
    %v2222 = vmul.f32 %v2182, %v2220
    %v2223 = vadd.f32 %v2221, 1.0
    %v2224 = vadd.f32 %v2222, 1.0
    %v2225 = vmul.f32 %v2175, %v2223
    %v2226 = vmul.f32 %v2176, %v2224
    %s2227 = scalar_lea.vmem [#allocation8], 1280
    %v2228 = vld [vmem:[%s2227] sm:$0xff]
    %v2229 = vld [vmem:[%s2227 + $0x8] sm:$0xff]
    %v2230 = vld [vmem:[%s2227 + $0x10] sm:$0xff]
    %v2231 = vld [vmem:[%s2227 + $0x18] sm:$0xff]
    %v2232 = vld [vmem:[%s2227 + $0x20] sm:$0xff]
    %v2233 = vld [vmem:[%s2227 + $0x28] sm:$0xff]
    %v2234 = vld [vmem:[%s2227 + $0x30] sm:$0xff]
    %v2235 = vld [vmem:[%s2227 + $0x38] sm:$0xff]
    %v2236 = vld [vmem:[%s2227 + $0x40] sm:$0xff]
    %v2237 = vld [vmem:[%s2227 + $0x48] sm:$0xff]
    %v2238 = vld [vmem:[%s2227 + $0x50] sm:$0xff]
    %v2239 = vld [vmem:[%s2227 + $0x58] sm:$0xff]
    %v2240 = vld [vmem:[%s2227 + $0x60] sm:$0xff]
    %v2241 = vld [vmem:[%s2227 + $0x68] sm:$0xff]
    %v2242 = vld [vmem:[%s2227 + $0x70] sm:$0xff]
    %v2243 = vld [vmem:[%s2227 + $0x78] sm:$0xff]
    %v2244 = vld [vmem:[%s2227 + $0x80] sm:$0xff]
    %v2245 = vld [vmem:[%s2227 + $0x88] sm:$0xff]
    %v2246 = vld [vmem:[%s2227 + $0x90] sm:$0xff]
    %v2247 = vld [vmem:[%s2227 + $0x98] sm:$0xff]
    %v2248 = vld [vmem:[%s2227 + $0xa0] sm:$0xff]
    %v2249 = vld [vmem:[%s2227 + $0xa8] sm:$0xff]
    %v2250 = vld [vmem:[%s2227 + $0xb0] sm:$0xff]
    %v2251 = vld [vmem:[%s2227 + $0xb8] sm:$0xff]
    %v2252 = vld [vmem:[%s2227 + $0xc0] sm:$0xff]
    %v2253 = vld [vmem:[%s2227 + $0xc8] sm:$0xff]
    %v2254 = vld [vmem:[%s2227 + $0xd0] sm:$0xff]
    %v2255 = vld [vmem:[%s2227 + $0xd8] sm:$0xff]
    %v2256 = vld [vmem:[%s2227 + $0xe0] sm:$0xff]
    %v2257 = vld [vmem:[%s2227 + $0xe8] sm:$0xff]
    %v2258 = vld [vmem:[%s2227 + $0xf0] sm:$0xff]
    %v2259 = vld [vmem:[%s2227 + $0xf8] sm:$0xff]
    %v2260 = vld [vmem:[#allocation10 + $0x5] sm:$0x1]
    %v2261 = vlaneseq
    %v2262 = vshrl.u32 %v2261, 7
    %v2263 = vsub.s32 0, %v2262
    %v2264 = vrot.slane %v2260, %v2263
    %2265 = vmatprep.subr.mxu0 0.0
    %2266 = vmatpush1.msra.mxu0 %v2243
    %2267 = vmatprep.subr.mxu0 0.0
    %2268 = vmatpush1.msra.mxu0 %v2242
    %2269 = vmatprep.subr.mxu0 0.0
    %2270 = vmatpush1.msra.mxu0 %v2241
    %2271 = vmatprep.subr.mxu0 0.0
    %2272 = vmatpush1.msra.mxu0 %v2240
    %2273 = vmatprep.subr.mxu0 0.0
    %2274 = vmatpush1.msra.mxu0 %v2239
    %2275 = vmatprep.subr.mxu0 0.0
    %2276 = vmatpush1.msra.mxu0 %v2238
    %2277 = vmatprep.subr.mxu0 0.0
    %2278 = vmatpush1.msra.mxu0 %v2237
    %2279 = vmatprep.subr.mxu0 0.0
    %2280 = vmatpush1.msra.mxu0 %v2236
    %2281 = vmatprep.subr.mxu0 0.0
    %2282 = vmatpush1.msra.mxu0 %v2235
    %2283 = vmatprep.subr.mxu0 0.0
    %2284 = vmatpush1.msra.mxu0 %v2234
    %2285 = vmatprep.subr.mxu0 0.0
    %2286 = vmatpush1.msra.mxu0 %v2233
    %2287 = vmatprep.subr.mxu0 0.0
    %2288 = vmatpush1.msra.mxu0 %v2232
    %2289 = vmatprep.subr.mxu0 0.0
    %2290 = vmatpush1.msra.mxu0 %v2231
    %2291 = vmatprep.subr.mxu0 0.0
    %2292 = vmatpush1.msra.mxu0 %v2230
    %2293 = vmatprep.subr.mxu0 0.0
    %2294 = vmatpush1.msra.mxu0 %v2229
    %2295 = vmatprep.subr.mxu0 0.0
    %2296 = vmatpush1.msra.mxu0 %v2228
    %2297 = vmatprep.subr.mxu0 0.0
    %2298 = vmatpush2.msra.mxu0 %v2259
    %2299 = vmatprep.subr.mxu0 0.0
    %2300 = vmatpush2.msra.mxu0 %v2258
    %2301 = vmatprep.subr.mxu0 0.0
    %2302 = vmatpush2.msra.mxu0 %v2257
    %2303 = vmatprep.subr.mxu0 0.0
    %2304 = vmatpush2.msra.mxu0 %v2256
    %2305 = vmatprep.subr.mxu0 0.0
    %2306 = vmatpush2.msra.mxu0 %v2255
    %2307 = vmatprep.subr.mxu0 0.0
    %2308 = vmatpush2.msra.mxu0 %v2254
    %2309 = vmatprep.subr.mxu0 0.0
    %2310 = vmatpush2.msra.mxu0 %v2253
    %2311 = vmatprep.subr.mxu0 0.0
    %2312 = vmatpush2.msra.mxu0 %v2252
    %2313 = vmatprep.subr.mxu0 0.0
    %2314 = vmatpush2.msra.mxu0 %v2251
    %2315 = vmatprep.subr.mxu0 0.0
    %2316 = vmatpush2.msra.mxu0 %v2250
    %2317 = vmatprep.subr.mxu0 0.0
    %2318 = vmatpush2.msra.mxu0 %v2249
    %2319 = vmatprep.subr.mxu0 0.0
    %2320 = vmatpush2.msra.mxu0 %v2248
    %2321 = vmatprep.subr.mxu0 0.0
    %2322 = vmatpush2.msra.mxu0 %v2247
    %2323 = vmatprep.subr.mxu0 0.0
    %2324 = vmatpush2.msra.mxu0 %v2246
    %2325 = vmatprep.subr.mxu0 0.0
    %2326 = vmatpush2.msra.mxu0 %v2245
    %2327 = vmatprep.subr.mxu0 0.0
    %2328 = vmatpush2.msra.mxu0 %v2244
    %2329 = vmatprep.mubr.f32.mxu0 %v2226
    %2330 = vmatmul.mubr.f32.gmra.mxu0 %v2225
    %v2331 = vpop.f32.mrf.mxu0
    %v2332 = vadd.f32 %v2264, %v2331
    %v2333 = vpop.f32.mrf.mxu0
    %2334 = vdwg.mxu0
    %v2335 = vmul.f32 %v2332, 0.5
    %v2336 = vmul.f32 %v2332, 0.70710677
    %vm2337 = vcmp.ge.f32.partialorder %v2336, 0.0
    %v2338 = vsel %vm2337, 1.0, -1.0
    %v2339 = vand.u32 2147483647, %v2336
    %v2340 = vmul.f32 %v2339, 0.3275911
    %v2341 = vadd.f32 %v2340, 1.0
    %v2342 = vrcp.pop %v2341
    %v2343 = vmul.f32 %v2342, 1.0614054
    %v2344 = vadd.f32 %v2343, -1.4531521
    %v2345 = vmul.f32 %v2344, %v2342
    %v2346 = vadd.f32 %v2345, 1.4214138
    %v2347 = vmul.f32 %v2346, %v2342
    %v2348 = vadd.f32 %v2347, -0.28449672
    %v2349 = vmul.f32 %v2348, %v2342
    %v2350 = vadd.f32 %v2349, 0.2548296
    %v2351 = vmul.f32 %v2350, %v2342
    %v2352 = vsub.f32 0.0, %v2339
    %v2353 = vmul.f32 %v2352, %v2339
    %v2354 = vmul.f32 %v2353, 1.442695
    %v2355 = vpow.pop %v2354
    %v2356 = vmul.f32 %v2351, %v2355
    %v2357 = vsub.f32 1.0, %v2356
    %v2358 = vmul.f32 %v2338, %v2357
    %v2359 = vadd.f32 %v2358, 1.0
    %v2360 = vmul.f32 %v2335, %v2359
    %s2361 = scalar_lea.vmem [#allocation11], 640
    %v2362 = vld [vmem:[%s2361] sm:$0xff]
    %v2363 = vld [vmem:[%s2361 + $0x8] sm:$0xff]
    %v2364 = vld [vmem:[%s2361 + $0x10] sm:$0xff]
    %v2365 = vld [vmem:[%s2361 + $0x18] sm:$0xff]
    %v2366 = vld [vmem:[%s2361 + $0x20] sm:$0xff]
    %v2367 = vld [vmem:[%s2361 + $0x28] sm:$0xff]
    %v2368 = vld [vmem:[%s2361 + $0x30] sm:$0xff]
    %v2369 = vld [vmem:[%s2361 + $0x38] sm:$0xff]
    %v2370 = vld [vmem:[%s2361 + $0x40] sm:$0xff]
    %v2371 = vld [vmem:[%s2361 + $0x48] sm:$0xff]
    %v2372 = vld [vmem:[%s2361 + $0x50] sm:$0xff]
    %v2373 = vld [vmem:[%s2361 + $0x58] sm:$0xff]
    %v2374 = vld [vmem:[%s2361 + $0x60] sm:$0xff]
    %v2375 = vld [vmem:[%s2361 + $0x68] sm:$0xff]
    %v2376 = vld [vmem:[%s2361 + $0x70] sm:$0xff]
    %v2377 = vld [vmem:[%s2361 + $0x78] sm:$0xff]
    %2378 = vmatprep.subr.mxu0 0.0
    %2379 = vmatpush1.msra.mxu0 %v2377
    %2380 = vmatprep.subr.mxu0 0.0
    %2381 = vmatpush1.msra.mxu0 %v2376
    %2382 = vmatprep.subr.mxu0 0.0
    %2383 = vmatpush1.msra.mxu0 %v2375
    %2384 = vmatprep.subr.mxu0 0.0
    %2385 = vmatpush1.msra.mxu0 %v2374
    %2386 = vmatprep.subr.mxu0 0.0
    %2387 = vmatpush1.msra.mxu0 %v2373
    %2388 = vmatprep.subr.mxu0 0.0
    %2389 = vmatpush1.msra.mxu0 %v2372
    %2390 = vmatprep.subr.mxu0 0.0
    %2391 = vmatpush1.msra.mxu0 %v2371
    %2392 = vmatprep.subr.mxu0 0.0
    %2393 = vmatpush1.msra.mxu0 %v2370
    %2394 = vmatprep.subr.mxu0 0.0
    %2395 = vmatpush1.msra.mxu0 %v2369
    %2396 = vmatprep.subr.mxu0 0.0
    %2397 = vmatpush1.msra.mxu0 %v2368
    %2398 = vmatprep.subr.mxu0 0.0
    %2399 = vmatpush1.msra.mxu0 %v2367
    %2400 = vmatprep.subr.mxu0 0.0
    %2401 = vmatpush1.msra.mxu0 %v2366
    %2402 = vmatprep.subr.mxu0 0.0
    %2403 = vmatpush1.msra.mxu0 %v2365
    %2404 = vmatprep.subr.mxu0 0.0
    %2405 = vmatpush1.msra.mxu0 %v2364
    %2406 = vmatprep.subr.mxu0 0.0
    %2407 = vmatpush1.msra.mxu0 %v2363
    %2408 = vmatprep.subr.mxu0 0.0
    %2409 = vmatpush1.msra.mxu0 %v2362
    %2410 = vmatprep.subr.mxu0 0.0
    %2411 = vmatpush2.msra.mxu0 0.0
    %2412 = vmatprep.subr.mxu0 0.0
    %2413 = vmatpush2.msra.mxu0 0.0
    %2414 = vmatprep.subr.mxu0 0.0
    %2415 = vmatpush2.msra.mxu0 0.0
    %2416 = vmatprep.subr.mxu0 0.0
    %2417 = vmatpush2.msra.mxu0 0.0
    %2418 = vmatprep.subr.mxu0 0.0
    %2419 = vmatpush2.msra.mxu0 0.0
    %2420 = vmatprep.subr.mxu0 0.0
    %2421 = vmatpush2.msra.mxu0 0.0
    %2422 = vmatprep.subr.mxu0 0.0
    %2423 = vmatpush2.msra.mxu0 0.0
    %2424 = vmatprep.subr.mxu0 0.0
    %2425 = vmatpush2.msra.mxu0 0.0
    %2426 = vmatprep.subr.mxu0 0.0
    %2427 = vmatpush2.msra.mxu0 0.0
    %2428 = vmatprep.subr.mxu0 0.0
    %2429 = vmatpush2.msra.mxu0 0.0
    %2430 = vmatprep.subr.mxu0 0.0
    %2431 = vmatpush2.msra.mxu0 0.0
    %2432 = vmatprep.subr.mxu0 0.0
    %2433 = vmatpush2.msra.mxu0 0.0
    %2434 = vmatprep.subr.mxu0 0.0
    %2435 = vmatpush2.msra.mxu0 0.0
    %2436 = vmatprep.subr.mxu0 0.0
    %2437 = vmatpush2.msra.mxu0 0.0
    %2438 = vmatprep.subr.mxu0 0.0
    %2439 = vmatpush2.msra.mxu0 0.0
    %2440 = vmatprep.subr.mxu0 0.0
    %2441 = vmatpush2.msra.mxu0 0.0
    %2442 = vmatprep.mubr.f32.mxu0 0.0
    %2443 = vmatmul.mubr.f32.gmra.mxu0 %v2360
    %v2444 = vpop.f32.mrf.mxu0
    %v2445 = vadd.f32 0.0, %v2444
    %v2446 = vpop.f32.mrf.mxu0
    %2447 = vdwg.mxu0
    %v2448 = vadd.f32 %v2056, %v2445
    %v2449 = vld [vmem:[#allocation2 + $0x30] sm:$0xff]
    %s2450 = scalar_lea.vmem [#allocation5], 1536
    %v2451 = vld [vmem:[%s2450] sm:$0xff]
    %v2452 = vld [vmem:[%s2450 + $0x8] sm:$0xff]
    %v2453 = vld [vmem:[%s2450 + $0x10] sm:$0xff]
    %v2454 = vld [vmem:[%s2450 + $0x18] sm:$0xff]
    %v2455 = vld [vmem:[%s2450 + $0x20] sm:$0xff]
    %v2456 = vld [vmem:[%s2450 + $0x28] sm:$0xff]
    %v2457 = vld [vmem:[%s2450 + $0x30] sm:$0xff]
    %v2458 = vld [vmem:[%s2450 + $0x38] sm:$0xff]
    %v2459 = vld [vmem:[%s2450 + $0x40] sm:$0xff]
    %v2460 = vld [vmem:[%s2450 + $0x48] sm:$0xff]
    %v2461 = vld [vmem:[%s2450 + $0x50] sm:$0xff]
    %v2462 = vld [vmem:[%s2450 + $0x58] sm:$0xff]
    %v2463 = vld [vmem:[%s2450 + $0x60] sm:$0xff]
    %v2464 = vld [vmem:[%s2450 + $0x68] sm:$0xff]
    %v2465 = vld [vmem:[%s2450 + $0x70] sm:$0xff]
    %v2466 = vld [vmem:[%s2450 + $0x78] sm:$0xff]
    %v2467 = vld [vmem:[%s2450 + $0x80] sm:$0xff]
    %v2468 = vld [vmem:[%s2450 + $0x88] sm:$0xff]
    %v2469 = vld [vmem:[%s2450 + $0x90] sm:$0xff]
    %v2470 = vld [vmem:[%s2450 + $0x98] sm:$0xff]
    %v2471 = vld [vmem:[%s2450 + $0xa0] sm:$0xff]
    %v2472 = vld [vmem:[%s2450 + $0xa8] sm:$0xff]
    %v2473 = vld [vmem:[%s2450 + $0xb0] sm:$0xff]
    %v2474 = vld [vmem:[%s2450 + $0xb8] sm:$0xff]
    %v2475 = vld [vmem:[%s2450 + $0xc0] sm:$0xff]
    %v2476 = vld [vmem:[%s2450 + $0xc8] sm:$0xff]
    %v2477 = vld [vmem:[%s2450 + $0xd0] sm:$0xff]
    %v2478 = vld [vmem:[%s2450 + $0xd8] sm:$0xff]
    %v2479 = vld [vmem:[%s2450 + $0xe0] sm:$0xff]
    %v2480 = vld [vmem:[%s2450 + $0xe8] sm:$0xff]
    %v2481 = vld [vmem:[%s2450 + $0xf0] sm:$0xff]
    %v2482 = vld [vmem:[%s2450 + $0xf8] sm:$0xff]
    %s2483 = scalar_lea.vmem [#allocation7], 6
    %v2484 = vld [vmem:[%s2483] ss:$8 sm:$0x3]
    %v2486 = vlaneseq
    %v2487 = vshrl.u32 %v2486, 7
    %v2488 = vsub.s32 0, %v2487
    %v2489 = vrot.slane %v2484, %v2488
    %v2490 = vlaneseq
    %v2491 = vshrl.u32 %v2490, 7
    %v2492 = vsub.s32 1, %v2491
    %v2493 = vrot.slane %v2484, %v2492
    %2496 = vmatprep.subr.mxu0 %v2482
    %2497 = vmatpush1.msra.mxu0 %v2481
    %2498 = vmatprep.subr.mxu0 %v2480
    %2499 = vmatpush1.msra.mxu0 %v2479
    %2500 = vmatprep.subr.mxu0 %v2478
    %2501 = vmatpush1.msra.mxu0 %v2477
    %2502 = vmatprep.subr.mxu0 %v2476
    %2503 = vmatpush1.msra.mxu0 %v2475
    %2504 = vmatprep.subr.mxu0 %v2474
    %2505 = vmatpush1.msra.mxu0 %v2473
    %2506 = vmatprep.subr.mxu0 %v2472
    %2507 = vmatpush1.msra.mxu0 %v2471
    %2508 = vmatprep.subr.mxu0 %v2470
    %2509 = vmatpush1.msra.mxu0 %v2469
    %2510 = vmatprep.subr.mxu0 %v2468
    %2511 = vmatpush1.msra.mxu0 %v2467
    %2512 = vmatprep.subr.mxu0 %v2466
    %2513 = vmatpush1.msra.mxu0 %v2465
    %2514 = vmatprep.subr.mxu0 %v2464
    %2515 = vmatpush1.msra.mxu0 %v2463
    %2516 = vmatprep.subr.mxu0 %v2462
    %2517 = vmatpush1.msra.mxu0 %v2461
    %2518 = vmatprep.subr.mxu0 %v2460
    %2519 = vmatpush1.msra.mxu0 %v2459
    %2520 = vmatprep.subr.mxu0 %v2458
    %2521 = vmatpush1.msra.mxu0 %v2457
    %2522 = vmatprep.subr.mxu0 %v2456
    %2523 = vmatpush1.msra.mxu0 %v2455
    %2524 = vmatprep.subr.mxu0 %v2454
    %2525 = vmatpush1.msra.mxu0 %v2453
    %2526 = vmatprep.subr.mxu0 %v2452
    %2527 = vmatpush1.msra.mxu0 %v2451
    %2528 = vmatprep.subr.mxu0 0.0
    %2529 = vmatpush2.msra.mxu0 0.0
    %2530 = vmatprep.subr.mxu0 0.0
    %2531 = vmatpush2.msra.mxu0 0.0
    %2532 = vmatprep.subr.mxu0 0.0
    %2533 = vmatpush2.msra.mxu0 0.0
    %2534 = vmatprep.subr.mxu0 0.0
    %2535 = vmatpush2.msra.mxu0 0.0
    %2536 = vmatprep.subr.mxu0 0.0
    %2537 = vmatpush2.msra.mxu0 0.0
    %2538 = vmatprep.subr.mxu0 0.0
    %2539 = vmatpush2.msra.mxu0 0.0
    %2540 = vmatprep.subr.mxu0 0.0
    %2541 = vmatpush2.msra.mxu0 0.0
    %2542 = vmatprep.subr.mxu0 0.0
    %2543 = vmatpush2.msra.mxu0 0.0
    %2544 = vmatprep.subr.mxu0 0.0
    %2545 = vmatpush2.msra.mxu0 0.0
    %2546 = vmatprep.subr.mxu0 0.0
    %2547 = vmatpush2.msra.mxu0 0.0
    %2548 = vmatprep.subr.mxu0 0.0
    %2549 = vmatpush2.msra.mxu0 0.0
    %2550 = vmatprep.subr.mxu0 0.0
    %2551 = vmatpush2.msra.mxu0 0.0
    %2552 = vmatprep.subr.mxu0 0.0
    %2553 = vmatpush2.msra.mxu0 0.0
    %2554 = vmatprep.subr.mxu0 0.0
    %2555 = vmatpush2.msra.mxu0 0.0
    %2556 = vmatprep.subr.mxu0 0.0
    %2557 = vmatpush2.msra.mxu0 0.0
    %2558 = vmatprep.subr.mxu0 0.0
    %2559 = vmatpush2.msra.mxu0 0.0
    %2560 = vmatprep.mubr.f32.mxu0 0.0
    %2561 = vmatmul.mubr.f32.gmra.mxu0 %v2449
    %v2562 = vpop.f32.mrf.mxu0
    %v2563 = vadd.f32 %v2489, %v2562
    %v2564 = vpop.f32.mrf.mxu0
    %v2565 = vadd.f32 %v2493, %v2564
    %2566 = vdwg.mxu0
    %v2567 = vmul.f32 %v2563, 0.5
    %v2568 = vmul.f32 %v2565, 0.5
    %v2569 = vmul.f32 %v2563, 0.70710677
    %v2570 = vmul.f32 %v2565, 0.70710677
    %vm2571 = vcmp.ge.f32.partialorder %v2569, 0.0
    %vm2572 = vcmp.ge.f32.partialorder %v2570, 0.0
    %v2573 = vsel %vm2571, 1.0, -1.0
    %v2574 = vsel %vm2572, 1.0, -1.0
    %v2575 = vand.u32 2147483647, %v2569
    %v2576 = vand.u32 2147483647, %v2570
    %v2577 = vmul.f32 %v2575, 0.3275911
    %v2578 = vmul.f32 %v2576, 0.3275911
    %v2579 = vadd.f32 %v2577, 1.0
    %v2580 = vadd.f32 %v2578, 1.0
    %v2581 = vrcp.pop %v2579
    %v2582 = vrcp.pop %v2580
    %v2583 = vmul.f32 %v2581, 1.0614054
    %v2584 = vmul.f32 %v2582, 1.0614054
    %v2585 = vadd.f32 %v2583, -1.4531521
    %v2586 = vadd.f32 %v2584, -1.4531521
    %v2587 = vmul.f32 %v2585, %v2581
    %v2588 = vmul.f32 %v2586, %v2582
    %v2589 = vadd.f32 %v2587, 1.4214138
    %v2590 = vadd.f32 %v2588, 1.4214138
    %v2591 = vmul.f32 %v2589, %v2581
    %v2592 = vmul.f32 %v2590, %v2582
    %v2593 = vadd.f32 %v2591, -0.28449672
    %v2594 = vadd.f32 %v2592, -0.28449672
    %v2595 = vmul.f32 %v2593, %v2581
    %v2596 = vmul.f32 %v2594, %v2582
    %v2597 = vadd.f32 %v2595, 0.2548296
    %v2598 = vadd.f32 %v2596, 0.2548296
    %v2599 = vmul.f32 %v2597, %v2581
    %v2600 = vmul.f32 %v2598, %v2582
    %v2601 = vsub.f32 0.0, %v2575
    %v2602 = vsub.f32 0.0, %v2576
    %v2603 = vmul.f32 %v2601, %v2575
    %v2604 = vmul.f32 %v2602, %v2576
    %v2605 = vmul.f32 %v2603, 1.442695
    %v2606 = vpow.pop %v2605
    %v2607 = vmul.f32 %v2604, 1.442695
    %v2608 = vpow.pop %v2607
    %v2609 = vmul.f32 %v2599, %v2606
    %v2610 = vmul.f32 %v2600, %v2608
    %v2611 = vsub.f32 1.0, %v2609
    %v2612 = vsub.f32 1.0, %v2610
    %v2613 = vmul.f32 %v2573, %v2611
    %v2614 = vmul.f32 %v2574, %v2612
    %v2615 = vadd.f32 %v2613, 1.0
    %v2616 = vadd.f32 %v2614, 1.0
    %v2617 = vmul.f32 %v2567, %v2615
    %v2618 = vmul.f32 %v2568, %v2616
    %s2619 = scalar_lea.vmem [#allocation8], 1536
    %v2620 = vld [vmem:[%s2619] sm:$0xff]
    %v2621 = vld [vmem:[%s2619 + $0x8] sm:$0xff]
    %v2622 = vld [vmem:[%s2619 + $0x10] sm:$0xff]
    %v2623 = vld [vmem:[%s2619 + $0x18] sm:$0xff]
    %v2624 = vld [vmem:[%s2619 + $0x20] sm:$0xff]
    %v2625 = vld [vmem:[%s2619 + $0x28] sm:$0xff]
    %v2626 = vld [vmem:[%s2619 + $0x30] sm:$0xff]
    %v2627 = vld [vmem:[%s2619 + $0x38] sm:$0xff]
    %v2628 = vld [vmem:[%s2619 + $0x40] sm:$0xff]
    %v2629 = vld [vmem:[%s2619 + $0x48] sm:$0xff]
    %v2630 = vld [vmem:[%s2619 + $0x50] sm:$0xff]
    %v2631 = vld [vmem:[%s2619 + $0x58] sm:$0xff]
    %v2632 = vld [vmem:[%s2619 + $0x60] sm:$0xff]
    %v2633 = vld [vmem:[%s2619 + $0x68] sm:$0xff]
    %v2634 = vld [vmem:[%s2619 + $0x70] sm:$0xff]
    %v2635 = vld [vmem:[%s2619 + $0x78] sm:$0xff]
    %v2636 = vld [vmem:[%s2619 + $0x80] sm:$0xff]
    %v2637 = vld [vmem:[%s2619 + $0x88] sm:$0xff]
    %v2638 = vld [vmem:[%s2619 + $0x90] sm:$0xff]
    %v2639 = vld [vmem:[%s2619 + $0x98] sm:$0xff]
    %v2640 = vld [vmem:[%s2619 + $0xa0] sm:$0xff]
    %v2641 = vld [vmem:[%s2619 + $0xa8] sm:$0xff]
    %v2642 = vld [vmem:[%s2619 + $0xb0] sm:$0xff]
    %v2643 = vld [vmem:[%s2619 + $0xb8] sm:$0xff]
    %v2644 = vld [vmem:[%s2619 + $0xc0] sm:$0xff]
    %v2645 = vld [vmem:[%s2619 + $0xc8] sm:$0xff]
    %v2646 = vld [vmem:[%s2619 + $0xd0] sm:$0xff]
    %v2647 = vld [vmem:[%s2619 + $0xd8] sm:$0xff]
    %v2648 = vld [vmem:[%s2619 + $0xe0] sm:$0xff]
    %v2649 = vld [vmem:[%s2619 + $0xe8] sm:$0xff]
    %v2650 = vld [vmem:[%s2619 + $0xf0] sm:$0xff]
    %v2651 = vld [vmem:[%s2619 + $0xf8] sm:$0xff]
    %v2652 = vld [vmem:[#allocation10 + $0x6] sm:$0x1]
    %v2653 = vlaneseq
    %v2654 = vshrl.u32 %v2653, 7
    %v2655 = vsub.s32 0, %v2654
    %v2656 = vrot.slane %v2652, %v2655
    %2657 = vmatprep.subr.mxu0 0.0
    %2658 = vmatpush1.msra.mxu0 %v2635
    %2659 = vmatprep.subr.mxu0 0.0
    %2660 = vmatpush1.msra.mxu0 %v2634
    %2661 = vmatprep.subr.mxu0 0.0
    %2662 = vmatpush1.msra.mxu0 %v2633
    %2663 = vmatprep.subr.mxu0 0.0
    %2664 = vmatpush1.msra.mxu0 %v2632
    %2665 = vmatprep.subr.mxu0 0.0
    %2666 = vmatpush1.msra.mxu0 %v2631
    %2667 = vmatprep.subr.mxu0 0.0
    %2668 = vmatpush1.msra.mxu0 %v2630
    %2669 = vmatprep.subr.mxu0 0.0
    %2670 = vmatpush1.msra.mxu0 %v2629
    %2671 = vmatprep.subr.mxu0 0.0
    %2672 = vmatpush1.msra.mxu0 %v2628
    %2673 = vmatprep.subr.mxu0 0.0
    %2674 = vmatpush1.msra.mxu0 %v2627
    %2675 = vmatprep.subr.mxu0 0.0
    %2676 = vmatpush1.msra.mxu0 %v2626
    %2677 = vmatprep.subr.mxu0 0.0
    %2678 = vmatpush1.msra.mxu0 %v2625
    %2679 = vmatprep.subr.mxu0 0.0
    %2680 = vmatpush1.msra.mxu0 %v2624
    %2681 = vmatprep.subr.mxu0 0.0
    %2682 = vmatpush1.msra.mxu0 %v2623
    %2683 = vmatprep.subr.mxu0 0.0
    %2684 = vmatpush1.msra.mxu0 %v2622
    %2685 = vmatprep.subr.mxu0 0.0
    %2686 = vmatpush1.msra.mxu0 %v2621
    %2687 = vmatprep.subr.mxu0 0.0
    %2688 = vmatpush1.msra.mxu0 %v2620
    %2689 = vmatprep.subr.mxu0 0.0
    %2690 = vmatpush2.msra.mxu0 %v2651
    %2691 = vmatprep.subr.mxu0 0.0
    %2692 = vmatpush2.msra.mxu0 %v2650
    %2693 = vmatprep.subr.mxu0 0.0
    %2694 = vmatpush2.msra.mxu0 %v2649
    %2695 = vmatprep.subr.mxu0 0.0
    %2696 = vmatpush2.msra.mxu0 %v2648
    %2697 = vmatprep.subr.mxu0 0.0
    %2698 = vmatpush2.msra.mxu0 %v2647
    %2699 = vmatprep.subr.mxu0 0.0
    %2700 = vmatpush2.msra.mxu0 %v2646
    %2701 = vmatprep.subr.mxu0 0.0
    %2702 = vmatpush2.msra.mxu0 %v2645
    %2703 = vmatprep.subr.mxu0 0.0
    %2704 = vmatpush2.msra.mxu0 %v2644
    %2705 = vmatprep.subr.mxu0 0.0
    %2706 = vmatpush2.msra.mxu0 %v2643
    %2707 = vmatprep.subr.mxu0 0.0
    %2708 = vmatpush2.msra.mxu0 %v2642
    %2709 = vmatprep.subr.mxu0 0.0
    %2710 = vmatpush2.msra.mxu0 %v2641
    %2711 = vmatprep.subr.mxu0 0.0
    %2712 = vmatpush2.msra.mxu0 %v2640
    %2713 = vmatprep.subr.mxu0 0.0
    %2714 = vmatpush2.msra.mxu0 %v2639
    %2715 = vmatprep.subr.mxu0 0.0
    %2716 = vmatpush2.msra.mxu0 %v2638
    %2717 = vmatprep.subr.mxu0 0.0
    %2718 = vmatpush2.msra.mxu0 %v2637
    %2719 = vmatprep.subr.mxu0 0.0
    %2720 = vmatpush2.msra.mxu0 %v2636
    %2721 = vmatprep.mubr.f32.mxu0 %v2618
    %2722 = vmatmul.mubr.f32.gmra.mxu0 %v2617
    %v2723 = vpop.f32.mrf.mxu0
    %v2724 = vadd.f32 %v2656, %v2723
    %v2725 = vpop.f32.mrf.mxu0
    %2726 = vdwg.mxu0
    %v2727 = vmul.f32 %v2724, 0.5
    %v2728 = vmul.f32 %v2724, 0.70710677
    %vm2729 = vcmp.ge.f32.partialorder %v2728, 0.0
    %v2730 = vsel %vm2729, 1.0, -1.0
    %v2731 = vand.u32 2147483647, %v2728
    %v2732 = vmul.f32 %v2731, 0.3275911
    %v2733 = vadd.f32 %v2732, 1.0
    %v2734 = vrcp.pop %v2733
    %v2735 = vmul.f32 %v2734, 1.0614054
    %v2736 = vadd.f32 %v2735, -1.4531521
    %v2737 = vmul.f32 %v2736, %v2734
    %v2738 = vadd.f32 %v2737, 1.4214138
    %v2739 = vmul.f32 %v2738, %v2734
    %v2740 = vadd.f32 %v2739, -0.28449672
    %v2741 = vmul.f32 %v2740, %v2734
    %v2742 = vadd.f32 %v2741, 0.2548296
    %v2743 = vmul.f32 %v2742, %v2734
    %v2744 = vsub.f32 0.0, %v2731
    %v2745 = vmul.f32 %v2744, %v2731
    %v2746 = vmul.f32 %v2745, 1.442695
    %v2747 = vpow.pop %v2746
    %v2748 = vmul.f32 %v2743, %v2747
    %v2749 = vsub.f32 1.0, %v2748
    %v2750 = vmul.f32 %v2730, %v2749
    %v2751 = vadd.f32 %v2750, 1.0
    %v2752 = vmul.f32 %v2727, %v2751
    %s2753 = scalar_lea.vmem [#allocation11], 768
    %v2754 = vld [vmem:[%s2753] sm:$0xff]
    %v2755 = vld [vmem:[%s2753 + $0x8] sm:$0xff]
    %v2756 = vld [vmem:[%s2753 + $0x10] sm:$0xff]
    %v2757 = vld [vmem:[%s2753 + $0x18] sm:$0xff]
    %v2758 = vld [vmem:[%s2753 + $0x20] sm:$0xff]
    %v2759 = vld [vmem:[%s2753 + $0x28] sm:$0xff]
    %v2760 = vld [vmem:[%s2753 + $0x30] sm:$0xff]
    %v2761 = vld [vmem:[%s2753 + $0x38] sm:$0xff]
    %v2762 = vld [vmem:[%s2753 + $0x40] sm:$0xff]
    %v2763 = vld [vmem:[%s2753 + $0x48] sm:$0xff]
    %v2764 = vld [vmem:[%s2753 + $0x50] sm:$0xff]
    %v2765 = vld [vmem:[%s2753 + $0x58] sm:$0xff]
    %v2766 = vld [vmem:[%s2753 + $0x60] sm:$0xff]
    %v2767 = vld [vmem:[%s2753 + $0x68] sm:$0xff]
    %v2768 = vld [vmem:[%s2753 + $0x70] sm:$0xff]
    %v2769 = vld [vmem:[%s2753 + $0x78] sm:$0xff]
    %2770 = vmatprep.subr.mxu0 0.0
    %2771 = vmatpush1.msra.mxu0 %v2769
    %2772 = vmatprep.subr.mxu0 0.0
    %2773 = vmatpush1.msra.mxu0 %v2768
    %2774 = vmatprep.subr.mxu0 0.0
    %2775 = vmatpush1.msra.mxu0 %v2767
    %2776 = vmatprep.subr.mxu0 0.0
    %2777 = vmatpush1.msra.mxu0 %v2766
    %2778 = vmatprep.subr.mxu0 0.0
    %2779 = vmatpush1.msra.mxu0 %v2765
    %2780 = vmatprep.subr.mxu0 0.0
    %2781 = vmatpush1.msra.mxu0 %v2764
    %2782 = vmatprep.subr.mxu0 0.0
    %2783 = vmatpush1.msra.mxu0 %v2763
    %2784 = vmatprep.subr.mxu0 0.0
    %2785 = vmatpush1.msra.mxu0 %v2762
    %2786 = vmatprep.subr.mxu0 0.0
    %2787 = vmatpush1.msra.mxu0 %v2761
    %2788 = vmatprep.subr.mxu0 0.0
    %2789 = vmatpush1.msra.mxu0 %v2760
    %2790 = vmatprep.subr.mxu0 0.0
    %2791 = vmatpush1.msra.mxu0 %v2759
    %2792 = vmatprep.subr.mxu0 0.0
    %2793 = vmatpush1.msra.mxu0 %v2758
    %2794 = vmatprep.subr.mxu0 0.0
    %2795 = vmatpush1.msra.mxu0 %v2757
    %2796 = vmatprep.subr.mxu0 0.0
    %2797 = vmatpush1.msra.mxu0 %v2756
    %2798 = vmatprep.subr.mxu0 0.0
    %2799 = vmatpush1.msra.mxu0 %v2755
    %2800 = vmatprep.subr.mxu0 0.0
    %2801 = vmatpush1.msra.mxu0 %v2754
    %2802 = vmatprep.subr.mxu0 0.0
    %2803 = vmatpush2.msra.mxu0 0.0
    %2804 = vmatprep.subr.mxu0 0.0
    %2805 = vmatpush2.msra.mxu0 0.0
    %2806 = vmatprep.subr.mxu0 0.0
    %2807 = vmatpush2.msra.mxu0 0.0
    %2808 = vmatprep.subr.mxu0 0.0
    %2809 = vmatpush2.msra.mxu0 0.0
    %2810 = vmatprep.subr.mxu0 0.0
    %2811 = vmatpush2.msra.mxu0 0.0
    %2812 = vmatprep.subr.mxu0 0.0
    %2813 = vmatpush2.msra.mxu0 0.0
    %2814 = vmatprep.subr.mxu0 0.0
    %2815 = vmatpush2.msra.mxu0 0.0
    %2816 = vmatprep.subr.mxu0 0.0
    %2817 = vmatpush2.msra.mxu0 0.0
    %2818 = vmatprep.subr.mxu0 0.0
    %2819 = vmatpush2.msra.mxu0 0.0
    %2820 = vmatprep.subr.mxu0 0.0
    %2821 = vmatpush2.msra.mxu0 0.0
    %2822 = vmatprep.subr.mxu0 0.0
    %2823 = vmatpush2.msra.mxu0 0.0
    %2824 = vmatprep.subr.mxu0 0.0
    %2825 = vmatpush2.msra.mxu0 0.0
    %2826 = vmatprep.subr.mxu0 0.0
    %2827 = vmatpush2.msra.mxu0 0.0
    %2828 = vmatprep.subr.mxu0 0.0
    %2829 = vmatpush2.msra.mxu0 0.0
    %2830 = vmatprep.subr.mxu0 0.0
    %2831 = vmatpush2.msra.mxu0 0.0
    %2832 = vmatprep.subr.mxu0 0.0
    %2833 = vmatpush2.msra.mxu0 0.0
    %2834 = vmatprep.mubr.f32.mxu0 0.0
    %2835 = vmatmul.mubr.f32.gmra.mxu0 %v2752
    %v2836 = vpop.f32.mrf.mxu0
    %v2837 = vadd.f32 0.0, %v2836
    %v2838 = vpop.f32.mrf.mxu0
    %2839 = vdwg.mxu0
    %v2840 = vadd.f32 %v2448, %v2837
    %v2841 = vld [vmem:[#allocation2 + $0x38] sm:$0xff]
    %s2842 = scalar_lea.vmem [#allocation5], 1792
    %v2843 = vld [vmem:[%s2842] sm:$0xff]
    %v2844 = vld [vmem:[%s2842 + $0x8] sm:$0xff]
    %v2845 = vld [vmem:[%s2842 + $0x10] sm:$0xff]
    %v2846 = vld [vmem:[%s2842 + $0x18] sm:$0xff]
    %v2847 = vld [vmem:[%s2842 + $0x20] sm:$0xff]
    %v2848 = vld [vmem:[%s2842 + $0x28] sm:$0xff]
    %v2849 = vld [vmem:[%s2842 + $0x30] sm:$0xff]
    %v2850 = vld [vmem:[%s2842 + $0x38] sm:$0xff]
    %v2851 = vld [vmem:[%s2842 + $0x40] sm:$0xff]
    %v2852 = vld [vmem:[%s2842 + $0x48] sm:$0xff]
    %v2853 = vld [vmem:[%s2842 + $0x50] sm:$0xff]
    %v2854 = vld [vmem:[%s2842 + $0x58] sm:$0xff]
    %v2855 = vld [vmem:[%s2842 + $0x60] sm:$0xff]
    %v2856 = vld [vmem:[%s2842 + $0x68] sm:$0xff]
    %v2857 = vld [vmem:[%s2842 + $0x70] sm:$0xff]
    %v2858 = vld [vmem:[%s2842 + $0x78] sm:$0xff]
    %v2859 = vld [vmem:[%s2842 + $0x80] sm:$0xff]
    %v2860 = vld [vmem:[%s2842 + $0x88] sm:$0xff]
    %v2861 = vld [vmem:[%s2842 + $0x90] sm:$0xff]
    %v2862 = vld [vmem:[%s2842 + $0x98] sm:$0xff]
    %v2863 = vld [vmem:[%s2842 + $0xa0] sm:$0xff]
    %v2864 = vld [vmem:[%s2842 + $0xa8] sm:$0xff]
    %v2865 = vld [vmem:[%s2842 + $0xb0] sm:$0xff]
    %v2866 = vld [vmem:[%s2842 + $0xb8] sm:$0xff]
    %v2867 = vld [vmem:[%s2842 + $0xc0] sm:$0xff]
    %v2868 = vld [vmem:[%s2842 + $0xc8] sm:$0xff]
    %v2869 = vld [vmem:[%s2842 + $0xd0] sm:$0xff]
    %v2870 = vld [vmem:[%s2842 + $0xd8] sm:$0xff]
    %v2871 = vld [vmem:[%s2842 + $0xe0] sm:$0xff]
    %v2872 = vld [vmem:[%s2842 + $0xe8] sm:$0xff]
    %v2873 = vld [vmem:[%s2842 + $0xf0] sm:$0xff]
    %v2874 = vld [vmem:[%s2842 + $0xf8] sm:$0xff]
    %s2875 = scalar_lea.vmem [#allocation7], 7
    %v2876 = vld [vmem:[%s2875] ss:$8 sm:$0x3]
    %v2878 = vlaneseq
    %v2879 = vshrl.u32 %v2878, 7
    %v2880 = vsub.s32 0, %v2879
    %v2881 = vrot.slane %v2876, %v2880
    %v2882 = vlaneseq
    %v2883 = vshrl.u32 %v2882, 7
    %v2884 = vsub.s32 1, %v2883
    %v2885 = vrot.slane %v2876, %v2884
    %2888 = vmatprep.subr.mxu0 %v2874
    %2889 = vmatpush1.msra.mxu0 %v2873
    %2890 = vmatprep.subr.mxu0 %v2872
    %2891 = vmatpush1.msra.mxu0 %v2871
    %2892 = vmatprep.subr.mxu0 %v2870
    %2893 = vmatpush1.msra.mxu0 %v2869
    %2894 = vmatprep.subr.mxu0 %v2868
    %2895 = vmatpush1.msra.mxu0 %v2867
    %2896 = vmatprep.subr.mxu0 %v2866
    %2897 = vmatpush1.msra.mxu0 %v2865
    %2898 = vmatprep.subr.mxu0 %v2864
    %2899 = vmatpush1.msra.mxu0 %v2863
    %2900 = vmatprep.subr.mxu0 %v2862
    %2901 = vmatpush1.msra.mxu0 %v2861
    %2902 = vmatprep.subr.mxu0 %v2860
    %2903 = vmatpush1.msra.mxu0 %v2859
    %2904 = vmatprep.subr.mxu0 %v2858
    %2905 = vmatpush1.msra.mxu0 %v2857
    %2906 = vmatprep.subr.mxu0 %v2856
    %2907 = vmatpush1.msra.mxu0 %v2855
    %2908 = vmatprep.subr.mxu0 %v2854
    %2909 = vmatpush1.msra.mxu0 %v2853
    %2910 = vmatprep.subr.mxu0 %v2852
    %2911 = vmatpush1.msra.mxu0 %v2851
    %2912 = vmatprep.subr.mxu0 %v2850
    %2913 = vmatpush1.msra.mxu0 %v2849
    %2914 = vmatprep.subr.mxu0 %v2848
    %2915 = vmatpush1.msra.mxu0 %v2847
    %2916 = vmatprep.subr.mxu0 %v2846
    %2917 = vmatpush1.msra.mxu0 %v2845
    %2918 = vmatprep.subr.mxu0 %v2844
    %2919 = vmatpush1.msra.mxu0 %v2843
    %2920 = vmatprep.subr.mxu0 0.0
    %2921 = vmatpush2.msra.mxu0 0.0
    %2922 = vmatprep.subr.mxu0 0.0
    %2923 = vmatpush2.msra.mxu0 0.0
    %2924 = vmatprep.subr.mxu0 0.0
    %2925 = vmatpush2.msra.mxu0 0.0
    %2926 = vmatprep.subr.mxu0 0.0
    %2927 = vmatpush2.msra.mxu0 0.0
    %2928 = vmatprep.subr.mxu0 0.0
    %2929 = vmatpush2.msra.mxu0 0.0
    %2930 = vmatprep.subr.mxu0 0.0
    %2931 = vmatpush2.msra.mxu0 0.0
    %2932 = vmatprep.subr.mxu0 0.0
    %2933 = vmatpush2.msra.mxu0 0.0
    %2934 = vmatprep.subr.mxu0 0.0
    %2935 = vmatpush2.msra.mxu0 0.0
    %2936 = vmatprep.subr.mxu0 0.0
    %2937 = vmatpush2.msra.mxu0 0.0
    %2938 = vmatprep.subr.mxu0 0.0
    %2939 = vmatpush2.msra.mxu0 0.0
    %2940 = vmatprep.subr.mxu0 0.0
    %2941 = vmatpush2.msra.mxu0 0.0
    %2942 = vmatprep.subr.mxu0 0.0
    %2943 = vmatpush2.msra.mxu0 0.0
    %2944 = vmatprep.subr.mxu0 0.0
    %2945 = vmatpush2.msra.mxu0 0.0
    %2946 = vmatprep.subr.mxu0 0.0
    %2947 = vmatpush2.msra.mxu0 0.0
    %2948 = vmatprep.subr.mxu0 0.0
    %2949 = vmatpush2.msra.mxu0 0.0
    %2950 = vmatprep.subr.mxu0 0.0
    %2951 = vmatpush2.msra.mxu0 0.0
    %2952 = vmatprep.mubr.f32.mxu0 0.0
    %2953 = vmatmul.mubr.f32.gmra.mxu0 %v2841
    %v2954 = vpop.f32.mrf.mxu0
    %v2955 = vadd.f32 %v2881, %v2954
    %v2956 = vpop.f32.mrf.mxu0
    %v2957 = vadd.f32 %v2885, %v2956
    %2958 = vdwg.mxu0
    %v2959 = vmul.f32 %v2955, 0.5
    %v2960 = vmul.f32 %v2957, 0.5
    %v2961 = vmul.f32 %v2955, 0.70710677
    %v2962 = vmul.f32 %v2957, 0.70710677
    %vm2963 = vcmp.ge.f32.partialorder %v2961, 0.0
    %vm2964 = vcmp.ge.f32.partialorder %v2962, 0.0
    %v2965 = vsel %vm2963, 1.0, -1.0
    %v2966 = vsel %vm2964, 1.0, -1.0
    %v2967 = vand.u32 2147483647, %v2961
    %v2968 = vand.u32 2147483647, %v2962
    %v2969 = vmul.f32 %v2967, 0.3275911
    %v2970 = vmul.f32 %v2968, 0.3275911
    %v2971 = vadd.f32 %v2969, 1.0
    %v2972 = vadd.f32 %v2970, 1.0
    %v2973 = vrcp.pop %v2971
    %v2974 = vrcp.pop %v2972
    %v2975 = vmul.f32 %v2973, 1.0614054
    %v2976 = vmul.f32 %v2974, 1.0614054
    %v2977 = vadd.f32 %v2975, -1.4531521
    %v2978 = vadd.f32 %v2976, -1.4531521
    %v2979 = vmul.f32 %v2977, %v2973
    %v2980 = vmul.f32 %v2978, %v2974
    %v2981 = vadd.f32 %v2979, 1.4214138
    %v2982 = vadd.f32 %v2980, 1.4214138
    %v2983 = vmul.f32 %v2981, %v2973
    %v2984 = vmul.f32 %v2982, %v2974
    %v2985 = vadd.f32 %v2983, -0.28449672
    %v2986 = vadd.f32 %v2984, -0.28449672
    %v2987 = vmul.f32 %v2985, %v2973
    %v2988 = vmul.f32 %v2986, %v2974
    %v2989 = vadd.f32 %v2987, 0.2548296
    %v2990 = vadd.f32 %v2988, 0.2548296
    %v2991 = vmul.f32 %v2989, %v2973
    %v2992 = vmul.f32 %v2990, %v2974
    %v2993 = vsub.f32 0.0, %v2967
    %v2994 = vsub.f32 0.0, %v2968
    %v2995 = vmul.f32 %v2993, %v2967
    %v2996 = vmul.f32 %v2994, %v2968
    %v2997 = vmul.f32 %v2995, 1.442695
    %v2998 = vpow.pop %v2997
    %v2999 = vmul.f32 %v2996, 1.442695
    %v3000 = vpow.pop %v2999
    %v3001 = vmul.f32 %v2991, %v2998
    %v3002 = vmul.f32 %v2992, %v3000
    %v3003 = vsub.f32 1.0, %v3001
    %v3004 = vsub.f32 1.0, %v3002
    %v3005 = vmul.f32 %v2965, %v3003
    %v3006 = vmul.f32 %v2966, %v3004
    %v3007 = vadd.f32 %v3005, 1.0
    %v3008 = vadd.f32 %v3006, 1.0
    %v3009 = vmul.f32 %v2959, %v3007
    %v3010 = vmul.f32 %v2960, %v3008
    %s3011 = scalar_lea.vmem [#allocation8], 1792
    %v3012 = vld [vmem:[%s3011] sm:$0xff]
    %v3013 = vld [vmem:[%s3011 + $0x8] sm:$0xff]
    %v3014 = vld [vmem:[%s3011 + $0x10] sm:$0xff]
    %v3015 = vld [vmem:[%s3011 + $0x18] sm:$0xff]
    %v3016 = vld [vmem:[%s3011 + $0x20] sm:$0xff]
    %v3017 = vld [vmem:[%s3011 + $0x28] sm:$0xff]
    %v3018 = vld [vmem:[%s3011 + $0x30] sm:$0xff]
    %v3019 = vld [vmem:[%s3011 + $0x38] sm:$0xff]
    %v3020 = vld [vmem:[%s3011 + $0x40] sm:$0xff]
    %v3021 = vld [vmem:[%s3011 + $0x48] sm:$0xff]
    %v3022 = vld [vmem:[%s3011 + $0x50] sm:$0xff]
    %v3023 = vld [vmem:[%s3011 + $0x58] sm:$0xff]
    %v3024 = vld [vmem:[%s3011 + $0x60] sm:$0xff]
    %v3025 = vld [vmem:[%s3011 + $0x68] sm:$0xff]
    %v3026 = vld [vmem:[%s3011 + $0x70] sm:$0xff]
    %v3027 = vld [vmem:[%s3011 + $0x78] sm:$0xff]
    %v3028 = vld [vmem:[%s3011 + $0x80] sm:$0xff]
    %v3029 = vld [vmem:[%s3011 + $0x88] sm:$0xff]
    %v3030 = vld [vmem:[%s3011 + $0x90] sm:$0xff]
    %v3031 = vld [vmem:[%s3011 + $0x98] sm:$0xff]
    %v3032 = vld [vmem:[%s3011 + $0xa0] sm:$0xff]
    %v3033 = vld [vmem:[%s3011 + $0xa8] sm:$0xff]
    %v3034 = vld [vmem:[%s3011 + $0xb0] sm:$0xff]
    %v3035 = vld [vmem:[%s3011 + $0xb8] sm:$0xff]
    %v3036 = vld [vmem:[%s3011 + $0xc0] sm:$0xff]
    %v3037 = vld [vmem:[%s3011 + $0xc8] sm:$0xff]
    %v3038 = vld [vmem:[%s3011 + $0xd0] sm:$0xff]
    %v3039 = vld [vmem:[%s3011 + $0xd8] sm:$0xff]
    %v3040 = vld [vmem:[%s3011 + $0xe0] sm:$0xff]
    %v3041 = vld [vmem:[%s3011 + $0xe8] sm:$0xff]
    %v3042 = vld [vmem:[%s3011 + $0xf0] sm:$0xff]
    %v3043 = vld [vmem:[%s3011 + $0xf8] sm:$0xff]
    %v3044 = vld [vmem:[#allocation10 + $0x7] sm:$0x1]
    %v3045 = vlaneseq
    %v3046 = vshrl.u32 %v3045, 7
    %v3047 = vsub.s32 0, %v3046
    %v3048 = vrot.slane %v3044, %v3047
    %3049 = vmatprep.subr.mxu0 0.0
    %3050 = vmatpush1.msra.mxu0 %v3027
    %3051 = vmatprep.subr.mxu0 0.0
    %3052 = vmatpush1.msra.mxu0 %v3026
    %3053 = vmatprep.subr.mxu0 0.0
    %3054 = vmatpush1.msra.mxu0 %v3025
    %3055 = vmatprep.subr.mxu0 0.0
    %3056 = vmatpush1.msra.mxu0 %v3024
    %3057 = vmatprep.subr.mxu0 0.0
    %3058 = vmatpush1.msra.mxu0 %v3023
    %3059 = vmatprep.subr.mxu0 0.0
    %3060 = vmatpush1.msra.mxu0 %v3022
    %3061 = vmatprep.subr.mxu0 0.0
    %3062 = vmatpush1.msra.mxu0 %v3021
    %3063 = vmatprep.subr.mxu0 0.0
    %3064 = vmatpush1.msra.mxu0 %v3020
    %3065 = vmatprep.subr.mxu0 0.0
    %3066 = vmatpush1.msra.mxu0 %v3019
    %3067 = vmatprep.subr.mxu0 0.0
    %3068 = vmatpush1.msra.mxu0 %v3018
    %3069 = vmatprep.subr.mxu0 0.0
    %3070 = vmatpush1.msra.mxu0 %v3017
    %3071 = vmatprep.subr.mxu0 0.0
    %3072 = vmatpush1.msra.mxu0 %v3016
    %3073 = vmatprep.subr.mxu0 0.0
    %3074 = vmatpush1.msra.mxu0 %v3015
    %3075 = vmatprep.subr.mxu0 0.0
    %3076 = vmatpush1.msra.mxu0 %v3014
    %3077 = vmatprep.subr.mxu0 0.0
    %3078 = vmatpush1.msra.mxu0 %v3013
    %3079 = vmatprep.subr.mxu0 0.0
    %3080 = vmatpush1.msra.mxu0 %v3012
    %3081 = vmatprep.subr.mxu0 0.0
    %3082 = vmatpush2.msra.mxu0 %v3043
    %3083 = vmatprep.subr.mxu0 0.0
    %3084 = vmatpush2.msra.mxu0 %v3042
    %3085 = vmatprep.subr.mxu0 0.0
    %3086 = vmatpush2.msra.mxu0 %v3041
    %3087 = vmatprep.subr.mxu0 0.0
    %3088 = vmatpush2.msra.mxu0 %v3040
    %3089 = vmatprep.subr.mxu0 0.0
    %3090 = vmatpush2.msra.mxu0 %v3039
    %3091 = vmatprep.subr.mxu0 0.0
    %3092 = vmatpush2.msra.mxu0 %v3038
    %3093 = vmatprep.subr.mxu0 0.0
    %3094 = vmatpush2.msra.mxu0 %v3037
    %3095 = vmatprep.subr.mxu0 0.0
    %3096 = vmatpush2.msra.mxu0 %v3036
    %3097 = vmatprep.subr.mxu0 0.0
    %3098 = vmatpush2.msra.mxu0 %v3035
    %3099 = vmatprep.subr.mxu0 0.0
    %3100 = vmatpush2.msra.mxu0 %v3034
    %3101 = vmatprep.subr.mxu0 0.0
    %3102 = vmatpush2.msra.mxu0 %v3033
    %3103 = vmatprep.subr.mxu0 0.0
    %3104 = vmatpush2.msra.mxu0 %v3032
    %3105 = vmatprep.subr.mxu0 0.0
    %3106 = vmatpush2.msra.mxu0 %v3031
    %3107 = vmatprep.subr.mxu0 0.0
    %3108 = vmatpush2.msra.mxu0 %v3030
    %3109 = vmatprep.subr.mxu0 0.0
    %3110 = vmatpush2.msra.mxu0 %v3029
    %3111 = vmatprep.subr.mxu0 0.0
    %3112 = vmatpush2.msra.mxu0 %v3028
    %3113 = vmatprep.mubr.f32.mxu0 %v3010
    %3114 = vmatmul.mubr.f32.gmra.mxu0 %v3009
    %v3115 = vpop.f32.mrf.mxu0
    %v3116 = vadd.f32 %v3048, %v3115
    %v3117 = vpop.f32.mrf.mxu0
    %3118 = vdwg.mxu0
    %v3119 = vmul.f32 %v3116, 0.5
    %v3120 = vmul.f32 %v3116, 0.70710677
    %vm3121 = vcmp.ge.f32.partialorder %v3120, 0.0
    %v3122 = vsel %vm3121, 1.0, -1.0
    %v3123 = vand.u32 2147483647, %v3120
    %v3124 = vmul.f32 %v3123, 0.3275911
    %v3125 = vadd.f32 %v3124, 1.0
    %v3126 = vrcp.pop %v3125
    %v3127 = vmul.f32 %v3126, 1.0614054
    %v3128 = vadd.f32 %v3127, -1.4531521
    %v3129 = vmul.f32 %v3128, %v3126
    %v3130 = vadd.f32 %v3129, 1.4214138
    %v3131 = vmul.f32 %v3130, %v3126
    %v3132 = vadd.f32 %v3131, -0.28449672
    %v3133 = vmul.f32 %v3132, %v3126
    %v3134 = vadd.f32 %v3133, 0.2548296
    %v3135 = vmul.f32 %v3134, %v3126
    %v3136 = vsub.f32 0.0, %v3123
    %v3137 = vmul.f32 %v3136, %v3123
    %v3138 = vmul.f32 %v3137, 1.442695
    %v3139 = vpow.pop %v3138
    %v3140 = vmul.f32 %v3135, %v3139
    %v3141 = vsub.f32 1.0, %v3140
    %v3142 = vmul.f32 %v3122, %v3141
    %v3143 = vadd.f32 %v3142, 1.0
    %v3144 = vmul.f32 %v3119, %v3143
    %s3145 = scalar_lea.vmem [#allocation11], 896
    %v3146 = vld [vmem:[%s3145] sm:$0xff]
    %v3147 = vld [vmem:[%s3145 + $0x8] sm:$0xff]
    %v3148 = vld [vmem:[%s3145 + $0x10] sm:$0xff]
    %v3149 = vld [vmem:[%s3145 + $0x18] sm:$0xff]
    %v3150 = vld [vmem:[%s3145 + $0x20] sm:$0xff]
    %v3151 = vld [vmem:[%s3145 + $0x28] sm:$0xff]
    %v3152 = vld [vmem:[%s3145 + $0x30] sm:$0xff]
    %v3153 = vld [vmem:[%s3145 + $0x38] sm:$0xff]
    %v3154 = vld [vmem:[%s3145 + $0x40] sm:$0xff]
    %v3155 = vld [vmem:[%s3145 + $0x48] sm:$0xff]
    %v3156 = vld [vmem:[%s3145 + $0x50] sm:$0xff]
    %v3157 = vld [vmem:[%s3145 + $0x58] sm:$0xff]
    %v3158 = vld [vmem:[%s3145 + $0x60] sm:$0xff]
    %v3159 = vld [vmem:[%s3145 + $0x68] sm:$0xff]
    %v3160 = vld [vmem:[%s3145 + $0x70] sm:$0xff]
    %v3161 = vld [vmem:[%s3145 + $0x78] sm:$0xff]
    %3162 = vmatprep.subr.mxu0 0.0
    %3163 = vmatpush1.msra.mxu0 %v3161
    %3164 = vmatprep.subr.mxu0 0.0
    %3165 = vmatpush1.msra.mxu0 %v3160
    %3166 = vmatprep.subr.mxu0 0.0
    %3167 = vmatpush1.msra.mxu0 %v3159
    %3168 = vmatprep.subr.mxu0 0.0
    %3169 = vmatpush1.msra.mxu0 %v3158
    %3170 = vmatprep.subr.mxu0 0.0
    %3171 = vmatpush1.msra.mxu0 %v3157
    %3172 = vmatprep.subr.mxu0 0.0
    %3173 = vmatpush1.msra.mxu0 %v3156
    %3174 = vmatprep.subr.mxu0 0.0
    %3175 = vmatpush1.msra.mxu0 %v3155
    %3176 = vmatprep.subr.mxu0 0.0
    %3177 = vmatpush1.msra.mxu0 %v3154
    %3178 = vmatprep.subr.mxu0 0.0
    %3179 = vmatpush1.msra.mxu0 %v3153
    %3180 = vmatprep.subr.mxu0 0.0
    %3181 = vmatpush1.msra.mxu0 %v3152
    %3182 = vmatprep.subr.mxu0 0.0
    %3183 = vmatpush1.msra.mxu0 %v3151
    %3184 = vmatprep.subr.mxu0 0.0
    %3185 = vmatpush1.msra.mxu0 %v3150
    %3186 = vmatprep.subr.mxu0 0.0
    %3187 = vmatpush1.msra.mxu0 %v3149
    %3188 = vmatprep.subr.mxu0 0.0
    %3189 = vmatpush1.msra.mxu0 %v3148
    %3190 = vmatprep.subr.mxu0 0.0
    %3191 = vmatpush1.msra.mxu0 %v3147
    %3192 = vmatprep.subr.mxu0 0.0
    %3193 = vmatpush1.msra.mxu0 %v3146
    %3194 = vmatprep.subr.mxu0 0.0
    %3195 = vmatpush2.msra.mxu0 0.0
    %3196 = vmatprep.subr.mxu0 0.0
    %3197 = vmatpush2.msra.mxu0 0.0
    %3198 = vmatprep.subr.mxu0 0.0
    %3199 = vmatpush2.msra.mxu0 0.0
    %3200 = vmatprep.subr.mxu0 0.0
    %3201 = vmatpush2.msra.mxu0 0.0
    %3202 = vmatprep.subr.mxu0 0.0
    %3203 = vmatpush2.msra.mxu0 0.0
    %3204 = vmatprep.subr.mxu0 0.0
    %3205 = vmatpush2.msra.mxu0 0.0
    %3206 = vmatprep.subr.mxu0 0.0
    %3207 = vmatpush2.msra.mxu0 0.0
    %3208 = vmatprep.subr.mxu0 0.0
    %3209 = vmatpush2.msra.mxu0 0.0
    %3210 = vmatprep.subr.mxu0 0.0
    %3211 = vmatpush2.msra.mxu0 0.0
    %3212 = vmatprep.subr.mxu0 0.0
    %3213 = vmatpush2.msra.mxu0 0.0
    %3214 = vmatprep.subr.mxu0 0.0
    %3215 = vmatpush2.msra.mxu0 0.0
    %3216 = vmatprep.subr.mxu0 0.0
    %3217 = vmatpush2.msra.mxu0 0.0
    %3218 = vmatprep.subr.mxu0 0.0
    %3219 = vmatpush2.msra.mxu0 0.0
    %3220 = vmatprep.subr.mxu0 0.0
    %3221 = vmatpush2.msra.mxu0 0.0
    %3222 = vmatprep.subr.mxu0 0.0
    %3223 = vmatpush2.msra.mxu0 0.0
    %3224 = vmatprep.subr.mxu0 0.0
    %3225 = vmatpush2.msra.mxu0 0.0
    %3226 = vmatprep.mubr.f32.mxu0 0.0
    %3227 = vmatmul.mubr.f32.gmra.mxu0 %v3144
    %v3228 = vpop.f32.mrf.mxu0
    %v3229 = vadd.f32 0.0, %v3228
    %v3230 = vpop.f32.mrf.mxu0
    %3231 = vdwg.mxu0
    %v3232 = vadd.f32 %v2840, %v3229
    %v3233 = vld [vmem:[%s6] sm:$0x1]
    %v3235 = vlaneseq
    %v3236 = vshrl.u32 %v3235, 7
    %v3237 = vsub.s32 0, %v3236
    %v3238 = vrot.slane %v3233, %v3237
    %v3240 = vadd.f32 %v3232, %v3238
    %3241 = vst [vmem:[#allocation13] sm:$0xff] %v3240
    // Predicated region
    $region54: #{tpu_custom_call.1} parent=1 // pred_check
      _
    $region55: #{tpu_custom_call.1} parent=1 // pred_check_branch
      %3243 = sbr.rel (0) target = $region57
    $region56: #{tpu_custom_call.1} parent=1 // pred_region
      %s3245 = ssub.s32 128, 128
      %3246 = vsyncadd [#allocation4], %s3245
      %s3248 = sshll.u32 [#allocation13], 4
      %s3249 = int_to_ptr.vmem [resolvable:$true] %s3248
      %3251 = dma.vmem_to_hbm [thread:$0]  %s3249, 128, %s7, [#allocation4]
    $region57: #{tpu_custom_call.1} parent=1 // pred_fallthru
      _
    // Predicated region
    $region58: #{tpu_custom_call.1} parent=1 // pred_check
      _
    $region59: #{tpu_custom_call.1} parent=1 // pred_check_branch
      %3253 = sbr.rel (0) target = $region61
    $region60: #{tpu_custom_call.1} parent=1 // pred_region
      %3254 = dma.done [#allocation4], 128
    $region61: #{tpu_custom_call.1} parent=1 // pred_fallthru
      _
    %3255 = vsyncpa [#allocation3], 1
    %3256 = vsyncpa [#allocation6], 1
    %3257 = vsyncpa [#allocation9], 1
    %3258 = vsyncpa [#allocation12], 1
    %3259 = vsyncpa [#allocation4], 1

</llo_original>
